<compile_context>
chip_gen: v6e
topology: v6e:2x2x1
jax: 0.10.0
libtpu: 0.0.40
codegen_flags: <defaults>
</compile_context>

<pallas_src>
import functools

import numpy as np
import jax
import jax.numpy as jnp
from jax import lax
from jax.experimental import pallas as pl
from jax.experimental.pallas import tpu as pltpu


# ---------------------------------------------------------------------------
# Tiny constant matrices (built in-kernel from iota) used to express time
# shifts, 2x-maxpool selection, and even/odd interleaving as MXU matmuls.
# ---------------------------------------------------------------------------
def _iota2(shape, dim):
    return lax.broadcasted_iota(jnp.int32, shape, dim)


def _shift_mat(n, delta):
    """(n, n) matrix M with (M @ x)[t] = x[t + delta] (0 outside range)."""
    r = _iota2((n, n), 0)
    c = _iota2((n, n), 1)
    return jnp.where(c == r + delta, 1.0, 0.0).astype(jnp.float32)


def _pick_mat(rows, n, start, stride):
    """(rows, n) matrix M with (M @ x)[i] = x[start + stride * i]."""
    r = _iota2((rows, n), 0)
    c = _iota2((rows, n), 1)
    return jnp.where(c == start + stride * r, 1.0, 0.0).astype(jnp.float32)


def _scatter_mat(out_rows, in_rows, start, stride):
    """(out_rows, in_rows) matrix M with (M @ x)[start + stride*j] = x[j]."""
    r = _iota2((out_rows, in_rows), 0)
    c = _iota2((out_rows, in_rows), 1)
    return jnp.where(r == start + stride * c, 1.0, 0.0).astype(jnp.float32)


# ---------------------------------------------------------------------------
# Fused forward kernel: one grid step == one batch element, end to end.
# ---------------------------------------------------------------------------
def _fused_forward_kernel(x_ref,
                          e1w_ref, e1b_ref, e2w_ref, e2b_ref,
                          d1w_ref, d1b_ref, d2w_ref, d2b_ref,
                          fg_w_ref, fg_b_ref, whh_ref, lw_ref, lb_ref,
                          out_ref, xg_sc, *, T, H):
    def mm(a, b):
        return jnp.dot(a, b, preferred_element_type=jnp.float32)

    def conv_relu_pool(h, w_ref, b_ref):
        # h: (L, Cin). Conv1d(k=3, pad=1) + ReLU + MaxPool1d(2, 2) -> (L//2, Cout)
        L = h.shape[0]
        y = (mm(mm(_shift_mat(L, -1), h), w_ref[0])    # x[t-1] @ W_k0
             + mm(h, w_ref[1])                         # x[t]   @ W_k1
             + mm(mm(_shift_mat(L, 1), h), w_ref[2])   # x[t+1] @ W_k2
             + b_ref[...])
        y = jnp.maximum(y, 0.0)
        return jnp.maximum(mm(_pick_mat(L // 2, L, 0, 2), y),
                           mm(_pick_mat(L // 2, L, 1, 2), y))

    def deconv_relu(h, w_ref, b_ref):
        # h: (L, Cin). ConvTranspose1d(k=4, s=2, p=1) + ReLU -> (2L, Cout)
        #   even out o=2j:   x[j] @ W1 + x[j-1] @ W3
        #   odd  out o=2j+1: x[j] @ W2 + x[j+1] @ W0
        L = h.shape[0]
        h_prev = mm(_shift_mat(L, -1), h)
        h_next = mm(_shift_mat(L, 1), h)
        ye = jnp.maximum(mm(h, w_ref[1]) + mm(h_prev, w_ref[3]) + b_ref[...], 0.0)
        yo = jnp.maximum(mm(h, w_ref[2]) + mm(h_next, w_ref[0]) + b_ref[...], 0.0)
        return (mm(_scatter_mat(2 * L, L, 0, 2), ye)
                + mm(_scatter_mat(2 * L, L, 1, 2), yo))

    x = x_ref[0]                                        # (T, F)

    # Encoder
    h = conv_relu_pool(x, e1w_ref, e1b_ref)             # (T//2, 64)
    h = conv_relu_pool(h, e2w_ref, e2b_ref)             # (T//4, 128)
    # Decoder
    h = deconv_relu(h, d1w_ref, d1b_ref)                # (T//2, 64)
    h = deconv_relu(h, d2w_ref, d2b_ref)                # (T,   F)

    # Fused fc + LSTM input-gate projection -> VMEM scratch (stays on chip).
    xg_sc[...] = mm(h, fg_w_ref[...]) + fg_b_ref[...]   # (T, 4H)

    # LSTM recurrence, unrolled at trace time (T is small and static).
    whh_t = whh_ref[...]                                # (H, 4H)
    hh = jnp.zeros((1, H), jnp.float32)
    cc = jnp.zeros((1, H), jnp.float32)
    for t in range(T):
        g = xg_sc[pl.ds(t, 1), :] + mm(hh, whh_t)       # (1, 4H)
        i_g = jax.nn.sigmoid(g[:, 0:H])
        f_g = jax.nn.sigmoid(g[:, H:2 * H])
        g_g = jnp.tanh(g[:, 2 * H:3 * H])
        o_g = jax.nn.sigmoid(g[:, 3 * H:4 * H])
        cc = f_g * cc + i_g * g_g
        hh = o_g * jnp.tanh(cc)

    # Final linear on the last hidden state.
    out_ref[0] = mm(hh, lw_ref[...]) + lb_ref[...]      # (1, O)


# ---------------------------------------------------------------------------
# Weight packing (done once, outside the kernel) and the fused forward.
# ---------------------------------------------------------------------------
def prepare_params(p):
    """Repack torch-layout params into matmul-friendly layouts."""
    w = {}
    # Conv1d weight (Cout, Cin, K) -> per-tap (Cin, Cout), stacked on axis 0.
    w['e1w'] = jnp.stack([p['enc1_w'][:, :, k].T for k in range(3)], axis=0)
    w['e1b'] = p['enc1_b'][None, :]
    w['e2w'] = jnp.stack([p['enc2_w'][:, :, k].T for k in range(3)], axis=0)
    w['e2b'] = p['enc2_b'][None, :]
    # ConvTranspose1d weight (Cin, Cout, K) -> per-tap (Cin, Cout), stacked.
    w['d1w'] = jnp.transpose(p['dec1_w'], (2, 0, 1))
    w['d1b'] = p['dec1_b'][None, :]
    w['d2w'] = jnp.transpose(p['dec2_w'], (2, 0, 1))
    w['d2b'] = p['dec2_b'][None, :]
    # fc fused with the LSTM input-gate projection:
    #   xg = (h @ fc_w.T + fc_b) @ w_ih.T + b_ih + b_hh
    #      = h @ (fc_w.T @ w_ih.T) + (fc_b @ w_ih.T + b_ih + b_hh)
    w['fg_w'] = p['fc_w'].T @ p['w_ih'].T                                  # (F, 4H)
    w['fg_b'] = (p['fc_b'] @ p['w_ih'].T + p['b_ih'] + p['b_hh'])[None, :]  # (1, 4H)
    w['whh_t'] = p['w_hh'].T                                               # (H, 4H)
    w['lin_w'] = p['lin_w'].T                                              # (H, O)
    w['lin_b'] = p['lin_b'][None, :]                                       # (1, O)
    return w


_WEIGHT_ORDER = ('e1w', 'e1b', 'e2w', 'e2b', 'd1w', 'd1b', 'd2w', 'd2b',
                 'fg_w', 'fg_b', 'whh_t', 'lin_w', 'lin_b')


def conv_autoencoder_lstm_forward(w, x, hidden_size):
    """x: (B, T, F) (same as the torch forward's batch_first input)."""
    B, T, F = x.shape
    H = hidden_size
    O = w['lin_w'].shape[1]
    assert T % 4 == 0, "sequence length must be divisible by 4 (two pools)"

    def full_spec(arr):
        nd = arr.ndim
        return pl.BlockSpec(arr.shape, lambda b: (0,) * nd)

    weight_args = [w[k] for k in _WEIGHT_ORDER]
    in_specs = ([pl.BlockSpec((1, T, F), lambda b: (b, 0, 0))]
                + [full_spec(a) for a in weight_args])

    out = pl.pallas_call(
        functools.partial(_fused_forward_kernel, T=T, H=H),
        out_shape=jax.ShapeDtypeStruct((B, 1, O), jnp.float32),
        grid_spec=pltpu.PrefetchScalarGridSpec(
            num_scalar_prefetch=0,
            grid=(B,),
            in_specs=in_specs,
            out_specs=pl.BlockSpec((1, 1, O), lambda b: (b, 0, 0)),
            scratch_shapes=[pltpu.VMEM((T, 4 * H), jnp.float32)]),
        compiler_params=pltpu.CompilerParams(
            dimension_semantics=("parallel",)),   # batch shards across TCs (v7x)
    )(x, *weight_args)
    return out.reshape(B, O)


# ---------------------------------------------------------------------------
# Parameters (deterministic, synthetic), torch layouts.
# ---------------------------------------------------------------------------
def init_params(key, input_size, hidden_size, output_size):
    ks = jax.random.split(key, 16)

    def rnd(k, shape, scale=0.1):
        return scale * jax.random.normal(k, shape, dtype=jnp.float32)

    p = {}
    p['enc1_w'] = rnd(ks[0], (64, input_size, 3))       # Conv1d (Cout, Cin, K)
    p['enc1_b'] = rnd(ks[1], (64,))
    p['enc2_w'] = rnd(ks[2], (128, 64, 3))
    p['enc2_b'] = rnd(ks[3], (128,))
    p['dec1_w'] = rnd(ks[4], (128, 64, 4))              # ConvT (Cin, Cout, K)
    p['dec1_b'] = rnd(ks[5], (64,))
    p['dec2_w'] = rnd(ks[6], (64, input_size, 4))
    p['dec2_b'] = rnd(ks[7], (input_size,))
    p['fc_w'] = rnd(ks[8], (hidden_size, input_size))   # Linear (out, in)
    p['fc_b'] = rnd(ks[9], (hidden_size,))
    p['w_ih'] = rnd(ks[10], (4 * hidden_size, hidden_size))
    p['w_hh'] = rnd(ks[11], (4 * hidden_size, hidden_size))
    p['b_ih'] = rnd(ks[12], (4 * hidden_size,))
    p['b_hh'] = rnd(ks[13], (4 * hidden_size,))
    p['lin_w'] = rnd(ks[14], (output_size, hidden_size))
    p['lin_b'] = rnd(ks[15], (output_size,))
    return p


# ---------------------------------------------------------------------------
# Pure numpy reference (loop-based, mirrors PyTorch semantics) for validation.
# ---------------------------------------------------------------------------
def _np_conv1d(x, w, b):
    B, T, Cin = x.shape
    xp = np.pad(x, ((0, 0), (1, 1), (0, 0)))
    y = np.zeros((B, T, w.shape[0]), np.float32)
    for k in range(3):
        y += xp[:, k:k + T, :] @ w[:, :, k].T
    return y + b


def _np_maxpool2(x):
    return np.maximum(x[:, 0::2, :], x[:, 1::2, :])


def _np_convtranspose1d(x, w, b):
    B, L, Cin = x.shape
    out_len = 2 * L
    y = np.zeros((B, out_len, w.shape[1]), np.float32)
    for i in range(L):
        for k in range(4):
            o = 2 * i - 1 + k
            if 0 <= o < out_len:
                y[:, o, :] += x[:, i, :] @ w[:, :, k]
    return y + b


def _np_lstm_last(x, w_ih, w_hh, b_ih, b_hh, H):
    B, T, _ = x.shape
    h = np.zeros((B, H), np.float32)
    c = np.zeros((B, H), np.float32)

    def sig(z):
        return 1.0 / (1.0 + np.exp(-z))

    for t in range(T):
        g = x[:, t, :] @ w_ih.T + h @ w_hh.T + b_ih + b_hh
        i, f, gg, o = g[:, :H], g[:, H:2 * H], g[:, 2 * H:3 * H], g[:, 3 * H:]
        c = sig(f) * c + sig(i) * np.tanh(gg)
        h = sig(o) * np.tanh(c)
    return h


def np_forward(p, x, H):
    relu = lambda z: np.maximum(z, 0.0)
    h = relu(_np_conv1d(x, p['enc1_w'], p['enc1_b']))
    h = _np_maxpool2(h)
    h = relu(_np_conv1d(h, p['enc2_w'], p['enc2_b']))
    h = _np_maxpool2(h)
    h = relu(_np_convtranspose1d(h, p['dec1_w'], p['dec1_b']))
    h = relu(_np_convtranspose1d(h, p['dec2_w'], p['dec2_b']))
    m = h @ p['fc_w'].T + p['fc_b']
    hl = _np_lstm_last(m, p['w_ih'], p['w_hh'], p['b_ih'], p['b_hh'], H)
    return hl @ p['lin_w'].T + p['lin_b']


if __name__ == "__main__":
    B, T, F, H, O = 2, 16, 4, 32, 1
    key = jax.random.PRNGKey(0)
    kx, kp = jax.random.split(key)
    x = jax.random.normal(kx, (B, T, F), dtype=jnp.float32)
    params = init_params(kp, F, H, O)
    packed = prepare_params(params)

    fwd = jax.jit(functools.partial(conv_autoencoder_lstm_forward, hidden_size=H))
    out = fwd(packed, x)
    out = jax.block_until_ready(out)
    assert out.shape == (B, O), out.shape

    params_np = {k: np.asarray(v) for k, v in params.items()}
    ref = np_forward(params_np, np.asarray(x), H)
    if not np.allclose(np.asarray(out), ref, rtol=5e-2, atol=5e-3):
        raise AssertionError(f"mismatch: pallas={np.asarray(out)} ref={ref}")
    print("KERNEL_OK")
</pallas_src>

<mosaic_0001>
module attributes {stable_mosaic.version = 11 : i64} {
  func.func @_fused_forward_kernel(%arg0: i32, %arg1: memref<1x16x4xf32, #tpu.memory_space<vmem>>, %arg2: memref<3x4x64xf32, #tpu.memory_space<vmem>>, %arg3: memref<1x64xf32, #tpu.memory_space<vmem>>, %arg4: memref<3x64x128xf32, #tpu.memory_space<vmem>>, %arg5: memref<1x128xf32, #tpu.memory_space<vmem>>, %arg6: memref<4x128x64xf32, #tpu.memory_space<vmem>>, %arg7: memref<1x64xf32, #tpu.memory_space<vmem>>, %arg8: memref<4x64x4xf32, #tpu.memory_space<vmem>>, %arg9: memref<1x4xf32, #tpu.memory_space<vmem>>, %arg10: memref<4x128xf32, #tpu.memory_space<vmem>>, %arg11: memref<1x128xf32, #tpu.memory_space<vmem>>, %arg12: memref<32x128xf32, #tpu.memory_space<vmem>>, %arg13: memref<32x1xf32, #tpu.memory_space<vmem>>, %arg14: memref<1x1xf32, #tpu.memory_space<vmem>>, %arg15: memref<1x1x1xf32, #tpu.memory_space<vmem>>, %arg16: memref<16x128xf32, #tpu.memory_space<vmem>>) attributes {dimension_semantics = [#tpu.dimension_semantics<parallel>], iteration_bounds = array<i64: 2>, scalar_prefetch = 0 : i64, scratch_operands = 1 : i64, tpu.core_type = #tpu.core_type<tc>, window_params = [{transform_indices = @transform_0, window_bounds = array<i64: 1, 16, 4>}, {pipeline_mode = #tpu.pipeline_mode<synchronous>, transform_indices = @transform_1, window_bounds = array<i64: 3, 4, 64>}, {pipeline_mode = #tpu.pipeline_mode<synchronous>, transform_indices = @transform_2, window_bounds = array<i64: 1, 64>}, {pipeline_mode = #tpu.pipeline_mode<synchronous>, transform_indices = @transform_3, window_bounds = array<i64: 3, 64, 128>}, {pipeline_mode = #tpu.pipeline_mode<synchronous>, transform_indices = @transform_4, window_bounds = array<i64: 1, 128>}, {pipeline_mode = #tpu.pipeline_mode<synchronous>, transform_indices = @transform_5, window_bounds = array<i64: 4, 128, 64>}, {pipeline_mode = #tpu.pipeline_mode<synchronous>, transform_indices = @transform_6, window_bounds = array<i64: 1, 64>}, {pipeline_mode = #tpu.pipeline_mode<synchronous>, transform_indices = @transform_7, window_bounds = array<i64: 4, 64, 4>}, {pipeline_mode = #tpu.pipeline_mode<synchronous>, transform_indices = @transform_8, window_bounds = array<i64: 1, 4>}, {pipeline_mode = #tpu.pipeline_mode<synchronous>, transform_indices = @transform_9, window_bounds = array<i64: 4, 128>}, {pipeline_mode = #tpu.pipeline_mode<synchronous>, transform_indices = @transform_10, window_bounds = array<i64: 1, 128>}, {pipeline_mode = #tpu.pipeline_mode<synchronous>, transform_indices = @transform_11, window_bounds = array<i64: 32, 128>}, {pipeline_mode = #tpu.pipeline_mode<synchronous>, transform_indices = @transform_12, window_bounds = array<i64: 32, 1>}, {pipeline_mode = #tpu.pipeline_mode<synchronous>, transform_indices = @transform_13, window_bounds = array<i64: 1, 1>}, {transform_indices = @transform_14, window_bounds = array<i64: 1, 1, 1>}]} {
    %c0 = arith.constant 0 : index
    %c0_0 = arith.constant 0 : index
    %c0_1 = arith.constant 0 : index
    %0 = vector.load %arg1[%c0, %c0_0, %c0_1] : memref<1x16x4xf32, #tpu.memory_space<vmem>>, vector<1x16x4xf32>
    %1 = vector.shape_cast %0 : vector<1x16x4xf32> to vector<16x4xf32>
    %2 = tpu.iota {dimensions = array<i32: 0>} : vector<16x16xi32>
    %3 = tpu.iota {dimensions = array<i32: 1>} : vector<16x16xi32>
    %c-1_i32 = arith.constant -1 : i32
    %4 = vector.broadcast %c-1_i32 : i32 to vector<16x16xi32>
    %5 = arith.addi %2, %4 : vector<16x16xi32>
    %6 = arith.cmpi eq, %3, %5 : vector<16x16xi32>
    %cst = arith.constant 1.000000e+00 : f32
    %cst_2 = arith.constant 0.000000e+00 : f32
    %7 = vector.broadcast %cst : f32 to vector<16x16xf32>
    %8 = vector.broadcast %cst_2 : f32 to vector<16x16xf32>
    %9 = arith.select %6, %7, %8 : vector<16x16xi1>, vector<16x16xf32>
    %cst_3 = arith.constant dense<0.000000e+00> : vector<16x4xf32>
    %10 = tpu.matmul %9, %1, %cst_3 {dimension_numbers = #tpu.dot_dimension_numbers<[1], [0], [0], [1], [0, 0, 1, 1], [], []>} : vector<16x16xf32>, vector<16x4xf32>, vector<16x4xf32> -> vector<16x4xf32>
    %c0_4 = arith.constant 0 : index
    %c0_5 = arith.constant 0 : index
    %c0_6 = arith.constant 0 : index
    %11 = vector.load %arg2[%c0_4, %c0_5, %c0_6] : memref<3x4x64xf32, #tpu.memory_space<vmem>>, vector<1x4x64xf32>
    %12 = vector.shape_cast %11 : vector<1x4x64xf32> to vector<4x64xf32>
    %cst_7 = arith.constant dense<0.000000e+00> : vector<16x64xf32>
    %13 = tpu.matmul %10, %12, %cst_7 {dimension_numbers = #tpu.dot_dimension_numbers<[1], [0], [0], [1], [0, 0, 1, 1], [], []>} : vector<16x4xf32>, vector<4x64xf32>, vector<16x64xf32> -> vector<16x64xf32>
    %c1 = arith.constant 1 : index
    %c0_8 = arith.constant 0 : index
    %c0_9 = arith.constant 0 : index
    %14 = vector.load %arg2[%c1, %c0_8, %c0_9] : memref<3x4x64xf32, #tpu.memory_space<vmem>>, vector<1x4x64xf32>
    %15 = vector.shape_cast %14 : vector<1x4x64xf32> to vector<4x64xf32>
    %cst_10 = arith.constant dense<0.000000e+00> : vector<16x64xf32>
    %16 = tpu.matmul %1, %15, %cst_10 {dimension_numbers = #tpu.dot_dimension_numbers<[1], [0], [0], [1], [0, 0, 1, 1], [], []>} : vector<16x4xf32>, vector<4x64xf32>, vector<16x64xf32> -> vector<16x64xf32>
    %17 = arith.addf %13, %16 : vector<16x64xf32>
    %18 = tpu.iota {dimensions = array<i32: 0>} : vector<16x16xi32>
    %19 = tpu.iota {dimensions = array<i32: 1>} : vector<16x16xi32>
    %c1_i32 = arith.constant 1 : i32
    %20 = vector.broadcast %c1_i32 : i32 to vector<16x16xi32>
    %21 = arith.addi %18, %20 : vector<16x16xi32>
    %22 = arith.cmpi eq, %19, %21 : vector<16x16xi32>
    %cst_11 = arith.constant 1.000000e+00 : f32
    %cst_12 = arith.constant 0.000000e+00 : f32
    %23 = vector.broadcast %cst_11 : f32 to vector<16x16xf32>
    %24 = vector.broadcast %cst_12 : f32 to vector<16x16xf32>
    %25 = arith.select %22, %23, %24 : vector<16x16xi1>, vector<16x16xf32>
    %cst_13 = arith.constant dense<0.000000e+00> : vector<16x4xf32>
    %26 = tpu.matmul %25, %1, %cst_13 {dimension_numbers = #tpu.dot_dimension_numbers<[1], [0], [0], [1], [0, 0, 1, 1], [], []>} : vector<16x16xf32>, vector<16x4xf32>, vector<16x4xf32> -> vector<16x4xf32>
    %c2 = arith.constant 2 : index
    %c0_14 = arith.constant 0 : index
    %c0_15 = arith.constant 0 : index
    %27 = vector.load %arg2[%c2, %c0_14, %c0_15] : memref<3x4x64xf32, #tpu.memory_space<vmem>>, vector<1x4x64xf32>
    %28 = vector.shape_cast %27 : vector<1x4x64xf32> to vector<4x64xf32>
    %cst_16 = arith.constant dense<0.000000e+00> : vector<16x64xf32>
    %29 = tpu.matmul %26, %28, %cst_16 {dimension_numbers = #tpu.dot_dimension_numbers<[1], [0], [0], [1], [0, 0, 1, 1], [], []>} : vector<16x4xf32>, vector<4x64xf32>, vector<16x64xf32> -> vector<16x64xf32>
    %30 = arith.addf %17, %29 : vector<16x64xf32>
    %c0_17 = arith.constant 0 : index
    %c0_18 = arith.constant 0 : index
    %31 = vector.load %arg3[%c0_17, %c0_18] : memref<1x64xf32, #tpu.memory_space<vmem>>, vector<1x64xf32>
    %32 = vector.broadcast %31 : vector<1x64xf32> to vector<16x64xf32>
    %33 = arith.addf %30, %32 : vector<16x64xf32>
    %cst_19 = arith.constant 0.000000e+00 : f32
    %34 = vector.broadcast %cst_19 : f32 to vector<16x64xf32>
    %35 = arith.maximumf %33, %34 : vector<16x64xf32>
    %36 = tpu.iota {dimensions = array<i32: 0>} : vector<8x16xi32>
    %37 = tpu.iota {dimensions = array<i32: 1>} : vector<8x16xi32>
    %c2_i32 = arith.constant 2 : i32
    %38 = vector.broadcast %c2_i32 : i32 to vector<8x16xi32>
    %39 = arith.muli %38, %36 : vector<8x16xi32>
    %c0_i32 = arith.constant 0 : i32
    %40 = vector.broadcast %c0_i32 : i32 to vector<8x16xi32>
    %41 = arith.addi %40, %39 : vector<8x16xi32>
    %42 = arith.cmpi eq, %37, %41 : vector<8x16xi32>
    %cst_20 = arith.constant 1.000000e+00 : f32
    %cst_21 = arith.constant 0.000000e+00 : f32
    %43 = vector.broadcast %cst_20 : f32 to vector<8x16xf32>
    %44 = vector.broadcast %cst_21 : f32 to vector<8x16xf32>
    %45 = arith.select %42, %43, %44 : vector<8x16xi1>, vector<8x16xf32>
    %cst_22 = arith.constant dense<0.000000e+00> : vector<8x64xf32>
    %46 = tpu.matmul %45, %35, %cst_22 {dimension_numbers = #tpu.dot_dimension_numbers<[1], [0], [0], [1], [0, 0, 1, 1], [], []>} : vector<8x16xf32>, vector<16x64xf32>, vector<8x64xf32> -> vector<8x64xf32>
    %47 = tpu.iota {dimensions = array<i32: 0>} : vector<8x16xi32>
    %48 = tpu.iota {dimensions = array<i32: 1>} : vector<8x16xi32>
    %c2_i32_23 = arith.constant 2 : i32
    %49 = vector.broadcast %c2_i32_23 : i32 to vector<8x16xi32>
    %50 = arith.muli %49, %47 : vector<8x16xi32>
    %c1_i32_24 = arith.constant 1 : i32
    %51 = vector.broadcast %c1_i32_24 : i32 to vector<8x16xi32>
    %52 = arith.addi %51, %50 : vector<8x16xi32>
    %53 = arith.cmpi eq, %48, %52 : vector<8x16xi32>
    %cst_25 = arith.constant 1.000000e+00 : f32
    %cst_26 = arith.constant 0.000000e+00 : f32
    %54 = vector.broadcast %cst_25 : f32 to vector<8x16xf32>
    %55 = vector.broadcast %cst_26 : f32 to vector<8x16xf32>
    %56 = arith.select %53, %54, %55 : vector<8x16xi1>, vector<8x16xf32>
    %cst_27 = arith.constant dense<0.000000e+00> : vector<8x64xf32>
    %57 = tpu.matmul %56, %35, %cst_27 {dimension_numbers = #tpu.dot_dimension_numbers<[1], [0], [0], [1], [0, 0, 1, 1], [], []>} : vector<8x16xf32>, vector<16x64xf32>, vector<8x64xf32> -> vector<8x64xf32>
    %58 = arith.maximumf %46, %57 : vector<8x64xf32>
    %59 = tpu.iota {dimensions = array<i32: 0>} : vector<8x8xi32>
    %60 = tpu.iota {dimensions = array<i32: 1>} : vector<8x8xi32>
    %c-1_i32_28 = arith.constant -1 : i32
    %61 = vector.broadcast %c-1_i32_28 : i32 to vector<8x8xi32>
    %62 = arith.addi %59, %61 : vector<8x8xi32>
    %63 = arith.cmpi eq, %60, %62 : vector<8x8xi32>
    %cst_29 = arith.constant 1.000000e+00 : f32
    %cst_30 = arith.constant 0.000000e+00 : f32
    %64 = vector.broadcast %cst_29 : f32 to vector<8x8xf32>
    %65 = vector.broadcast %cst_30 : f32 to vector<8x8xf32>
    %66 = arith.select %63, %64, %65 : vector<8x8xi1>, vector<8x8xf32>
    %cst_31 = arith.constant dense<0.000000e+00> : vector<8x64xf32>
    %67 = tpu.matmul %66, %58, %cst_31 {dimension_numbers = #tpu.dot_dimension_numbers<[1], [0], [0], [1], [0, 0, 1, 1], [], []>} : vector<8x8xf32>, vector<8x64xf32>, vector<8x64xf32> -> vector<8x64xf32>
    %c0_32 = arith.constant 0 : index
    %c0_33 = arith.constant 0 : index
    %c0_34 = arith.constant 0 : index
    %68 = vector.load %arg4[%c0_32, %c0_33, %c0_34] : memref<3x64x128xf32, #tpu.memory_space<vmem>>, vector<1x64x128xf32>
    %69 = vector.shape_cast %68 : vector<1x64x128xf32> to vector<64x128xf32>
    %cst_35 = arith.constant dense<0.000000e+00> : vector<8x128xf32>
    %70 = tpu.matmul %67, %69, %cst_35 {dimension_numbers = #tpu.dot_dimension_numbers<[1], [0], [0], [1], [0, 0, 1, 1], [], []>} : vector<8x64xf32>, vector<64x128xf32>, vector<8x128xf32> -> vector<8x128xf32>
    %c1_36 = arith.constant 1 : index
    %c0_37 = arith.constant 0 : index
    %c0_38 = arith.constant 0 : index
    %71 = vector.load %arg4[%c1_36, %c0_37, %c0_38] : memref<3x64x128xf32, #tpu.memory_space<vmem>>, vector<1x64x128xf32>
    %72 = vector.shape_cast %71 : vector<1x64x128xf32> to vector<64x128xf32>
    %cst_39 = arith.constant dense<0.000000e+00> : vector<8x128xf32>
    %73 = tpu.matmul %58, %72, %cst_39 {dimension_numbers = #tpu.dot_dimension_numbers<[1], [0], [0], [1], [0, 0, 1, 1], [], []>} : vector<8x64xf32>, vector<64x128xf32>, vector<8x128xf32> -> vector<8x128xf32>
    %74 = arith.addf %70, %73 : vector<8x128xf32>
    %75 = tpu.iota {dimensions = array<i32: 0>} : vector<8x8xi32>
    %76 = tpu.iota {dimensions = array<i32: 1>} : vector<8x8xi32>
    %c1_i32_40 = arith.constant 1 : i32
    %77 = vector.broadcast %c1_i32_40 : i32 to vector<8x8xi32>
    %78 = arith.addi %75, %77 : vector<8x8xi32>
    %79 = arith.cmpi eq, %76, %78 : vector<8x8xi32>
    %cst_41 = arith.constant 1.000000e+00 : f32
    %cst_42 = arith.constant 0.000000e+00 : f32
    %80 = vector.broadcast %cst_41 : f32 to vector<8x8xf32>
    %81 = vector.broadcast %cst_42 : f32 to vector<8x8xf32>
    %82 = arith.select %79, %80, %81 : vector<8x8xi1>, vector<8x8xf32>
    %cst_43 = arith.constant dense<0.000000e+00> : vector<8x64xf32>
    %83 = tpu.matmul %82, %58, %cst_43 {dimension_numbers = #tpu.dot_dimension_numbers<[1], [0], [0], [1], [0, 0, 1, 1], [], []>} : vector<8x8xf32>, vector<8x64xf32>, vector<8x64xf32> -> vector<8x64xf32>
    %c2_44 = arith.constant 2 : index
    %c0_45 = arith.constant 0 : index
    %c0_46 = arith.constant 0 : index
    %84 = vector.load %arg4[%c2_44, %c0_45, %c0_46] : memref<3x64x128xf32, #tpu.memory_space<vmem>>, vector<1x64x128xf32>
    %85 = vector.shape_cast %84 : vector<1x64x128xf32> to vector<64x128xf32>
    %cst_47 = arith.constant dense<0.000000e+00> : vector<8x128xf32>
    %86 = tpu.matmul %83, %85, %cst_47 {dimension_numbers = #tpu.dot_dimension_numbers<[1], [0], [0], [1], [0, 0, 1, 1], [], []>} : vector<8x64xf32>, vector<64x128xf32>, vector<8x128xf32> -> vector<8x128xf32>
    %87 = arith.addf %74, %86 : vector<8x128xf32>
    %c0_48 = arith.constant 0 : index
    %c0_49 = arith.constant 0 : index
    %88 = vector.load %arg5[%c0_48, %c0_49] : memref<1x128xf32, #tpu.memory_space<vmem>>, vector<1x128xf32>
    %89 = vector.broadcast %88 : vector<1x128xf32> to vector<8x128xf32>
    %90 = arith.addf %87, %89 : vector<8x128xf32>
    %cst_50 = arith.constant 0.000000e+00 : f32
    %91 = vector.broadcast %cst_50 : f32 to vector<8x128xf32>
    %92 = arith.maximumf %90, %91 : vector<8x128xf32>
    %93 = tpu.iota {dimensions = array<i32: 0>} : vector<4x8xi32>
    %94 = tpu.iota {dimensions = array<i32: 1>} : vector<4x8xi32>
    %c2_i32_51 = arith.constant 2 : i32
    %95 = vector.broadcast %c2_i32_51 : i32 to vector<4x8xi32>
    %96 = arith.muli %95, %93 : vector<4x8xi32>
    %c0_i32_52 = arith.constant 0 : i32
    %97 = vector.broadcast %c0_i32_52 : i32 to vector<4x8xi32>
    %98 = arith.addi %97, %96 : vector<4x8xi32>
    %99 = arith.cmpi eq, %94, %98 : vector<4x8xi32>
    %cst_53 = arith.constant 1.000000e+00 : f32
    %cst_54 = arith.constant 0.000000e+00 : f32
    %100 = vector.broadcast %cst_53 : f32 to vector<4x8xf32>
    %101 = vector.broadcast %cst_54 : f32 to vector<4x8xf32>
    %102 = arith.select %99, %100, %101 : vector<4x8xi1>, vector<4x8xf32>
    %cst_55 = arith.constant dense<0.000000e+00> : vector<4x128xf32>
    %103 = tpu.matmul %102, %92, %cst_55 {dimension_numbers = #tpu.dot_dimension_numbers<[1], [0], [0], [1], [0, 0, 1, 1], [], []>} : vector<4x8xf32>, vector<8x128xf32>, vector<4x128xf32> -> vector<4x128xf32>
    %104 = tpu.iota {dimensions = array<i32: 0>} : vector<4x8xi32>
    %105 = tpu.iota {dimensions = array<i32: 1>} : vector<4x8xi32>
    %c2_i32_56 = arith.constant 2 : i32
    %106 = vector.broadcast %c2_i32_56 : i32 to vector<4x8xi32>
    %107 = arith.muli %106, %104 : vector<4x8xi32>
    %c1_i32_57 = arith.constant 1 : i32
    %108 = vector.broadcast %c1_i32_57 : i32 to vector<4x8xi32>
    %109 = arith.addi %108, %107 : vector<4x8xi32>
    %110 = arith.cmpi eq, %105, %109 : vector<4x8xi32>
    %cst_58 = arith.constant 1.000000e+00 : f32
    %cst_59 = arith.constant 0.000000e+00 : f32
    %111 = vector.broadcast %cst_58 : f32 to vector<4x8xf32>
    %112 = vector.broadcast %cst_59 : f32 to vector<4x8xf32>
    %113 = arith.select %110, %111, %112 : vector<4x8xi1>, vector<4x8xf32>
    %cst_60 = arith.constant dense<0.000000e+00> : vector<4x128xf32>
    %114 = tpu.matmul %113, %92, %cst_60 {dimension_numbers = #tpu.dot_dimension_numbers<[1], [0], [0], [1], [0, 0, 1, 1], [], []>} : vector<4x8xf32>, vector<8x128xf32>, vector<4x128xf32> -> vector<4x128xf32>
    %115 = arith.maximumf %103, %114 : vector<4x128xf32>
    %116 = tpu.iota {dimensions = array<i32: 0>} : vector<4x4xi32>
    %117 = tpu.iota {dimensions = array<i32: 1>} : vector<4x4xi32>
    %c-1_i32_61 = arith.constant -1 : i32
    %118 = vector.broadcast %c-1_i32_61 : i32 to vector<4x4xi32>
    %119 = arith.addi %116, %118 : vector<4x4xi32>
    %120 = arith.cmpi eq, %117, %119 : vector<4x4xi32>
    %cst_62 = arith.constant 1.000000e+00 : f32
    %cst_63 = arith.constant 0.000000e+00 : f32
    %121 = vector.broadcast %cst_62 : f32 to vector<4x4xf32>
    %122 = vector.broadcast %cst_63 : f32 to vector<4x4xf32>
    %123 = arith.select %120, %121, %122 : vector<4x4xi1>, vector<4x4xf32>
    %cst_64 = arith.constant dense<0.000000e+00> : vector<4x128xf32>
    %124 = tpu.matmul %123, %115, %cst_64 {dimension_numbers = #tpu.dot_dimension_numbers<[1], [0], [0], [1], [0, 0, 1, 1], [], []>} : vector<4x4xf32>, vector<4x128xf32>, vector<4x128xf32> -> vector<4x128xf32>
    %125 = tpu.iota {dimensions = array<i32: 0>} : vector<4x4xi32>
    %126 = tpu.iota {dimensions = array<i32: 1>} : vector<4x4xi32>
    %c1_i32_65 = arith.constant 1 : i32
    %127 = vector.broadcast %c1_i32_65 : i32 to vector<4x4xi32>
    %128 = arith.addi %125, %127 : vector<4x4xi32>
    %129 = arith.cmpi eq, %126, %128 : vector<4x4xi32>
    %cst_66 = arith.constant 1.000000e+00 : f32
    %cst_67 = arith.constant 0.000000e+00 : f32
    %130 = vector.broadcast %cst_66 : f32 to vector<4x4xf32>
    %131 = vector.broadcast %cst_67 : f32 to vector<4x4xf32>
    %132 = arith.select %129, %130, %131 : vector<4x4xi1>, vector<4x4xf32>
    %cst_68 = arith.constant dense<0.000000e+00> : vector<4x128xf32>
    %133 = tpu.matmul %132, %115, %cst_68 {dimension_numbers = #tpu.dot_dimension_numbers<[1], [0], [0], [1], [0, 0, 1, 1], [], []>} : vector<4x4xf32>, vector<4x128xf32>, vector<4x128xf32> -> vector<4x128xf32>
    %c1_69 = arith.constant 1 : index
    %c0_70 = arith.constant 0 : index
    %c0_71 = arith.constant 0 : index
    %134 = vector.load %arg6[%c1_69, %c0_70, %c0_71] : memref<4x128x64xf32, #tpu.memory_space<vmem>>, vector<1x128x64xf32>
    %135 = vector.shape_cast %134 : vector<1x128x64xf32> to vector<128x64xf32>
    %cst_72 = arith.constant dense<0.000000e+00> : vector<4x64xf32>
    %136 = tpu.matmul %115, %135, %cst_72 {dimension_numbers = #tpu.dot_dimension_numbers<[1], [0], [0], [1], [0, 0, 1, 1], [], []>} : vector<4x128xf32>, vector<128x64xf32>, vector<4x64xf32> -> vector<4x64xf32>
    %c3 = arith.constant 3 : index
    %c0_73 = arith.constant 0 : index
    %c0_74 = arith.constant 0 : index
    %137 = vector.load %arg6[%c3, %c0_73, %c0_74] : memref<4x128x64xf32, #tpu.memory_space<vmem>>, vector<1x128x64xf32>
    %138 = vector.shape_cast %137 : vector<1x128x64xf32> to vector<128x64xf32>
    %cst_75 = arith.constant dense<0.000000e+00> : vector<4x64xf32>
    %139 = tpu.matmul %124, %138, %cst_75 {dimension_numbers = #tpu.dot_dimension_numbers<[1], [0], [0], [1], [0, 0, 1, 1], [], []>} : vector<4x128xf32>, vector<128x64xf32>, vector<4x64xf32> -> vector<4x64xf32>
    %140 = arith.addf %136, %139 : vector<4x64xf32>
    %c0_76 = arith.constant 0 : index
    %c0_77 = arith.constant 0 : index
    %141 = vector.load %arg7[%c0_76, %c0_77] : memref<1x64xf32, #tpu.memory_space<vmem>>, vector<1x64xf32>
    %142 = vector.broadcast %141 : vector<1x64xf32> to vector<4x64xf32>
    %143 = arith.addf %140, %142 : vector<4x64xf32>
    %cst_78 = arith.constant 0.000000e+00 : f32
    %144 = vector.broadcast %cst_78 : f32 to vector<4x64xf32>
    %145 = arith.maximumf %143, %144 : vector<4x64xf32>
    %c2_79 = arith.constant 2 : index
    %c0_80 = arith.constant 0 : index
    %c0_81 = arith.constant 0 : index
    %146 = vector.load %arg6[%c2_79, %c0_80, %c0_81] : memref<4x128x64xf32, #tpu.memory_space<vmem>>, vector<1x128x64xf32>
    %147 = vector.shape_cast %146 : vector<1x128x64xf32> to vector<128x64xf32>
    %cst_82 = arith.constant dense<0.000000e+00> : vector<4x64xf32>
    %148 = tpu.matmul %115, %147, %cst_82 {dimension_numbers = #tpu.dot_dimension_numbers<[1], [0], [0], [1], [0, 0, 1, 1], [], []>} : vector<4x128xf32>, vector<128x64xf32>, vector<4x64xf32> -> vector<4x64xf32>
    %c0_83 = arith.constant 0 : index
    %c0_84 = arith.constant 0 : index
    %c0_85 = arith.constant 0 : index
    %149 = vector.load %arg6[%c0_83, %c0_84, %c0_85] : memref<4x128x64xf32, #tpu.memory_space<vmem>>, vector<1x128x64xf32>
    %150 = vector.shape_cast %149 : vector<1x128x64xf32> to vector<128x64xf32>
    %cst_86 = arith.constant dense<0.000000e+00> : vector<4x64xf32>
    %151 = tpu.matmul %133, %150, %cst_86 {dimension_numbers = #tpu.dot_dimension_numbers<[1], [0], [0], [1], [0, 0, 1, 1], [], []>} : vector<4x128xf32>, vector<128x64xf32>, vector<4x64xf32> -> vector<4x64xf32>
    %152 = arith.addf %148, %151 : vector<4x64xf32>
    %c0_87 = arith.constant 0 : index
    %c0_88 = arith.constant 0 : index
    %153 = vector.load %arg7[%c0_87, %c0_88] : memref<1x64xf32, #tpu.memory_space<vmem>>, vector<1x64xf32>
    %154 = vector.broadcast %153 : vector<1x64xf32> to vector<4x64xf32>
    %155 = arith.addf %152, %154 : vector<4x64xf32>
    %cst_89 = arith.constant 0.000000e+00 : f32
    %156 = vector.broadcast %cst_89 : f32 to vector<4x64xf32>
    %157 = arith.maximumf %155, %156 : vector<4x64xf32>
    %158 = tpu.iota {dimensions = array<i32: 0>} : vector<8x4xi32>
    %159 = tpu.iota {dimensions = array<i32: 1>} : vector<8x4xi32>
    %c2_i32_90 = arith.constant 2 : i32
    %160 = vector.broadcast %c2_i32_90 : i32 to vector<8x4xi32>
    %161 = arith.muli %160, %159 : vector<8x4xi32>
    %c0_i32_91 = arith.constant 0 : i32
    %162 = vector.broadcast %c0_i32_91 : i32 to vector<8x4xi32>
    %163 = arith.addi %162, %161 : vector<8x4xi32>
    %164 = arith.cmpi eq, %158, %163 : vector<8x4xi32>
    %cst_92 = arith.constant 1.000000e+00 : f32
    %cst_93 = arith.constant 0.000000e+00 : f32
    %165 = vector.broadcast %cst_92 : f32 to vector<8x4xf32>
    %166 = vector.broadcast %cst_93 : f32 to vector<8x4xf32>
    %167 = arith.select %164, %165, %166 : vector<8x4xi1>, vector<8x4xf32>
    %cst_94 = arith.constant dense<0.000000e+00> : vector<8x64xf32>
    %168 = tpu.matmul %167, %145, %cst_94 {dimension_numbers = #tpu.dot_dimension_numbers<[1], [0], [0], [1], [0, 0, 1, 1], [], []>} : vector<8x4xf32>, vector<4x64xf32>, vector<8x64xf32> -> vector<8x64xf32>
    %169 = tpu.iota {dimensions = array<i32: 0>} : vector<8x4xi32>
    %170 = tpu.iota {dimensions = array<i32: 1>} : vector<8x4xi32>
    %c2_i32_95 = arith.constant 2 : i32
    %171 = vector.broadcast %c2_i32_95 : i32 to vector<8x4xi32>
    %172 = arith.muli %171, %170 : vector<8x4xi32>
    %c1_i32_96 = arith.constant 1 : i32
    %173 = vector.broadcast %c1_i32_96 : i32 to vector<8x4xi32>
    %174 = arith.addi %173, %172 : vector<8x4xi32>
    %175 = arith.cmpi eq, %169, %174 : vector<8x4xi32>
    %cst_97 = arith.constant 1.000000e+00 : f32
    %cst_98 = arith.constant 0.000000e+00 : f32
    %176 = vector.broadcast %cst_97 : f32 to vector<8x4xf32>
    %177 = vector.broadcast %cst_98 : f32 to vector<8x4xf32>
    %178 = arith.select %175, %176, %177 : vector<8x4xi1>, vector<8x4xf32>
    %cst_99 = arith.constant dense<0.000000e+00> : vector<8x64xf32>
    %179 = tpu.matmul %178, %157, %cst_99 {dimension_numbers = #tpu.dot_dimension_numbers<[1], [0], [0], [1], [0, 0, 1, 1], [], []>} : vector<8x4xf32>, vector<4x64xf32>, vector<8x64xf32> -> vector<8x64xf32>
    %180 = arith.addf %168, %179 : vector<8x64xf32>
    %181 = tpu.iota {dimensions = array<i32: 0>} : vector<8x8xi32>
    %182 = tpu.iota {dimensions = array<i32: 1>} : vector<8x8xi32>
    %c-1_i32_100 = arith.constant -1 : i32
    %183 = vector.broadcast %c-1_i32_100 : i32 to vector<8x8xi32>
    %184 = arith.addi %181, %183 : vector<8x8xi32>
    %185 = arith.cmpi eq, %182, %184 : vector<8x8xi32>
    %cst_101 = arith.constant 1.000000e+00 : f32
    %cst_102 = arith.constant 0.000000e+00 : f32
    %186 = vector.broadcast %cst_101 : f32 to vector<8x8xf32>
    %187 = vector.broadcast %cst_102 : f32 to vector<8x8xf32>
    %188 = arith.select %185, %186, %187 : vector<8x8xi1>, vector<8x8xf32>
    %cst_103 = arith.constant dense<0.000000e+00> : vector<8x64xf32>
    %189 = tpu.matmul %188, %180, %cst_103 {dimension_numbers = #tpu.dot_dimension_numbers<[1], [0], [0], [1], [0, 0, 1, 1], [], []>} : vector<8x8xf32>, vector<8x64xf32>, vector<8x64xf32> -> vector<8x64xf32>
    %190 = tpu.iota {dimensions = array<i32: 0>} : vector<8x8xi32>
    %191 = tpu.iota {dimensions = array<i32: 1>} : vector<8x8xi32>
    %c1_i32_104 = arith.constant 1 : i32
    %192 = vector.broadcast %c1_i32_104 : i32 to vector<8x8xi32>
    %193 = arith.addi %190, %192 : vector<8x8xi32>
    %194 = arith.cmpi eq, %191, %193 : vector<8x8xi32>
    %cst_105 = arith.constant 1.000000e+00 : f32
    %cst_106 = arith.constant 0.000000e+00 : f32
    %195 = vector.broadcast %cst_105 : f32 to vector<8x8xf32>
    %196 = vector.broadcast %cst_106 : f32 to vector<8x8xf32>
    %197 = arith.select %194, %195, %196 : vector<8x8xi1>, vector<8x8xf32>
    %cst_107 = arith.constant dense<0.000000e+00> : vector<8x64xf32>
    %198 = tpu.matmul %197, %180, %cst_107 {dimension_numbers = #tpu.dot_dimension_numbers<[1], [0], [0], [1], [0, 0, 1, 1], [], []>} : vector<8x8xf32>, vector<8x64xf32>, vector<8x64xf32> -> vector<8x64xf32>
    %c1_108 = arith.constant 1 : index
    %c0_109 = arith.constant 0 : index
    %c0_110 = arith.constant 0 : index
    %199 = vector.load %arg8[%c1_108, %c0_109, %c0_110] : memref<4x64x4xf32, #tpu.memory_space<vmem>>, vector<1x64x4xf32>
    %200 = vector.shape_cast %199 : vector<1x64x4xf32> to vector<64x4xf32>
    %cst_111 = arith.constant dense<0.000000e+00> : vector<8x4xf32>
    %201 = tpu.matmul %180, %200, %cst_111 {dimension_numbers = #tpu.dot_dimension_numbers<[1], [0], [0], [1], [0, 0, 1, 1], [], []>} : vector<8x64xf32>, vector<64x4xf32>, vector<8x4xf32> -> vector<8x4xf32>
    %c3_112 = arith.constant 3 : index
    %c0_113 = arith.constant 0 : index
    %c0_114 = arith.constant 0 : index
    %202 = vector.load %arg8[%c3_112, %c0_113, %c0_114] : memref<4x64x4xf32, #tpu.memory_space<vmem>>, vector<1x64x4xf32>
    %203 = vector.shape_cast %202 : vector<1x64x4xf32> to vector<64x4xf32>
    %cst_115 = arith.constant dense<0.000000e+00> : vector<8x4xf32>
    %204 = tpu.matmul %189, %203, %cst_115 {dimension_numbers = #tpu.dot_dimension_numbers<[1], [0], [0], [1], [0, 0, 1, 1], [], []>} : vector<8x64xf32>, vector<64x4xf32>, vector<8x4xf32> -> vector<8x4xf32>
    %205 = arith.addf %201, %204 : vector<8x4xf32>
    %c0_116 = arith.constant 0 : index
    %c0_117 = arith.constant 0 : index
    %206 = vector.load %arg9[%c0_116, %c0_117] : memref<1x4xf32, #tpu.memory_space<vmem>>, vector<1x4xf32>
    %207 = vector.broadcast %206 : vector<1x4xf32> to vector<8x4xf32>
    %208 = arith.addf %205, %207 : vector<8x4xf32>
    %cst_118 = arith.constant 0.000000e+00 : f32
    %209 = vector.broadcast %cst_118 : f32 to vector<8x4xf32>
    %210 = arith.maximumf %208, %209 : vector<8x4xf32>
    %c2_119 = arith.constant 2 : index
    %c0_120 = arith.constant 0 : index
    %c0_121 = arith.constant 0 : index
    %211 = vector.load %arg8[%c2_119, %c0_120, %c0_121] : memref<4x64x4xf32, #tpu.memory_space<vmem>>, vector<1x64x4xf32>
    %212 = vector.shape_cast %211 : vector<1x64x4xf32> to vector<64x4xf32>
    %cst_122 = arith.constant dense<0.000000e+00> : vector<8x4xf32>
    %213 = tpu.matmul %180, %212, %cst_122 {dimension_numbers = #tpu.dot_dimension_numbers<[1], [0], [0], [1], [0, 0, 1, 1], [], []>} : vector<8x64xf32>, vector<64x4xf32>, vector<8x4xf32> -> vector<8x4xf32>
    %c0_123 = arith.constant 0 : index
    %c0_124 = arith.constant 0 : index
    %c0_125 = arith.constant 0 : index
    %214 = vector.load %arg8[%c0_123, %c0_124, %c0_125] : memref<4x64x4xf32, #tpu.memory_space<vmem>>, vector<1x64x4xf32>
    %215 = vector.shape_cast %214 : vector<1x64x4xf32> to vector<64x4xf32>
    %cst_126 = arith.constant dense<0.000000e+00> : vector<8x4xf32>
    %216 = tpu.matmul %198, %215, %cst_126 {dimension_numbers = #tpu.dot_dimension_numbers<[1], [0], [0], [1], [0, 0, 1, 1], [], []>} : vector<8x64xf32>, vector<64x4xf32>, vector<8x4xf32> -> vector<8x4xf32>
    %217 = arith.addf %213, %216 : vector<8x4xf32>
    %c0_127 = arith.constant 0 : index
    %c0_128 = arith.constant 0 : index
    %218 = vector.load %arg9[%c0_127, %c0_128] : memref<1x4xf32, #tpu.memory_space<vmem>>, vector<1x4xf32>
    %219 = vector.broadcast %218 : vector<1x4xf32> to vector<8x4xf32>
    %220 = arith.addf %217, %219 : vector<8x4xf32>
    %cst_129 = arith.constant 0.000000e+00 : f32
    %221 = vector.broadcast %cst_129 : f32 to vector<8x4xf32>
    %222 = arith.maximumf %220, %221 : vector<8x4xf32>
    %223 = tpu.iota {dimensions = array<i32: 0>} : vector<16x8xi32>
    %224 = tpu.iota {dimensions = array<i32: 1>} : vector<16x8xi32>
    %c2_i32_130 = arith.constant 2 : i32
    %225 = vector.broadcast %c2_i32_130 : i32 to vector<16x8xi32>
    %226 = arith.muli %225, %224 : vector<16x8xi32>
    %c0_i32_131 = arith.constant 0 : i32
    %227 = vector.broadcast %c0_i32_131 : i32 to vector<16x8xi32>
    %228 = arith.addi %227, %226 : vector<16x8xi32>
    %229 = arith.cmpi eq, %223, %228 : vector<16x8xi32>
    %cst_132 = arith.constant 1.000000e+00 : f32
    %cst_133 = arith.constant 0.000000e+00 : f32
    %230 = vector.broadcast %cst_132 : f32 to vector<16x8xf32>
    %231 = vector.broadcast %cst_133 : f32 to vector<16x8xf32>
    %232 = arith.select %229, %230, %231 : vector<16x8xi1>, vector<16x8xf32>
    %cst_134 = arith.constant dense<0.000000e+00> : vector<16x4xf32>
    %233 = tpu.matmul %232, %210, %cst_134 {dimension_numbers = #tpu.dot_dimension_numbers<[1], [0], [0], [1], [0, 0, 1, 1], [], []>} : vector<16x8xf32>, vector<8x4xf32>, vector<16x4xf32> -> vector<16x4xf32>
    %234 = tpu.iota {dimensions = array<i32: 0>} : vector<16x8xi32>
    %235 = tpu.iota {dimensions = array<i32: 1>} : vector<16x8xi32>
    %c2_i32_135 = arith.constant 2 : i32
    %236 = vector.broadcast %c2_i32_135 : i32 to vector<16x8xi32>
    %237 = arith.muli %236, %235 : vector<16x8xi32>
    %c1_i32_136 = arith.constant 1 : i32
    %238 = vector.broadcast %c1_i32_136 : i32 to vector<16x8xi32>
    %239 = arith.addi %238, %237 : vector<16x8xi32>
    %240 = arith.cmpi eq, %234, %239 : vector<16x8xi32>
    %cst_137 = arith.constant 1.000000e+00 : f32
    %cst_138 = arith.constant 0.000000e+00 : f32
    %241 = vector.broadcast %cst_137 : f32 to vector<16x8xf32>
    %242 = vector.broadcast %cst_138 : f32 to vector<16x8xf32>
    %243 = arith.select %240, %241, %242 : vector<16x8xi1>, vector<16x8xf32>
    %cst_139 = arith.constant dense<0.000000e+00> : vector<16x4xf32>
    %244 = tpu.matmul %243, %222, %cst_139 {dimension_numbers = #tpu.dot_dimension_numbers<[1], [0], [0], [1], [0, 0, 1, 1], [], []>} : vector<16x8xf32>, vector<8x4xf32>, vector<16x4xf32> -> vector<16x4xf32>
    %245 = arith.addf %233, %244 : vector<16x4xf32>
    %c0_140 = arith.constant 0 : index
    %c0_141 = arith.constant 0 : index
    %246 = vector.load %arg10[%c0_140, %c0_141] : memref<4x128xf32, #tpu.memory_space<vmem>>, vector<4x128xf32>
    %cst_142 = arith.constant dense<0.000000e+00> : vector<16x128xf32>
    %247 = tpu.matmul %245, %246, %cst_142 {dimension_numbers = #tpu.dot_dimension_numbers<[1], [0], [0], [1], [0, 0, 1, 1], [], []>} : vector<16x4xf32>, vector<4x128xf32>, vector<16x128xf32> -> vector<16x128xf32>
    %c0_143 = arith.constant 0 : index
    %c0_144 = arith.constant 0 : index
    %248 = vector.load %arg11[%c0_143, %c0_144] : memref<1x128xf32, #tpu.memory_space<vmem>>, vector<1x128xf32>
    %249 = vector.broadcast %248 : vector<1x128xf32> to vector<16x128xf32>
    %250 = arith.addf %247, %249 : vector<16x128xf32>
    %c0_145 = arith.constant 0 : index
    %c0_146 = arith.constant 0 : index
    %251 = vector.load %arg16[%c0_145, %c0_146] : memref<16x128xf32, #tpu.memory_space<vmem>>, vector<16x128xf32>
    tpu.vector_store %arg16[%c0_145, %c0_146], %250 {strides = array<i32>} : memref<16x128xf32, #tpu.memory_space<vmem>>, vector<16x128xf32>,
    %c0_147 = arith.constant 0 : index
    %c0_148 = arith.constant 0 : index
    %252 = vector.load %arg12[%c0_147, %c0_148] : memref<32x128xf32, #tpu.memory_space<vmem>>, vector<32x128xf32>
    %cst_149 = arith.constant 0.000000e+00 : f32
    %253 = vector.broadcast %cst_149 : f32 to vector<1x32xf32>
    %cst_150 = arith.constant 0.000000e+00 : f32
    %254 = vector.broadcast %cst_150 : f32 to vector<1x32xf32>
    %c0_151 = arith.constant 0 : index
    %c0_152 = arith.constant 0 : index
    %255 = vector.load %arg16[%c0_151, %c0_152] : memref<16x128xf32, #tpu.memory_space<vmem>>, vector<1x128xf32>
    %cst_153 = arith.constant dense<0.000000e+00> : vector<1x128xf32>
    %256 = tpu.matmul %253, %252, %cst_153 {dimension_numbers = #tpu.dot_dimension_numbers<[1], [0], [0], [1], [0, 0, 1, 1], [], []>} : vector<1x32xf32>, vector<32x128xf32>, vector<1x128xf32> -> vector<1x128xf32>
    %257 = arith.addf %255, %256 : vector<1x128xf32>
    %258 = vector.extract_strided_slice %257 {offsets = [0, 0], sizes = [1, 32], strides = [1, 1]} : vector<1x128xf32> to vector<1x32xf32>
    %259 = arith.negf %258 : vector<1x32xf32>
    %260 = math.exp %259 : vector<1x32xf32>
    %cst_154 = arith.constant 1.000000e+00 : f32
    %261 = vector.broadcast %cst_154 : f32 to vector<1x32xf32>
    %262 = arith.addf %261, %260 : vector<1x32xf32>
    %263 = arith.divf %261, %262 : vector<1x32xf32>
    %264 = vector.extract_strided_slice %257 {offsets = [0, 32], sizes = [1, 32], strides = [1, 1]} : vector<1x128xf32> to vector<1x32xf32>
    %265 = arith.negf %264 : vector<1x32xf32>
    %266 = math.exp %265 : vector<1x32xf32>
    %cst_155 = arith.constant 1.000000e+00 : f32
    %267 = vector.broadcast %cst_155 : f32 to vector<1x32xf32>
    %268 = arith.addf %267, %266 : vector<1x32xf32>
    %269 = arith.divf %267, %268 : vector<1x32xf32>
    %270 = vector.extract_strided_slice %257 {offsets = [0, 64], sizes = [1, 32], strides = [1, 1]} : vector<1x128xf32> to vector<1x32xf32>
    %271 = math.tanh %270 : vector<1x32xf32>
    %272 = vector.extract_strided_slice %257 {offsets = [0, 96], sizes = [1, 32], strides = [1, 1]} : vector<1x128xf32> to vector<1x32xf32>
    %273 = arith.negf %272 : vector<1x32xf32>
    %274 = math.exp %273 : vector<1x32xf32>
    %cst_156 = arith.constant 1.000000e+00 : f32
    %275 = vector.broadcast %cst_156 : f32 to vector<1x32xf32>
    %276 = arith.addf %275, %274 : vector<1x32xf32>
    %277 = arith.divf %275, %276 : vector<1x32xf32>
    %278 = arith.mulf %269, %254 : vector<1x32xf32>
    %279 = arith.mulf %263, %271 : vector<1x32xf32>
    %280 = arith.addf %278, %279 : vector<1x32xf32>
    %281 = math.tanh %280 : vector<1x32xf32>
    %282 = arith.mulf %277, %281 : vector<1x32xf32>
    %c1_157 = arith.constant 1 : index
    %c0_158 = arith.constant 0 : index
    %283 = vector.load %arg16[%c1_157, %c0_158] : memref<16x128xf32, #tpu.memory_space<vmem>>, vector<1x128xf32>
    %cst_159 = arith.constant dense<0.000000e+00> : vector<1x128xf32>
    %284 = tpu.matmul %282, %252, %cst_159 {dimension_numbers = #tpu.dot_dimension_numbers<[1], [0], [0], [1], [0, 0, 1, 1], [], []>} : vector<1x32xf32>, vector<32x128xf32>, vector<1x128xf32> -> vector<1x128xf32>
    %285 = arith.addf %283, %284 : vector<1x128xf32>
    %286 = vector.extract_strided_slice %285 {offsets = [0, 0], sizes = [1, 32], strides = [1, 1]} : vector<1x128xf32> to vector<1x32xf32>
    %287 = arith.negf %286 : vector<1x32xf32>
    %288 = math.exp %287 : vector<1x32xf32>
    %cst_160 = arith.constant 1.000000e+00 : f32
    %289 = vector.broadcast %cst_160 : f32 to vector<1x32xf32>
    %290 = arith.addf %289, %288 : vector<1x32xf32>
    %291 = arith.divf %289, %290 : vector<1x32xf32>
    %292 = vector.extract_strided_slice %285 {offsets = [0, 32], sizes = [1, 32], strides = [1, 1]} : vector<1x128xf32> to vector<1x32xf32>
    %293 = arith.negf %292 : vector<1x32xf32>
    %294 = math.exp %293 : vector<1x32xf32>
    %cst_161 = arith.constant 1.000000e+00 : f32
    %295 = vector.broadcast %cst_161 : f32 to vector<1x32xf32>
    %296 = arith.addf %295, %294 : vector<1x32xf32>
    %297 = arith.divf %295, %296 : vector<1x32xf32>
    %298 = vector.extract_strided_slice %285 {offsets = [0, 64], sizes = [1, 32], strides = [1, 1]} : vector<1x128xf32> to vector<1x32xf32>
    %299 = math.tanh %298 : vector<1x32xf32>
    %300 = vector.extract_strided_slice %285 {offsets = [0, 96], sizes = [1, 32], strides = [1, 1]} : vector<1x128xf32> to vector<1x32xf32>
    %301 = arith.negf %300 : vector<1x32xf32>
    %302 = math.exp %301 : vector<1x32xf32>
    %cst_162 = arith.constant 1.000000e+00 : f32
    %303 = vector.broadcast %cst_162 : f32 to vector<1x32xf32>
    %304 = arith.addf %303, %302 : vector<1x32xf32>
    %305 = arith.divf %303, %304 : vector<1x32xf32>
    %306 = arith.mulf %297, %280 : vector<1x32xf32>
    %307 = arith.mulf %291, %299 : vector<1x32xf32>
    %308 = arith.addf %306, %307 : vector<1x32xf32>
    %309 = math.tanh %308 : vector<1x32xf32>
    %310 = arith.mulf %305, %309 : vector<1x32xf32>
    %c2_163 = arith.constant 2 : index
    %c0_164 = arith.constant 0 : index
    %311 = vector.load %arg16[%c2_163, %c0_164] : memref<16x128xf32, #tpu.memory_space<vmem>>, vector<1x128xf32>
    %cst_165 = arith.constant dense<0.000000e+00> : vector<1x128xf32>
    %312 = tpu.matmul %310, %252, %cst_165 {dimension_numbers = #tpu.dot_dimension_numbers<[1], [0], [0], [1], [0, 0, 1, 1], [], []>} : vector<1x32xf32>, vector<32x128xf32>, vector<1x128xf32> -> vector<1x128xf32>
    %313 = arith.addf %311, %312 : vector<1x128xf32>
    %314 = vector.extract_strided_slice %313 {offsets = [0, 0], sizes = [1, 32], strides = [1, 1]} : vector<1x128xf32> to vector<1x32xf32>
    %315 = arith.negf %314 : vector<1x32xf32>
    %316 = math.exp %315 : vector<1x32xf32>
    %cst_166 = arith.constant 1.000000e+00 : f32
    %317 = vector.broadcast %cst_166 : f32 to vector<1x32xf32>
    %318 = arith.addf %317, %316 : vector<1x32xf32>
    %319 = arith.divf %317, %318 : vector<1x32xf32>
    %320 = vector.extract_strided_slice %313 {offsets = [0, 32], sizes = [1, 32], strides = [1, 1]} : vector<1x128xf32> to vector<1x32xf32>
    %321 = arith.negf %320 : vector<1x32xf32>
    %322 = math.exp %321 : vector<1x32xf32>
    %cst_167 = arith.constant 1.000000e+00 : f32
    %323 = vector.broadcast %cst_167 : f32 to vector<1x32xf32>
    %324 = arith.addf %323, %322 : vector<1x32xf32>
    %325 = arith.divf %323, %324 : vector<1x32xf32>
    %326 = vector.extract_strided_slice %313 {offsets = [0, 64], sizes = [1, 32], strides = [1, 1]} : vector<1x128xf32> to vector<1x32xf32>
    %327 = math.tanh %326 : vector<1x32xf32>
    %328 = vector.extract_strided_slice %313 {offsets = [0, 96], sizes = [1, 32], strides = [1, 1]} : vector<1x128xf32> to vector<1x32xf32>
    %329 = arith.negf %328 : vector<1x32xf32>
    %330 = math.exp %329 : vector<1x32xf32>
    %cst_168 = arith.constant 1.000000e+00 : f32
    %331 = vector.broadcast %cst_168 : f32 to vector<1x32xf32>
    %332 = arith.addf %331, %330 : vector<1x32xf32>
    %333 = arith.divf %331, %332 : vector<1x32xf32>
    %334 = arith.mulf %325, %308 : vector<1x32xf32>
    %335 = arith.mulf %319, %327 : vector<1x32xf32>
    %336 = arith.addf %334, %335 : vector<1x32xf32>
    %337 = math.tanh %336 : vector<1x32xf32>
    %338 = arith.mulf %333, %337 : vector<1x32xf32>
    %c3_169 = arith.constant 3 : index
    %c0_170 = arith.constant 0 : index
    %339 = vector.load %arg16[%c3_169, %c0_170] : memref<16x128xf32, #tpu.memory_space<vmem>>, vector<1x128xf32>
    %cst_171 = arith.constant dense<0.000000e+00> : vector<1x128xf32>
    %340 = tpu.matmul %338, %252, %cst_171 {dimension_numbers = #tpu.dot_dimension_numbers<[1], [0], [0], [1], [0, 0, 1, 1], [], []>} : vector<1x32xf32>, vector<32x128xf32>, vector<1x128xf32> -> vector<1x128xf32>
    %341 = arith.addf %339, %340 : vector<1x128xf32>
    %342 = vector.extract_strided_slice %341 {offsets = [0, 0], sizes = [1, 32], strides = [1, 1]} : vector<1x128xf32> to vector<1x32xf32>
    %343 = arith.negf %342 : vector<1x32xf32>
    %344 = math.exp %343 : vector<1x32xf32>
    %cst_172 = arith.constant 1.000000e+00 : f32
    %345 = vector.broadcast %cst_172 : f32 to vector<1x32xf32>
    %346 = arith.addf %345, %344 : vector<1x32xf32>
    %347 = arith.divf %345, %346 : vector<1x32xf32>
    %348 = vector.extract_strided_slice %341 {offsets = [0, 32], sizes = [1, 32], strides = [1, 1]} : vector<1x128xf32> to vector<1x32xf32>
    %349 = arith.negf %348 : vector<1x32xf32>
    %350 = math.exp %349 : vector<1x32xf32>
    %cst_173 = arith.constant 1.000000e+00 : f32
    %351 = vector.broadcast %cst_173 : f32 to vector<1x32xf32>
    %352 = arith.addf %351, %350 : vector<1x32xf32>
    %353 = arith.divf %351, %352 : vector<1x32xf32>
    %354 = vector.extract_strided_slice %341 {offsets = [0, 64], sizes = [1, 32], strides = [1, 1]} : vector<1x128xf32> to vector<1x32xf32>
    %355 = math.tanh %354 : vector<1x32xf32>
    %356 = vector.extract_strided_slice %341 {offsets = [0, 96], sizes = [1, 32], strides = [1, 1]} : vector<1x128xf32> to vector<1x32xf32>
    %357 = arith.negf %356 : vector<1x32xf32>
    %358 = math.exp %357 : vector<1x32xf32>
    %cst_174 = arith.constant 1.000000e+00 : f32
    %359 = vector.broadcast %cst_174 : f32 to vector<1x32xf32>
    %360 = arith.addf %359, %358 : vector<1x32xf32>
    %361 = arith.divf %359, %360 : vector<1x32xf32>
    %362 = arith.mulf %353, %336 : vector<1x32xf32>
    %363 = arith.mulf %347, %355 : vector<1x32xf32>
    %364 = arith.addf %362, %363 : vector<1x32xf32>
    %365 = math.tanh %364 : vector<1x32xf32>
    %366 = arith.mulf %361, %365 : vector<1x32xf32>
    %c4 = arith.constant 4 : index
    %c0_175 = arith.constant 0 : index
    %367 = vector.load %arg16[%c4, %c0_175] : memref<16x128xf32, #tpu.memory_space<vmem>>, vector<1x128xf32>
    %cst_176 = arith.constant dense<0.000000e+00> : vector<1x128xf32>
    %368 = tpu.matmul %366, %252, %cst_176 {dimension_numbers = #tpu.dot_dimension_numbers<[1], [0], [0], [1], [0, 0, 1, 1], [], []>} : vector<1x32xf32>, vector<32x128xf32>, vector<1x128xf32> -> vector<1x128xf32>
    %369 = arith.addf %367, %368 : vector<1x128xf32>
    %370 = vector.extract_strided_slice %369 {offsets = [0, 0], sizes = [1, 32], strides = [1, 1]} : vector<1x128xf32> to vector<1x32xf32>
    %371 = arith.negf %370 : vector<1x32xf32>
    %372 = math.exp %371 : vector<1x32xf32>
    %cst_177 = arith.constant 1.000000e+00 : f32
    %373 = vector.broadcast %cst_177 : f32 to vector<1x32xf32>
    %374 = arith.addf %373, %372 : vector<1x32xf32>
    %375 = arith.divf %373, %374 : vector<1x32xf32>
    %376 = vector.extract_strided_slice %369 {offsets = [0, 32], sizes = [1, 32], strides = [1, 1]} : vector<1x128xf32> to vector<1x32xf32>
    %377 = arith.negf %376 : vector<1x32xf32>
    %378 = math.exp %377 : vector<1x32xf32>
    %cst_178 = arith.constant 1.000000e+00 : f32
    %379 = vector.broadcast %cst_178 : f32 to vector<1x32xf32>
    %380 = arith.addf %379, %378 : vector<1x32xf32>
    %381 = arith.divf %379, %380 : vector<1x32xf32>
    %382 = vector.extract_strided_slice %369 {offsets = [0, 64], sizes = [1, 32], strides = [1, 1]} : vector<1x128xf32> to vector<1x32xf32>
    %383 = math.tanh %382 : vector<1x32xf32>
    %384 = vector.extract_strided_slice %369 {offsets = [0, 96], sizes = [1, 32], strides = [1, 1]} : vector<1x128xf32> to vector<1x32xf32>
    %385 = arith.negf %384 : vector<1x32xf32>
    %386 = math.exp %385 : vector<1x32xf32>
    %cst_179 = arith.constant 1.000000e+00 : f32
    %387 = vector.broadcast %cst_179 : f32 to vector<1x32xf32>
    %388 = arith.addf %387, %386 : vector<1x32xf32>
    %389 = arith.divf %387, %388 : vector<1x32xf32>
    %390 = arith.mulf %381, %364 : vector<1x32xf32>
    %391 = arith.mulf %375, %383 : vector<1x32xf32>
    %392 = arith.addf %390, %391 : vector<1x32xf32>
    %393 = math.tanh %392 : vector<1x32xf32>
    %394 = arith.mulf %389, %393 : vector<1x32xf32>
    %c5 = arith.constant 5 : index
    %c0_180 = arith.constant 0 : index
    %395 = vector.load %arg16[%c5, %c0_180] : memref<16x128xf32, #tpu.memory_space<vmem>>, vector<1x128xf32>
    %cst_181 = arith.constant dense<0.000000e+00> : vector<1x128xf32>
    %396 = tpu.matmul %394, %252, %cst_181 {dimension_numbers = #tpu.dot_dimension_numbers<[1], [0], [0], [1], [0, 0, 1, 1], [], []>} : vector<1x32xf32>, vector<32x128xf32>, vector<1x128xf32> -> vector<1x128xf32>
    %397 = arith.addf %395, %396 : vector<1x128xf32>
    %398 = vector.extract_strided_slice %397 {offsets = [0, 0], sizes = [1, 32], strides = [1, 1]} : vector<1x128xf32> to vector<1x32xf32>
    %399 = arith.negf %398 : vector<1x32xf32>
    %400 = math.exp %399 : vector<1x32xf32>
    %cst_182 = arith.constant 1.000000e+00 : f32
    %401 = vector.broadcast %cst_182 : f32 to vector<1x32xf32>
    %402 = arith.addf %401, %400 : vector<1x32xf32>
    %403 = arith.divf %401, %402 : vector<1x32xf32>
    %404 = vector.extract_strided_slice %397 {offsets = [0, 32], sizes = [1, 32], strides = [1, 1]} : vector<1x128xf32> to vector<1x32xf32>
    %405 = arith.negf %404 : vector<1x32xf32>
    %406 = math.exp %405 : vector<1x32xf32>
    %cst_183 = arith.constant 1.000000e+00 : f32
    %407 = vector.broadcast %cst_183 : f32 to vector<1x32xf32>
    %408 = arith.addf %407, %406 : vector<1x32xf32>
    %409 = arith.divf %407, %408 : vector<1x32xf32>
    %410 = vector.extract_strided_slice %397 {offsets = [0, 64], sizes = [1, 32], strides = [1, 1]} : vector<1x128xf32> to vector<1x32xf32>
    %411 = math.tanh %410 : vector<1x32xf32>
    %412 = vector.extract_strided_slice %397 {offsets = [0, 96], sizes = [1, 32], strides = [1, 1]} : vector<1x128xf32> to vector<1x32xf32>
    %413 = arith.negf %412 : vector<1x32xf32>
    %414 = math.exp %413 : vector<1x32xf32>
    %cst_184 = arith.constant 1.000000e+00 : f32
    %415 = vector.broadcast %cst_184 : f32 to vector<1x32xf32>
    %416 = arith.addf %415, %414 : vector<1x32xf32>
    %417 = arith.divf %415, %416 : vector<1x32xf32>
    %418 = arith.mulf %409, %392 : vector<1x32xf32>
    %419 = arith.mulf %403, %411 : vector<1x32xf32>
    %420 = arith.addf %418, %419 : vector<1x32xf32>
    %421 = math.tanh %420 : vector<1x32xf32>
    %422 = arith.mulf %417, %421 : vector<1x32xf32>
    %c6 = arith.constant 6 : index
    %c0_185 = arith.constant 0 : index
    %423 = vector.load %arg16[%c6, %c0_185] : memref<16x128xf32, #tpu.memory_space<vmem>>, vector<1x128xf32>
    %cst_186 = arith.constant dense<0.000000e+00> : vector<1x128xf32>
    %424 = tpu.matmul %422, %252, %cst_186 {dimension_numbers = #tpu.dot_dimension_numbers<[1], [0], [0], [1], [0, 0, 1, 1], [], []>} : vector<1x32xf32>, vector<32x128xf32>, vector<1x128xf32> -> vector<1x128xf32>
    %425 = arith.addf %423, %424 : vector<1x128xf32>
    %426 = vector.extract_strided_slice %425 {offsets = [0, 0], sizes = [1, 32], strides = [1, 1]} : vector<1x128xf32> to vector<1x32xf32>
    %427 = arith.negf %426 : vector<1x32xf32>
    %428 = math.exp %427 : vector<1x32xf32>
    %cst_187 = arith.constant 1.000000e+00 : f32
    %429 = vector.broadcast %cst_187 : f32 to vector<1x32xf32>
    %430 = arith.addf %429, %428 : vector<1x32xf32>
    %431 = arith.divf %429, %430 : vector<1x32xf32>
    %432 = vector.extract_strided_slice %425 {offsets = [0, 32], sizes = [1, 32], strides = [1, 1]} : vector<1x128xf32> to vector<1x32xf32>
    %433 = arith.negf %432 : vector<1x32xf32>
    %434 = math.exp %433 : vector<1x32xf32>
    %cst_188 = arith.constant 1.000000e+00 : f32
    %435 = vector.broadcast %cst_188 : f32 to vector<1x32xf32>
    %436 = arith.addf %435, %434 : vector<1x32xf32>
    %437 = arith.divf %435, %436 : vector<1x32xf32>
    %438 = vector.extract_strided_slice %425 {offsets = [0, 64], sizes = [1, 32], strides = [1, 1]} : vector<1x128xf32> to vector<1x32xf32>
    %439 = math.tanh %438 : vector<1x32xf32>
    %440 = vector.extract_strided_slice %425 {offsets = [0, 96], sizes = [1, 32], strides = [1, 1]} : vector<1x128xf32> to vector<1x32xf32>
    %441 = arith.negf %440 : vector<1x32xf32>
    %442 = math.exp %441 : vector<1x32xf32>
    %cst_189 = arith.constant 1.000000e+00 : f32
    %443 = vector.broadcast %cst_189 : f32 to vector<1x32xf32>
    %444 = arith.addf %443, %442 : vector<1x32xf32>
    %445 = arith.divf %443, %444 : vector<1x32xf32>
    %446 = arith.mulf %437, %420 : vector<1x32xf32>
    %447 = arith.mulf %431, %439 : vector<1x32xf32>
    %448 = arith.addf %446, %447 : vector<1x32xf32>
    %449 = math.tanh %448 : vector<1x32xf32>
    %450 = arith.mulf %445, %449 : vector<1x32xf32>
    %c7 = arith.constant 7 : index
    %c0_190 = arith.constant 0 : index
    %451 = vector.load %arg16[%c7, %c0_190] : memref<16x128xf32, #tpu.memory_space<vmem>>, vector<1x128xf32>
    %cst_191 = arith.constant dense<0.000000e+00> : vector<1x128xf32>
    %452 = tpu.matmul %450, %252, %cst_191 {dimension_numbers = #tpu.dot_dimension_numbers<[1], [0], [0], [1], [0, 0, 1, 1], [], []>} : vector<1x32xf32>, vector<32x128xf32>, vector<1x128xf32> -> vector<1x128xf32>
    %453 = arith.addf %451, %452 : vector<1x128xf32>
    %454 = vector.extract_strided_slice %453 {offsets = [0, 0], sizes = [1, 32], strides = [1, 1]} : vector<1x128xf32> to vector<1x32xf32>
    %455 = arith.negf %454 : vector<1x32xf32>
    %456 = math.exp %455 : vector<1x32xf32>
    %cst_192 = arith.constant 1.000000e+00 : f32
    %457 = vector.broadcast %cst_192 : f32 to vector<1x32xf32>
    %458 = arith.addf %457, %456 : vector<1x32xf32>
    %459 = arith.divf %457, %458 : vector<1x32xf32>
    %460 = vector.extract_strided_slice %453 {offsets = [0, 32], sizes = [1, 32], strides = [1, 1]} : vector<1x128xf32> to vector<1x32xf32>
    %461 = arith.negf %460 : vector<1x32xf32>
    %462 = math.exp %461 : vector<1x32xf32>
    %cst_193 = arith.constant 1.000000e+00 : f32
    %463 = vector.broadcast %cst_193 : f32 to vector<1x32xf32>
    %464 = arith.addf %463, %462 : vector<1x32xf32>
    %465 = arith.divf %463, %464 : vector<1x32xf32>
    %466 = vector.extract_strided_slice %453 {offsets = [0, 64], sizes = [1, 32], strides = [1, 1]} : vector<1x128xf32> to vector<1x32xf32>
    %467 = math.tanh %466 : vector<1x32xf32>
    %468 = vector.extract_strided_slice %453 {offsets = [0, 96], sizes = [1, 32], strides = [1, 1]} : vector<1x128xf32> to vector<1x32xf32>
    %469 = arith.negf %468 : vector<1x32xf32>
    %470 = math.exp %469 : vector<1x32xf32>
    %cst_194 = arith.constant 1.000000e+00 : f32
    %471 = vector.broadcast %cst_194 : f32 to vector<1x32xf32>
    %472 = arith.addf %471, %470 : vector<1x32xf32>
    %473 = arith.divf %471, %472 : vector<1x32xf32>
    %474 = arith.mulf %465, %448 : vector<1x32xf32>
    %475 = arith.mulf %459, %467 : vector<1x32xf32>
    %476 = arith.addf %474, %475 : vector<1x32xf32>
    %477 = math.tanh %476 : vector<1x32xf32>
    %478 = arith.mulf %473, %477 : vector<1x32xf32>
    %c8 = arith.constant 8 : index
    %c0_195 = arith.constant 0 : index
    %479 = vector.load %arg16[%c8, %c0_195] : memref<16x128xf32, #tpu.memory_space<vmem>>, vector<1x128xf32>
    %cst_196 = arith.constant dense<0.000000e+00> : vector<1x128xf32>
    %480 = tpu.matmul %478, %252, %cst_196 {dimension_numbers = #tpu.dot_dimension_numbers<[1], [0], [0], [1], [0, 0, 1, 1], [], []>} : vector<1x32xf32>, vector<32x128xf32>, vector<1x128xf32> -> vector<1x128xf32>
    %481 = arith.addf %479, %480 : vector<1x128xf32>
    %482 = vector.extract_strided_slice %481 {offsets = [0, 0], sizes = [1, 32], strides = [1, 1]} : vector<1x128xf32> to vector<1x32xf32>
    %483 = arith.negf %482 : vector<1x32xf32>
    %484 = math.exp %483 : vector<1x32xf32>
    %cst_197 = arith.constant 1.000000e+00 : f32
    %485 = vector.broadcast %cst_197 : f32 to vector<1x32xf32>
    %486 = arith.addf %485, %484 : vector<1x32xf32>
    %487 = arith.divf %485, %486 : vector<1x32xf32>
    %488 = vector.extract_strided_slice %481 {offsets = [0, 32], sizes = [1, 32], strides = [1, 1]} : vector<1x128xf32> to vector<1x32xf32>
    %489 = arith.negf %488 : vector<1x32xf32>
    %490 = math.exp %489 : vector<1x32xf32>
    %cst_198 = arith.constant 1.000000e+00 : f32
    %491 = vector.broadcast %cst_198 : f32 to vector<1x32xf32>
    %492 = arith.addf %491, %490 : vector<1x32xf32>
    %493 = arith.divf %491, %492 : vector<1x32xf32>
    %494 = vector.extract_strided_slice %481 {offsets = [0, 64], sizes = [1, 32], strides = [1, 1]} : vector<1x128xf32> to vector<1x32xf32>
    %495 = math.tanh %494 : vector<1x32xf32>
    %496 = vector.extract_strided_slice %481 {offsets = [0, 96], sizes = [1, 32], strides = [1, 1]} : vector<1x128xf32> to vector<1x32xf32>
    %497 = arith.negf %496 : vector<1x32xf32>
    %498 = math.exp %497 : vector<1x32xf32>
    %cst_199 = arith.constant 1.000000e+00 : f32
    %499 = vector.broadcast %cst_199 : f32 to vector<1x32xf32>
    %500 = arith.addf %499, %498 : vector<1x32xf32>
    %501 = arith.divf %499, %500 : vector<1x32xf32>
    %502 = arith.mulf %493, %476 : vector<1x32xf32>
    %503 = arith.mulf %487, %495 : vector<1x32xf32>
    %504 = arith.addf %502, %503 : vector<1x32xf32>
    %505 = math.tanh %504 : vector<1x32xf32>
    %506 = arith.mulf %501, %505 : vector<1x32xf32>
    %c9 = arith.constant 9 : index
    %c0_200 = arith.constant 0 : index
    %507 = vector.load %arg16[%c9, %c0_200] : memref<16x128xf32, #tpu.memory_space<vmem>>, vector<1x128xf32>
    %cst_201 = arith.constant dense<0.000000e+00> : vector<1x128xf32>
    %508 = tpu.matmul %506, %252, %cst_201 {dimension_numbers = #tpu.dot_dimension_numbers<[1], [0], [0], [1], [0, 0, 1, 1], [], []>} : vector<1x32xf32>, vector<32x128xf32>, vector<1x128xf32> -> vector<1x128xf32>
    %509 = arith.addf %507, %508 : vector<1x128xf32>
    %510 = vector.extract_strided_slice %509 {offsets = [0, 0], sizes = [1, 32], strides = [1, 1]} : vector<1x128xf32> to vector<1x32xf32>
    %511 = arith.negf %510 : vector<1x32xf32>
    %512 = math.exp %511 : vector<1x32xf32>
    %cst_202 = arith.constant 1.000000e+00 : f32
    %513 = vector.broadcast %cst_202 : f32 to vector<1x32xf32>
    %514 = arith.addf %513, %512 : vector<1x32xf32>
    %515 = arith.divf %513, %514 : vector<1x32xf32>
    %516 = vector.extract_strided_slice %509 {offsets = [0, 32], sizes = [1, 32], strides = [1, 1]} : vector<1x128xf32> to vector<1x32xf32>
    %517 = arith.negf %516 : vector<1x32xf32>
    %518 = math.exp %517 : vector<1x32xf32>
    %cst_203 = arith.constant 1.000000e+00 : f32
    %519 = vector.broadcast %cst_203 : f32 to vector<1x32xf32>
    %520 = arith.addf %519, %518 : vector<1x32xf32>
    %521 = arith.divf %519, %520 : vector<1x32xf32>
    %522 = vector.extract_strided_slice %509 {offsets = [0, 64], sizes = [1, 32], strides = [1, 1]} : vector<1x128xf32> to vector<1x32xf32>
    %523 = math.tanh %522 : vector<1x32xf32>
    %524 = vector.extract_strided_slice %509 {offsets = [0, 96], sizes = [1, 32], strides = [1, 1]} : vector<1x128xf32> to vector<1x32xf32>
    %525 = arith.negf %524 : vector<1x32xf32>
    %526 = math.exp %525 : vector<1x32xf32>
    %cst_204 = arith.constant 1.000000e+00 : f32
    %527 = vector.broadcast %cst_204 : f32 to vector<1x32xf32>
    %528 = arith.addf %527, %526 : vector<1x32xf32>
    %529 = arith.divf %527, %528 : vector<1x32xf32>
    %530 = arith.mulf %521, %504 : vector<1x32xf32>
    %531 = arith.mulf %515, %523 : vector<1x32xf32>
    %532 = arith.addf %530, %531 : vector<1x32xf32>
    %533 = math.tanh %532 : vector<1x32xf32>
    %534 = arith.mulf %529, %533 : vector<1x32xf32>
    %c10 = arith.constant 10 : index
    %c0_205 = arith.constant 0 : index
    %535 = vector.load %arg16[%c10, %c0_205] : memref<16x128xf32, #tpu.memory_space<vmem>>, vector<1x128xf32>
    %cst_206 = arith.constant dense<0.000000e+00> : vector<1x128xf32>
    %536 = tpu.matmul %534, %252, %cst_206 {dimension_numbers = #tpu.dot_dimension_numbers<[1], [0], [0], [1], [0, 0, 1, 1], [], []>} : vector<1x32xf32>, vector<32x128xf32>, vector<1x128xf32> -> vector<1x128xf32>
    %537 = arith.addf %535, %536 : vector<1x128xf32>
    %538 = vector.extract_strided_slice %537 {offsets = [0, 0], sizes = [1, 32], strides = [1, 1]} : vector<1x128xf32> to vector<1x32xf32>
    %539 = arith.negf %538 : vector<1x32xf32>
    %540 = math.exp %539 : vector<1x32xf32>
    %cst_207 = arith.constant 1.000000e+00 : f32
    %541 = vector.broadcast %cst_207 : f32 to vector<1x32xf32>
    %542 = arith.addf %541, %540 : vector<1x32xf32>
    %543 = arith.divf %541, %542 : vector<1x32xf32>
    %544 = vector.extract_strided_slice %537 {offsets = [0, 32], sizes = [1, 32], strides = [1, 1]} : vector<1x128xf32> to vector<1x32xf32>
    %545 = arith.negf %544 : vector<1x32xf32>
    %546 = math.exp %545 : vector<1x32xf32>
    %cst_208 = arith.constant 1.000000e+00 : f32
    %547 = vector.broadcast %cst_208 : f32 to vector<1x32xf32>
    %548 = arith.addf %547, %546 : vector<1x32xf32>
    %549 = arith.divf %547, %548 : vector<1x32xf32>
    %550 = vector.extract_strided_slice %537 {offsets = [0, 64], sizes = [1, 32], strides = [1, 1]} : vector<1x128xf32> to vector<1x32xf32>
    %551 = math.tanh %550 : vector<1x32xf32>
    %552 = vector.extract_strided_slice %537 {offsets = [0, 96], sizes = [1, 32], strides = [1, 1]} : vector<1x128xf32> to vector<1x32xf32>
    %553 = arith.negf %552 : vector<1x32xf32>
    %554 = math.exp %553 : vector<1x32xf32>
    %cst_209 = arith.constant 1.000000e+00 : f32
    %555 = vector.broadcast %cst_209 : f32 to vector<1x32xf32>
    %556 = arith.addf %555, %554 : vector<1x32xf32>
    %557 = arith.divf %555, %556 : vector<1x32xf32>
    %558 = arith.mulf %549, %532 : vector<1x32xf32>
    %559 = arith.mulf %543, %551 : vector<1x32xf32>
    %560 = arith.addf %558, %559 : vector<1x32xf32>
    %561 = math.tanh %560 : vector<1x32xf32>
    %562 = arith.mulf %557, %561 : vector<1x32xf32>
    %c11 = arith.constant 11 : index
    %c0_210 = arith.constant 0 : index
    %563 = vector.load %arg16[%c11, %c0_210] : memref<16x128xf32, #tpu.memory_space<vmem>>, vector<1x128xf32>
    %cst_211 = arith.constant dense<0.000000e+00> : vector<1x128xf32>
    %564 = tpu.matmul %562, %252, %cst_211 {dimension_numbers = #tpu.dot_dimension_numbers<[1], [0], [0], [1], [0, 0, 1, 1], [], []>} : vector<1x32xf32>, vector<32x128xf32>, vector<1x128xf32> -> vector<1x128xf32>
    %565 = arith.addf %563, %564 : vector<1x128xf32>
    %566 = vector.extract_strided_slice %565 {offsets = [0, 0], sizes = [1, 32], strides = [1, 1]} : vector<1x128xf32> to vector<1x32xf32>
    %567 = arith.negf %566 : vector<1x32xf32>
    %568 = math.exp %567 : vector<1x32xf32>
    %cst_212 = arith.constant 1.000000e+00 : f32
    %569 = vector.broadcast %cst_212 : f32 to vector<1x32xf32>
    %570 = arith.addf %569, %568 : vector<1x32xf32>
    %571 = arith.divf %569, %570 : vector<1x32xf32>
    %572 = vector.extract_strided_slice %565 {offsets = [0, 32], sizes = [1, 32], strides = [1, 1]} : vector<1x128xf32> to vector<1x32xf32>
    %573 = arith.negf %572 : vector<1x32xf32>
    %574 = math.exp %573 : vector<1x32xf32>
    %cst_213 = arith.constant 1.000000e+00 : f32
    %575 = vector.broadcast %cst_213 : f32 to vector<1x32xf32>
    %576 = arith.addf %575, %574 : vector<1x32xf32>
    %577 = arith.divf %575, %576 : vector<1x32xf32>
    %578 = vector.extract_strided_slice %565 {offsets = [0, 64], sizes = [1, 32], strides = [1, 1]} : vector<1x128xf32> to vector<1x32xf32>
    %579 = math.tanh %578 : vector<1x32xf32>
    %580 = vector.extract_strided_slice %565 {offsets = [0, 96], sizes = [1, 32], strides = [1, 1]} : vector<1x128xf32> to vector<1x32xf32>
    %581 = arith.negf %580 : vector<1x32xf32>
    %582 = math.exp %581 : vector<1x32xf32>
    %cst_214 = arith.constant 1.000000e+00 : f32
    %583 = vector.broadcast %cst_214 : f32 to vector<1x32xf32>
    %584 = arith.addf %583, %582 : vector<1x32xf32>
    %585 = arith.divf %583, %584 : vector<1x32xf32>
    %586 = arith.mulf %577, %560 : vector<1x32xf32>
    %587 = arith.mulf %571, %579 : vector<1x32xf32>
    %588 = arith.addf %586, %587 : vector<1x32xf32>
    %589 = math.tanh %588 : vector<1x32xf32>
    %590 = arith.mulf %585, %589 : vector<1x32xf32>
    %c12 = arith.constant 12 : index
    %c0_215 = arith.constant 0 : index
    %591 = vector.load %arg16[%c12, %c0_215] : memref<16x128xf32, #tpu.memory_space<vmem>>, vector<1x128xf32>
    %cst_216 = arith.constant dense<0.000000e+00> : vector<1x128xf32>
    %592 = tpu.matmul %590, %252, %cst_216 {dimension_numbers = #tpu.dot_dimension_numbers<[1], [0], [0], [1], [0, 0, 1, 1], [], []>} : vector<1x32xf32>, vector<32x128xf32>, vector<1x128xf32> -> vector<1x128xf32>
    %593 = arith.addf %591, %592 : vector<1x128xf32>
    %594 = vector.extract_strided_slice %593 {offsets = [0, 0], sizes = [1, 32], strides = [1, 1]} : vector<1x128xf32> to vector<1x32xf32>
    %595 = arith.negf %594 : vector<1x32xf32>
    %596 = math.exp %595 : vector<1x32xf32>
    %cst_217 = arith.constant 1.000000e+00 : f32
    %597 = vector.broadcast %cst_217 : f32 to vector<1x32xf32>
    %598 = arith.addf %597, %596 : vector<1x32xf32>
    %599 = arith.divf %597, %598 : vector<1x32xf32>
    %600 = vector.extract_strided_slice %593 {offsets = [0, 32], sizes = [1, 32], strides = [1, 1]} : vector<1x128xf32> to vector<1x32xf32>
    %601 = arith.negf %600 : vector<1x32xf32>
    %602 = math.exp %601 : vector<1x32xf32>
    %cst_218 = arith.constant 1.000000e+00 : f32
    %603 = vector.broadcast %cst_218 : f32 to vector<1x32xf32>
    %604 = arith.addf %603, %602 : vector<1x32xf32>
    %605 = arith.divf %603, %604 : vector<1x32xf32>
    %606 = vector.extract_strided_slice %593 {offsets = [0, 64], sizes = [1, 32], strides = [1, 1]} : vector<1x128xf32> to vector<1x32xf32>
    %607 = math.tanh %606 : vector<1x32xf32>
    %608 = vector.extract_strided_slice %593 {offsets = [0, 96], sizes = [1, 32], strides = [1, 1]} : vector<1x128xf32> to vector<1x32xf32>
    %609 = arith.negf %608 : vector<1x32xf32>
    %610 = math.exp %609 : vector<1x32xf32>
    %cst_219 = arith.constant 1.000000e+00 : f32
    %611 = vector.broadcast %cst_219 : f32 to vector<1x32xf32>
    %612 = arith.addf %611, %610 : vector<1x32xf32>
    %613 = arith.divf %611, %612 : vector<1x32xf32>
    %614 = arith.mulf %605, %588 : vector<1x32xf32>
    %615 = arith.mulf %599, %607 : vector<1x32xf32>
    %616 = arith.addf %614, %615 : vector<1x32xf32>
    %617 = math.tanh %616 : vector<1x32xf32>
    %618 = arith.mulf %613, %617 : vector<1x32xf32>
    %c13 = arith.constant 13 : index
    %c0_220 = arith.constant 0 : index
    %619 = vector.load %arg16[%c13, %c0_220] : memref<16x128xf32, #tpu.memory_space<vmem>>, vector<1x128xf32>
    %cst_221 = arith.constant dense<0.000000e+00> : vector<1x128xf32>
    %620 = tpu.matmul %618, %252, %cst_221 {dimension_numbers = #tpu.dot_dimension_numbers<[1], [0], [0], [1], [0, 0, 1, 1], [], []>} : vector<1x32xf32>, vector<32x128xf32>, vector<1x128xf32> -> vector<1x128xf32>
    %621 = arith.addf %619, %620 : vector<1x128xf32>
    %622 = vector.extract_strided_slice %621 {offsets = [0, 0], sizes = [1, 32], strides = [1, 1]} : vector<1x128xf32> to vector<1x32xf32>
    %623 = arith.negf %622 : vector<1x32xf32>
    %624 = math.exp %623 : vector<1x32xf32>
    %cst_222 = arith.constant 1.000000e+00 : f32
    %625 = vector.broadcast %cst_222 : f32 to vector<1x32xf32>
    %626 = arith.addf %625, %624 : vector<1x32xf32>
    %627 = arith.divf %625, %626 : vector<1x32xf32>
    %628 = vector.extract_strided_slice %621 {offsets = [0, 32], sizes = [1, 32], strides = [1, 1]} : vector<1x128xf32> to vector<1x32xf32>
    %629 = arith.negf %628 : vector<1x32xf32>
    %630 = math.exp %629 : vector<1x32xf32>
    %cst_223 = arith.constant 1.000000e+00 : f32
    %631 = vector.broadcast %cst_223 : f32 to vector<1x32xf32>
    %632 = arith.addf %631, %630 : vector<1x32xf32>
    %633 = arith.divf %631, %632 : vector<1x32xf32>
    %634 = vector.extract_strided_slice %621 {offsets = [0, 64], sizes = [1, 32], strides = [1, 1]} : vector<1x128xf32> to vector<1x32xf32>
    %635 = math.tanh %634 : vector<1x32xf32>
    %636 = vector.extract_strided_slice %621 {offsets = [0, 96], sizes = [1, 32], strides = [1, 1]} : vector<1x128xf32> to vector<1x32xf32>
    %637 = arith.negf %636 : vector<1x32xf32>
    %638 = math.exp %637 : vector<1x32xf32>
    %cst_224 = arith.constant 1.000000e+00 : f32
    %639 = vector.broadcast %cst_224 : f32 to vector<1x32xf32>
    %640 = arith.addf %639, %638 : vector<1x32xf32>
    %641 = arith.divf %639, %640 : vector<1x32xf32>
    %642 = arith.mulf %633, %616 : vector<1x32xf32>
    %643 = arith.mulf %627, %635 : vector<1x32xf32>
    %644 = arith.addf %642, %643 : vector<1x32xf32>
    %645 = math.tanh %644 : vector<1x32xf32>
    %646 = arith.mulf %641, %645 : vector<1x32xf32>
    %c14 = arith.constant 14 : index
    %c0_225 = arith.constant 0 : index
    %647 = vector.load %arg16[%c14, %c0_225] : memref<16x128xf32, #tpu.memory_space<vmem>>, vector<1x128xf32>
    %cst_226 = arith.constant dense<0.000000e+00> : vector<1x128xf32>
    %648 = tpu.matmul %646, %252, %cst_226 {dimension_numbers = #tpu.dot_dimension_numbers<[1], [0], [0], [1], [0, 0, 1, 1], [], []>} : vector<1x32xf32>, vector<32x128xf32>, vector<1x128xf32> -> vector<1x128xf32>
    %649 = arith.addf %647, %648 : vector<1x128xf32>
    %650 = vector.extract_strided_slice %649 {offsets = [0, 0], sizes = [1, 32], strides = [1, 1]} : vector<1x128xf32> to vector<1x32xf32>
    %651 = arith.negf %650 : vector<1x32xf32>
    %652 = math.exp %651 : vector<1x32xf32>
    %cst_227 = arith.constant 1.000000e+00 : f32
    %653 = vector.broadcast %cst_227 : f32 to vector<1x32xf32>
    %654 = arith.addf %653, %652 : vector<1x32xf32>
    %655 = arith.divf %653, %654 : vector<1x32xf32>
    %656 = vector.extract_strided_slice %649 {offsets = [0, 32], sizes = [1, 32], strides = [1, 1]} : vector<1x128xf32> to vector<1x32xf32>
    %657 = arith.negf %656 : vector<1x32xf32>
    %658 = math.exp %657 : vector<1x32xf32>
    %cst_228 = arith.constant 1.000000e+00 : f32
    %659 = vector.broadcast %cst_228 : f32 to vector<1x32xf32>
    %660 = arith.addf %659, %658 : vector<1x32xf32>
    %661 = arith.divf %659, %660 : vector<1x32xf32>
    %662 = vector.extract_strided_slice %649 {offsets = [0, 64], sizes = [1, 32], strides = [1, 1]} : vector<1x128xf32> to vector<1x32xf32>
    %663 = math.tanh %662 : vector<1x32xf32>
    %664 = vector.extract_strided_slice %649 {offsets = [0, 96], sizes = [1, 32], strides = [1, 1]} : vector<1x128xf32> to vector<1x32xf32>
    %665 = arith.negf %664 : vector<1x32xf32>
    %666 = math.exp %665 : vector<1x32xf32>
    %cst_229 = arith.constant 1.000000e+00 : f32
    %667 = vector.broadcast %cst_229 : f32 to vector<1x32xf32>
    %668 = arith.addf %667, %666 : vector<1x32xf32>
    %669 = arith.divf %667, %668 : vector<1x32xf32>
    %670 = arith.mulf %661, %644 : vector<1x32xf32>
    %671 = arith.mulf %655, %663 : vector<1x32xf32>
    %672 = arith.addf %670, %671 : vector<1x32xf32>
    %673 = math.tanh %672 : vector<1x32xf32>
    %674 = arith.mulf %669, %673 : vector<1x32xf32>
    %c15 = arith.constant 15 : index
    %c0_230 = arith.constant 0 : index
    %675 = vector.load %arg16[%c15, %c0_230] : memref<16x128xf32, #tpu.memory_space<vmem>>, vector<1x128xf32>
    %cst_231 = arith.constant dense<0.000000e+00> : vector<1x128xf32>
    %676 = tpu.matmul %674, %252, %cst_231 {dimension_numbers = #tpu.dot_dimension_numbers<[1], [0], [0], [1], [0, 0, 1, 1], [], []>} : vector<1x32xf32>, vector<32x128xf32>, vector<1x128xf32> -> vector<1x128xf32>
    %677 = arith.addf %675, %676 : vector<1x128xf32>
    %678 = vector.extract_strided_slice %677 {offsets = [0, 0], sizes = [1, 32], strides = [1, 1]} : vector<1x128xf32> to vector<1x32xf32>
    %679 = arith.negf %678 : vector<1x32xf32>
    %680 = math.exp %679 : vector<1x32xf32>
    %cst_232 = arith.constant 1.000000e+00 : f32
    %681 = vector.broadcast %cst_232 : f32 to vector<1x32xf32>
    %682 = arith.addf %681, %680 : vector<1x32xf32>
    %683 = arith.divf %681, %682 : vector<1x32xf32>
    %684 = vector.extract_strided_slice %677 {offsets = [0, 32], sizes = [1, 32], strides = [1, 1]} : vector<1x128xf32> to vector<1x32xf32>
    %685 = arith.negf %684 : vector<1x32xf32>
    %686 = math.exp %685 : vector<1x32xf32>
    %cst_233 = arith.constant 1.000000e+00 : f32
    %687 = vector.broadcast %cst_233 : f32 to vector<1x32xf32>
    %688 = arith.addf %687, %686 : vector<1x32xf32>
    %689 = arith.divf %687, %688 : vector<1x32xf32>
    %690 = vector.extract_strided_slice %677 {offsets = [0, 64], sizes = [1, 32], strides = [1, 1]} : vector<1x128xf32> to vector<1x32xf32>
    %691 = math.tanh %690 : vector<1x32xf32>
    %692 = vector.extract_strided_slice %677 {offsets = [0, 96], sizes = [1, 32], strides = [1, 1]} : vector<1x128xf32> to vector<1x32xf32>
    %693 = arith.negf %692 : vector<1x32xf32>
    %694 = math.exp %693 : vector<1x32xf32>
    %cst_234 = arith.constant 1.000000e+00 : f32
    %695 = vector.broadcast %cst_234 : f32 to vector<1x32xf32>
    %696 = arith.addf %695, %694 : vector<1x32xf32>
    %697 = arith.divf %695, %696 : vector<1x32xf32>
    %698 = arith.mulf %689, %672 : vector<1x32xf32>
    %699 = arith.mulf %683, %691 : vector<1x32xf32>
    %700 = arith.addf %698, %699 : vector<1x32xf32>
    %701 = math.tanh %700 : vector<1x32xf32>
    %702 = arith.mulf %697, %701 : vector<1x32xf32>
    %c0_235 = arith.constant 0 : index
    %c0_236 = arith.constant 0 : index
    %703 = vector.load %arg13[%c0_235, %c0_236] : memref<32x1xf32, #tpu.memory_space<vmem>>, vector<32x1xf32>
    %cst_237 = arith.constant dense<0.000000e+00> : vector<1x1xf32>
    %704 = tpu.matmul %702, %703, %cst_237 {dimension_numbers = #tpu.dot_dimension_numbers<[1], [0], [0], [1], [0, 0, 1, 1], [], []>} : vector<1x32xf32>, vector<32x1xf32>, vector<1x1xf32> -> vector<1x1xf32>
    %c0_238 = arith.constant 0 : index
    %c0_239 = arith.constant 0 : index
    %705 = vector.load %arg14[%c0_238, %c0_239] : memref<1x1xf32, #tpu.memory_space<vmem>>, vector<1x1xf32>
    %706 = arith.addf %704, %705 : vector<1x1xf32>
    %c0_240 = arith.constant 0 : index
    %c0_241 = arith.constant 0 : index
    %c0_242 = arith.constant 0 : index
    %707 = vector.load %arg15[%c0_240, %c0_241, %c0_242] : memref<1x1x1xf32, #tpu.memory_space<vmem>>, vector<1x1x1xf32>
    %708 = vector.shape_cast %707 : vector<1x1x1xf32> to vector<1x1xf32>
    %709 = vector.shape_cast %706 : vector<1x1xf32> to vector<1x1x1xf32>
    tpu.vector_store %arg15[%c0_240, %c0_241, %c0_242], %709 {strides = array<i32>} : memref<1x1x1xf32, #tpu.memory_space<vmem>>, vector<1x1x1xf32>,
    return
  }
  func.func @transform_0(%arg0: i32) -> (i32, i32, i32) {
    %c0_i32 = arith.constant 0 : i32
    %c0_i32_0 = arith.constant 0 : i32
    %c0_i32_1 = arith.constant 0 : i32
    return %arg0, %c0_i32, %c0_i32_0 : i32, i32, i32
  }
  func.func @transform_1(%arg0: i32) -> (i32, i32, i32) {
    %c0_i32 = arith.constant 0 : i32
    %c0_i32_0 = arith.constant 0 : i32
    %c0_i32_1 = arith.constant 0 : i32
    %c0_i32_2 = arith.constant 0 : i32
    return %c0_i32, %c0_i32_0, %c0_i32_1 : i32, i32, i32
  }
  func.func @transform_2(%arg0: i32) -> (i32, i32) {
    %c0_i32 = arith.constant 0 : i32
    %c0_i32_0 = arith.constant 0 : i32
    %c0_i32_1 = arith.constant 0 : i32
    return %c0_i32, %c0_i32_0 : i32, i32
  }
  func.func @transform_3(%arg0: i32) -> (i32, i32, i32) {
    %c0_i32 = arith.constant 0 : i32
    %c0_i32_0 = arith.constant 0 : i32
    %c0_i32_1 = arith.constant 0 : i32
    %c0_i32_2 = arith.constant 0 : i32
    return %c0_i32, %c0_i32_0, %c0_i32_1 : i32, i32, i32
  }
  func.func @transform_4(%arg0: i32) -> (i32, i32) {
    %c0_i32 = arith.constant 0 : i32
    %c0_i32_0 = arith.constant 0 : i32
    %c0_i32_1 = arith.constant 0 : i32
    return %c0_i32, %c0_i32_0 : i32, i32
  }
  func.func @transform_5(%arg0: i32) -> (i32, i32, i32) {
    %c0_i32 = arith.constant 0 : i32
    %c0_i32_0 = arith.constant 0 : i32
    %c0_i32_1 = arith.constant 0 : i32
    %c0_i32_2 = arith.constant 0 : i32
    return %c0_i32, %c0_i32_0, %c0_i32_1 : i32, i32, i32
  }
  func.func @transform_6(%arg0: i32) -> (i32, i32) {
    %c0_i32 = arith.constant 0 : i32
    %c0_i32_0 = arith.constant 0 : i32
    %c0_i32_1 = arith.constant 0 : i32
    return %c0_i32, %c0_i32_0 : i32, i32
  }
  func.func @transform_7(%arg0: i32) -> (i32, i32, i32) {
    %c0_i32 = arith.constant 0 : i32
    %c0_i32_0 = arith.constant 0 : i32
    %c0_i32_1 = arith.constant 0 : i32
    %c0_i32_2 = arith.constant 0 : i32
    return %c0_i32, %c0_i32_0, %c0_i32_1 : i32, i32, i32
  }
  func.func @transform_8(%arg0: i32) -> (i32, i32) {
    %c0_i32 = arith.constant 0 : i32
    %c0_i32_0 = arith.constant 0 : i32
    %c0_i32_1 = arith.constant 0 : i32
    return %c0_i32, %c0_i32_0 : i32, i32
  }
  func.func @transform_9(%arg0: i32) -> (i32, i32) {
    %c0_i32 = arith.constant 0 : i32
    %c0_i32_0 = arith.constant 0 : i32
    %c0_i32_1 = arith.constant 0 : i32
    return %c0_i32, %c0_i32_0 : i32, i32
  }
  func.func @transform_10(%arg0: i32) -> (i32, i32) {
    %c0_i32 = arith.constant 0 : i32
    %c0_i32_0 = arith.constant 0 : i32
    %c0_i32_1 = arith.constant 0 : i32
    return %c0_i32, %c0_i32_0 : i32, i32
  }
  func.func @transform_11(%arg0: i32) -> (i32, i32) {
    %c0_i32 = arith.constant 0 : i32
    %c0_i32_0 = arith.constant 0 : i32
    %c0_i32_1 = arith.constant 0 : i32
    return %c0_i32, %c0_i32_0 : i32, i32
  }
  func.func @transform_12(%arg0: i32) -> (i32, i32) {
    %c0_i32 = arith.constant 0 : i32
    %c0_i32_0 = arith.constant 0 : i32
    %c0_i32_1 = arith.constant 0 : i32
    return %c0_i32, %c0_i32_0 : i32, i32
  }
  func.func @transform_13(%arg0: i32) -> (i32, i32) {
    %c0_i32 = arith.constant 0 : i32
    %c0_i32_0 = arith.constant 0 : i32
    %c0_i32_1 = arith.constant 0 : i32
    return %c0_i32, %c0_i32_0 : i32, i32
  }
  func.func @transform_14(%arg0: i32) -> (i32, i32, i32) {
    %c0_i32 = arith.constant 0 : i32
    %c0_i32_0 = arith.constant 0 : i32
    %c0_i32_1 = arith.constant 0 : i32
    return %arg0, %c0_i32, %c0_i32_0 : i32, i32, i32
  }
}

</mosaic_0001>

<llo_original>
// kernel: conv_autoencoder_lstm_forward.1
$region0: #{conv_autoencoder_lstm_forward.1}
  #allocation0 [shape = 'u32[]', space=smem, size = 0x4, offset = 0x4, fixed_abs, tag = 'smem constant byte address 0x4 - core index']
  #allocation1 [shape = 'u32[144,128]{1,0:T(1,128)}', space=vmem, size = 0x12000, scoped, tag = 'internal scratch']
  #allocation2 [shape = 'f32[16,128]{1,0:T(8,128)}', space=vmem, size = 0x2000, scoped, tag = 'scratch operand']
  #allocation3 [shape = 'f32[1,1]{1,0:T(1,128)S(1)}', space=vmem, size = 0x200, scoped, tag = 'scoped memory for conv_autoencoder_lstm_forward.1']
  %s0 = inlined_call_operand.vmem [shape: f32[2,16,4], index: 0, kind: input, shape index: {}]
  %s1 = inlined_call_operand.vmem [shape: f32[3,4,64], index: 1, kind: input, shape index: {}]
  %s2 = inlined_call_operand.vmem [shape: f32[1,64], index: 2, kind: input, shape index: {}]
  %s3 = inlined_call_operand.vmem [shape: f32[3,64,128], index: 3, kind: input, shape index: {}]
  %s4 = inlined_call_operand.vmem [shape: f32[1,128], index: 4, kind: input, shape index: {}]
  %s5 = inlined_call_operand.vmem [shape: f32[4,128,64], index: 5, kind: input, shape index: {}]
  %s6 = inlined_call_operand.vmem [shape: f32[1,64], index: 6, kind: input, shape index: {}]
  %s7 = inlined_call_operand.vmem [shape: f32[4,64,4], index: 7, kind: input, shape index: {}]
  %s8 = inlined_call_operand.vmem [shape: f32[1,4], index: 8, kind: input, shape index: {}]
  %s9 = inlined_call_operand.vmem [shape: f32[4,128], index: 9, kind: input, shape index: {}]
  %s10 = inlined_call_operand.vmem [shape: f32[1,128], index: 10, kind: input, shape index: {}]
  %s11 = inlined_call_operand.vmem [shape: f32[32,128], index: 11, kind: input, shape index: {}]
  %s12 = inlined_call_operand.vmem [shape: f32[32,1], index: 12, kind: input, shape index: {}]
  %s13 = inlined_call_operand.<no memory space> [shape: f32[1,1], index: 13, kind: input, shape index: {}]
  %s14 = inlined_call_operand.vmem [shape: f32[2,1,1], index: 14, kind: output, shape index: {}]
  %s15 = sld [smem:[#allocation0]]
  $region89: #{conv_autoencoder_lstm_forward.1} parent=0
    _
  %s17 = ssub.s32 1, %s15
  %s18 = scalar_select 0, %s17, %s15
  %v19 = vstv %s13
  %20 = vst [vmem:[#allocation3] sm:$0x1] %v19
  loop: start=0, step=1, limit=4
  $region2: #{conv_autoencoder_lstm_forward.1} parent=0 // loop_pre_header
    _
  $region3: #{conv_autoencoder_lstm_forward.1} parent=0 // loop_header
    %s22 = sphi 0, %s26
    %p23 = scmp.ge.s32.totalorder %s22, 4
    %s32 = sphi 0, %s34
    %s35 = sphi 0, %s32
    %s36 = sphi 0, %s35
    %s52 = sphi 0, %s36
    %s56 = sphi 0, %s56
    %s58 = sphi 0, %s56
    %s59 = sphi 0, %s58
    %s73 = sphi 0, %s59
    %s77 = sphi 0, %s77
    %s79 = sphi 0, %s77
    %s80 = sphi 0, %s79
    %s94 = sphi 0, %s80
    %s98 = sphi 0, %s98
    %s100 = sphi 0, %s98
    %s101 = sphi 0, %s100
    %s115 = sphi 0, %s101
    %s119 = sphi 0, %s119
    %s121 = sphi 0, %s119
    %s122 = sphi 0, %s121
    %s136 = sphi 0, %s122
    %s140 = sphi 0, %s140
    %s142 = sphi 0, %s140
    %s143 = sphi 0, %s142
    %s157 = sphi 0, %s143
    %s161 = sphi 0, %s161
    %s163 = sphi 0, %s161
    %s164 = sphi 0, %s163
    %s178 = sphi 0, %s164
    %s182 = sphi 0, %s182
    %s184 = sphi 0, %s182
    %s185 = sphi 0, %s184
    %s199 = sphi 0, %s185
    %s203 = sphi 0, %s203
    %s205 = sphi 0, %s203
    %s206 = sphi 0, %s205
    %s220 = sphi 0, %s206
    %s224 = sphi 0, %s224
    %s226 = sphi 0, %s224
    %s227 = sphi 0, %s226
    %s241 = sphi 0, %s227
    %s245 = sphi 0, %s245
    %s247 = sphi 0, %s245
    %s248 = sphi 0, %s247
    %s262 = sphi 0, %s248
    %s266 = sphi 0, %s266
    %s268 = sphi 0, %s266
    %s269 = sphi 0, %s268
    %s283 = sphi 0, %s269
    %s287 = sphi 0, %s287
    %s289 = sphi 0, %s287
    %s290 = sphi 0, %s289
    %s304 = sphi 0, %s290
    %s308 = sphi 0, %s308
    %s310 = sphi 0, %s308
    %s311 = sphi 0, %s310
    %s325 = sphi 0, %s311
    %s331 = sphi 0, %s333
    %s334 = sphi 0, %s331
    %s335 = sphi 0, %s334
    %s351 = sphi 0, %s335
  $region4: #{conv_autoencoder_lstm_forward.1} parent=0 // loop_header_branch
    %25 = sbr.rel (%p23) target = $region8
  $region5: #{conv_autoencoder_lstm_forward.1} parent=0 // loop_body
    %s27 = ssub.s32 %s22, 1
    %s28 = ssub.s32 %s22, 2
    %s29 = sadd.s32 %s22, 1
    %s30 = ssub.s32 %s22, %s29
    %p31 = scmp.eq.s32.totalorder %s30, 0
    %s33 = sadd.s32 %s32, 1
    %s34 = scalar_select %p31, %s32, %s33
    %p37 = pneg %p31
    %p38 = scmp.eq.s32.totalorder %s22, 1
    %p39 = por %p37, %p38
    %p40 = scmp.ne.s32.totalorder %s32, %s35
    %p41 = scmp.eq.s32.totalorder %s22, 0
    %p42 = por %p40, %p41
    %p43 = scmp.ne.s32.totalorder %s32, %s35
    %p44 = scmp.eq.s32.totalorder %s27, 1
    %p45 = por %p43, %p44
    %p46 = scmp.ne.s32.totalorder %s35, %s36
    %p47 = scmp.eq.s32.totalorder %s27, 0
    %p48 = por %p46, %p47
    %p49 = scmp.ne.s32.totalorder %s35, %s36
    %p50 = scmp.eq.s32.totalorder %s28, 1
    %p51 = por %p49, %p50
    %p53 = scmp.ne.s32.totalorder %s36, %s52
    %p54 = scmp.eq.s32.totalorder %s28, 0
    %p55 = por %p53, %p54
    %s57 = sadd.s32 %s56, 1
    %p60 = scmp.eq.s32.totalorder %s22, 1
    %p61 = scmp.ne.s32.totalorder %s56, %s58
    %p62 = scmp.eq.s32.totalorder %s22, 0
    %p63 = por %p61, %p62
    %p64 = scmp.ne.s32.totalorder %s56, %s58
    %p65 = scmp.eq.s32.totalorder %s27, 1
    %p66 = por %p64, %p65
    %p67 = scmp.ne.s32.totalorder %s58, %s59
    %p68 = scmp.eq.s32.totalorder %s27, 0
    %p69 = por %p67, %p68
    %p70 = scmp.ne.s32.totalorder %s58, %s59
    %p71 = scmp.eq.s32.totalorder %s28, 1
    %p72 = por %p70, %p71
    %p74 = scmp.ne.s32.totalorder %s59, %s73
    %p75 = scmp.eq.s32.totalorder %s28, 0
    %p76 = por %p74, %p75
    %s78 = sadd.s32 %s77, 1
    %p81 = scmp.eq.s32.totalorder %s22, 1
    %p82 = scmp.ne.s32.totalorder %s77, %s79
    %p83 = scmp.eq.s32.totalorder %s22, 0
    %p84 = por %p82, %p83
    %p85 = scmp.ne.s32.totalorder %s77, %s79
    %p86 = scmp.eq.s32.totalorder %s27, 1
    %p87 = por %p85, %p86
    %p88 = scmp.ne.s32.totalorder %s79, %s80
    %p89 = scmp.eq.s32.totalorder %s27, 0
    %p90 = por %p88, %p89
    %p91 = scmp.ne.s32.totalorder %s79, %s80
    %p92 = scmp.eq.s32.totalorder %s28, 1
    %p93 = por %p91, %p92
    %p95 = scmp.ne.s32.totalorder %s80, %s94
    %p96 = scmp.eq.s32.totalorder %s28, 0
    %p97 = por %p95, %p96
    %s99 = sadd.s32 %s98, 1
    %p102 = scmp.eq.s32.totalorder %s22, 1
    %p103 = scmp.ne.s32.totalorder %s98, %s100
    %p104 = scmp.eq.s32.totalorder %s22, 0
    %p105 = por %p103, %p104
    %p106 = scmp.ne.s32.totalorder %s98, %s100
    %p107 = scmp.eq.s32.totalorder %s27, 1
    %p108 = por %p106, %p107
    %p109 = scmp.ne.s32.totalorder %s100, %s101
    %p110 = scmp.eq.s32.totalorder %s27, 0
    %p111 = por %p109, %p110
    %p112 = scmp.ne.s32.totalorder %s100, %s101
    %p113 = scmp.eq.s32.totalorder %s28, 1
    %p114 = por %p112, %p113
    %p116 = scmp.ne.s32.totalorder %s101, %s115
    %p117 = scmp.eq.s32.totalorder %s28, 0
    %p118 = por %p116, %p117
    %s120 = sadd.s32 %s119, 1
    %p123 = scmp.eq.s32.totalorder %s22, 1
    %p124 = scmp.ne.s32.totalorder %s119, %s121
    %p125 = scmp.eq.s32.totalorder %s22, 0
    %p126 = por %p124, %p125
    %p127 = scmp.ne.s32.totalorder %s119, %s121
    %p128 = scmp.eq.s32.totalorder %s27, 1
    %p129 = por %p127, %p128
    %p130 = scmp.ne.s32.totalorder %s121, %s122
    %p131 = scmp.eq.s32.totalorder %s27, 0
    %p132 = por %p130, %p131
    %p133 = scmp.ne.s32.totalorder %s121, %s122
    %p134 = scmp.eq.s32.totalorder %s28, 1
    %p135 = por %p133, %p134
    %p137 = scmp.ne.s32.totalorder %s122, %s136
    %p138 = scmp.eq.s32.totalorder %s28, 0
    %p139 = por %p137, %p138
    %s141 = sadd.s32 %s140, 1
    %p144 = scmp.eq.s32.totalorder %s22, 1
    %p145 = scmp.ne.s32.totalorder %s140, %s142
    %p146 = scmp.eq.s32.totalorder %s22, 0
    %p147 = por %p145, %p146
    %p148 = scmp.ne.s32.totalorder %s140, %s142
    %p149 = scmp.eq.s32.totalorder %s27, 1
    %p150 = por %p148, %p149
    %p151 = scmp.ne.s32.totalorder %s142, %s143
    %p152 = scmp.eq.s32.totalorder %s27, 0
    %p153 = por %p151, %p152
    %p154 = scmp.ne.s32.totalorder %s142, %s143
    %p155 = scmp.eq.s32.totalorder %s28, 1
    %p156 = por %p154, %p155
    %p158 = scmp.ne.s32.totalorder %s143, %s157
    %p159 = scmp.eq.s32.totalorder %s28, 0
    %p160 = por %p158, %p159
    %s162 = sadd.s32 %s161, 1
    %p165 = scmp.eq.s32.totalorder %s22, 1
    %p166 = scmp.ne.s32.totalorder %s161, %s163
    %p167 = scmp.eq.s32.totalorder %s22, 0
    %p168 = por %p166, %p167
    %p169 = scmp.ne.s32.totalorder %s161, %s163
    %p170 = scmp.eq.s32.totalorder %s27, 1
    %p171 = por %p169, %p170
    %p172 = scmp.ne.s32.totalorder %s163, %s164
    %p173 = scmp.eq.s32.totalorder %s27, 0
    %p174 = por %p172, %p173
    %p175 = scmp.ne.s32.totalorder %s163, %s164
    %p176 = scmp.eq.s32.totalorder %s28, 1
    %p177 = por %p175, %p176
    %p179 = scmp.ne.s32.totalorder %s164, %s178
    %p180 = scmp.eq.s32.totalorder %s28, 0
    %p181 = por %p179, %p180
    %s183 = sadd.s32 %s182, 1
    %p186 = scmp.eq.s32.totalorder %s22, 1
    %p187 = scmp.ne.s32.totalorder %s182, %s184
    %p188 = scmp.eq.s32.totalorder %s22, 0
    %p189 = por %p187, %p188
    %p190 = scmp.ne.s32.totalorder %s182, %s184
    %p191 = scmp.eq.s32.totalorder %s27, 1
    %p192 = por %p190, %p191
    %p193 = scmp.ne.s32.totalorder %s184, %s185
    %p194 = scmp.eq.s32.totalorder %s27, 0
    %p195 = por %p193, %p194
    %p196 = scmp.ne.s32.totalorder %s184, %s185
    %p197 = scmp.eq.s32.totalorder %s28, 1
    %p198 = por %p196, %p197
    %p200 = scmp.ne.s32.totalorder %s185, %s199
    %p201 = scmp.eq.s32.totalorder %s28, 0
    %p202 = por %p200, %p201
    %s204 = sadd.s32 %s203, 1
    %p207 = scmp.eq.s32.totalorder %s22, 1
    %p208 = scmp.ne.s32.totalorder %s203, %s205
    %p209 = scmp.eq.s32.totalorder %s22, 0
    %p210 = por %p208, %p209
    %p211 = scmp.ne.s32.totalorder %s203, %s205
    %p212 = scmp.eq.s32.totalorder %s27, 1
    %p213 = por %p211, %p212
    %p214 = scmp.ne.s32.totalorder %s205, %s206
    %p215 = scmp.eq.s32.totalorder %s27, 0
    %p216 = por %p214, %p215
    %p217 = scmp.ne.s32.totalorder %s205, %s206
    %p218 = scmp.eq.s32.totalorder %s28, 1
    %p219 = por %p217, %p218
    %p221 = scmp.ne.s32.totalorder %s206, %s220
    %p222 = scmp.eq.s32.totalorder %s28, 0
    %p223 = por %p221, %p222
    %s225 = sadd.s32 %s224, 1
    %p228 = scmp.eq.s32.totalorder %s22, 1
    %p229 = scmp.ne.s32.totalorder %s224, %s226
    %p230 = scmp.eq.s32.totalorder %s22, 0
    %p231 = por %p229, %p230
    %p232 = scmp.ne.s32.totalorder %s224, %s226
    %p233 = scmp.eq.s32.totalorder %s27, 1
    %p234 = por %p232, %p233
    %p235 = scmp.ne.s32.totalorder %s226, %s227
    %p236 = scmp.eq.s32.totalorder %s27, 0
    %p237 = por %p235, %p236
    %p238 = scmp.ne.s32.totalorder %s226, %s227
    %p239 = scmp.eq.s32.totalorder %s28, 1
    %p240 = por %p238, %p239
    %p242 = scmp.ne.s32.totalorder %s227, %s241
    %p243 = scmp.eq.s32.totalorder %s28, 0
    %p244 = por %p242, %p243
    %s246 = sadd.s32 %s245, 1
    %p249 = scmp.eq.s32.totalorder %s22, 1
    %p250 = scmp.ne.s32.totalorder %s245, %s247
    %p251 = scmp.eq.s32.totalorder %s22, 0
    %p252 = por %p250, %p251
    %p253 = scmp.ne.s32.totalorder %s245, %s247
    %p254 = scmp.eq.s32.totalorder %s27, 1
    %p255 = por %p253, %p254
    %p256 = scmp.ne.s32.totalorder %s247, %s248
    %p257 = scmp.eq.s32.totalorder %s27, 0
    %p258 = por %p256, %p257
    %p259 = scmp.ne.s32.totalorder %s247, %s248
    %p260 = scmp.eq.s32.totalorder %s28, 1
    %p261 = por %p259, %p260
    %p263 = scmp.ne.s32.totalorder %s248, %s262
    %p264 = scmp.eq.s32.totalorder %s28, 0
    %p265 = por %p263, %p264
    %s267 = sadd.s32 %s266, 1
    %p270 = scmp.eq.s32.totalorder %s22, 1
    %p271 = scmp.ne.s32.totalorder %s266, %s268
    %p272 = scmp.eq.s32.totalorder %s22, 0
    %p273 = por %p271, %p272
    %p274 = scmp.ne.s32.totalorder %s266, %s268
    %p275 = scmp.eq.s32.totalorder %s27, 1
    %p276 = por %p274, %p275
    %p277 = scmp.ne.s32.totalorder %s268, %s269
    %p278 = scmp.eq.s32.totalorder %s27, 0
    %p279 = por %p277, %p278
    %p280 = scmp.ne.s32.totalorder %s268, %s269
    %p281 = scmp.eq.s32.totalorder %s28, 1
    %p282 = por %p280, %p281
    %p284 = scmp.ne.s32.totalorder %s269, %s283
    %p285 = scmp.eq.s32.totalorder %s28, 0
    %p286 = por %p284, %p285
    %s288 = sadd.s32 %s287, 1
    %p291 = scmp.eq.s32.totalorder %s22, 1
    %p292 = scmp.ne.s32.totalorder %s287, %s289
    %p293 = scmp.eq.s32.totalorder %s22, 0
    %p294 = por %p292, %p293
    %p295 = scmp.ne.s32.totalorder %s287, %s289
    %p296 = scmp.eq.s32.totalorder %s27, 1
    %p297 = por %p295, %p296
    %p298 = scmp.ne.s32.totalorder %s289, %s290
    %p299 = scmp.eq.s32.totalorder %s27, 0
    %p300 = por %p298, %p299
    %p301 = scmp.ne.s32.totalorder %s289, %s290
    %p302 = scmp.eq.s32.totalorder %s28, 1
    %p303 = por %p301, %p302
    %p305 = scmp.ne.s32.totalorder %s290, %s304
    %p306 = scmp.eq.s32.totalorder %s28, 0
    %p307 = por %p305, %p306
    %s309 = sadd.s32 %s308, 1
    %p312 = scmp.eq.s32.totalorder %s22, 1
    %p313 = scmp.ne.s32.totalorder %s308, %s310
    %p314 = scmp.eq.s32.totalorder %s22, 0
    %p315 = por %p313, %p314
    %p316 = scmp.ne.s32.totalorder %s308, %s310
    %p317 = scmp.eq.s32.totalorder %s27, 1
    %p318 = por %p316, %p317
    %p319 = scmp.ne.s32.totalorder %s310, %s311
    %p320 = scmp.eq.s32.totalorder %s27, 0
    %p321 = por %p319, %p320
    %p322 = scmp.ne.s32.totalorder %s310, %s311
    %p323 = scmp.eq.s32.totalorder %s28, 1
    %p324 = por %p322, %p323
    %p326 = scmp.ne.s32.totalorder %s311, %s325
    %p327 = scmp.eq.s32.totalorder %s28, 0
    %p328 = por %p326, %p327
    %s329 = ssub.s32 %s22, %s29
    %p330 = scmp.eq.s32.totalorder %s329, 0
    %s332 = sadd.s32 %s331, 1
    %s333 = scalar_select %p330, %s331, %s332
    %p336 = pneg %p330
    %p337 = scmp.eq.s32.totalorder %s22, 1
    %p338 = por %p336, %p337
    %p339 = scmp.ne.s32.totalorder %s331, %s334
    %p340 = scmp.eq.s32.totalorder %s22, 0
    %p341 = por %p339, %p340
    %p342 = scmp.ne.s32.totalorder %s331, %s334
    %p343 = scmp.eq.s32.totalorder %s27, 1
    %p344 = por %p342, %p343
    %p345 = scmp.ne.s32.totalorder %s334, %s335
    %p346 = scmp.eq.s32.totalorder %s27, 0
    %p347 = por %p345, %p346
    %p348 = scmp.ne.s32.totalorder %s334, %s335
    %p349 = scmp.eq.s32.totalorder %s28, 1
    %p350 = por %p348, %p349
    %p352 = scmp.ne.s32.totalorder %s335, %s351
    %p353 = scmp.eq.s32.totalorder %s28, 0
    %p354 = por %p352, %p353
    %p355 = scmp.le.s32.totalorder 1, %s22
    %p356 = scmp.lt.s32.totalorder %s22, 3
    %p357 = pnand %p355, %p356
    %p358 = pneg %p357
    // Predicated region
    $region9: #{conv_autoencoder_lstm_forward.1} parent=5 // pred_check
      _
    $region10: #{conv_autoencoder_lstm_forward.1} parent=5 // pred_check_branch
      %360 = sbr.rel (%p357) target = $region12
    $region11: #{conv_autoencoder_lstm_forward.1} parent=5 // pred_region
      %s361 = ssub.s32 %s22, 1
      // Predicated region
      $region13: #{conv_autoencoder_lstm_forward.1} parent=11 // pred_check
        %p362 = pneg %p69
      $region14: #{conv_autoencoder_lstm_forward.1} parent=11 // pred_check_branch
        %364 = sbr.rel (%p362) target = $region16
      $region15: #{conv_autoencoder_lstm_forward.1} parent=11 // pred_region
        _
      $region16: #{conv_autoencoder_lstm_forward.1} parent=11 // pred_fallthru
        _
      // Predicated region
      $region17: #{conv_autoencoder_lstm_forward.1} parent=11 // pred_check
        %p365 = pneg %p90
      $region18: #{conv_autoencoder_lstm_forward.1} parent=11 // pred_check_branch
        %367 = sbr.rel (%p365) target = $region20
      $region19: #{conv_autoencoder_lstm_forward.1} parent=11 // pred_region
        _
      $region20: #{conv_autoencoder_lstm_forward.1} parent=11 // pred_fallthru
        _
      // Predicated region
      $region21: #{conv_autoencoder_lstm_forward.1} parent=11 // pred_check
        %p368 = pneg %p111
      $region22: #{conv_autoencoder_lstm_forward.1} parent=11 // pred_check_branch
        %370 = sbr.rel (%p368) target = $region24
      $region23: #{conv_autoencoder_lstm_forward.1} parent=11 // pred_region
        _
      $region24: #{conv_autoencoder_lstm_forward.1} parent=11 // pred_fallthru
        _
      // Predicated region
      $region25: #{conv_autoencoder_lstm_forward.1} parent=11 // pred_check
        %p371 = pneg %p132
      $region26: #{conv_autoencoder_lstm_forward.1} parent=11 // pred_check_branch
        %373 = sbr.rel (%p371) target = $region28
      $region27: #{conv_autoencoder_lstm_forward.1} parent=11 // pred_region
        _
      $region28: #{conv_autoencoder_lstm_forward.1} parent=11 // pred_fallthru
        _
      // Predicated region
      $region29: #{conv_autoencoder_lstm_forward.1} parent=11 // pred_check
        %p374 = pneg %p153
      $region30: #{conv_autoencoder_lstm_forward.1} parent=11 // pred_check_branch
        %376 = sbr.rel (%p374) target = $region32
      $region31: #{conv_autoencoder_lstm_forward.1} parent=11 // pred_region
        _
      $region32: #{conv_autoencoder_lstm_forward.1} parent=11 // pred_fallthru
        _
      // Predicated region
      $region33: #{conv_autoencoder_lstm_forward.1} parent=11 // pred_check
        %p377 = pneg %p174
      $region34: #{conv_autoencoder_lstm_forward.1} parent=11 // pred_check_branch
        %379 = sbr.rel (%p377) target = $region36
      $region35: #{conv_autoencoder_lstm_forward.1} parent=11 // pred_region
        _
      $region36: #{conv_autoencoder_lstm_forward.1} parent=11 // pred_fallthru
        _
      // Predicated region
      $region37: #{conv_autoencoder_lstm_forward.1} parent=11 // pred_check
        %p380 = pneg %p195
      $region38: #{conv_autoencoder_lstm_forward.1} parent=11 // pred_check_branch
        %382 = sbr.rel (%p380) target = $region40
      $region39: #{conv_autoencoder_lstm_forward.1} parent=11 // pred_region
        _
      $region40: #{conv_autoencoder_lstm_forward.1} parent=11 // pred_fallthru
        _
      // Predicated region
      $region41: #{conv_autoencoder_lstm_forward.1} parent=11 // pred_check
        %p383 = pneg %p216
      $region42: #{conv_autoencoder_lstm_forward.1} parent=11 // pred_check_branch
        %385 = sbr.rel (%p383) target = $region44
      $region43: #{conv_autoencoder_lstm_forward.1} parent=11 // pred_region
        _
      $region44: #{conv_autoencoder_lstm_forward.1} parent=11 // pred_fallthru
        _
      // Predicated region
      $region45: #{conv_autoencoder_lstm_forward.1} parent=11 // pred_check
        %p386 = pneg %p237
      $region46: #{conv_autoencoder_lstm_forward.1} parent=11 // pred_check_branch
        %388 = sbr.rel (%p386) target = $region48
      $region47: #{conv_autoencoder_lstm_forward.1} parent=11 // pred_region
        _
      $region48: #{conv_autoencoder_lstm_forward.1} parent=11 // pred_fallthru
        _
      // Predicated region
      $region49: #{conv_autoencoder_lstm_forward.1} parent=11 // pred_check
        %p389 = pneg %p258
      $region50: #{conv_autoencoder_lstm_forward.1} parent=11 // pred_check_branch
        %391 = sbr.rel (%p389) target = $region52
      $region51: #{conv_autoencoder_lstm_forward.1} parent=11 // pred_region
        _
      $region52: #{conv_autoencoder_lstm_forward.1} parent=11 // pred_fallthru
        _
      // Predicated region
      $region53: #{conv_autoencoder_lstm_forward.1} parent=11 // pred_check
        %p392 = pneg %p279
      $region54: #{conv_autoencoder_lstm_forward.1} parent=11 // pred_check_branch
        %394 = sbr.rel (%p392) target = $region56
      $region55: #{conv_autoencoder_lstm_forward.1} parent=11 // pred_region
        _
      $region56: #{conv_autoencoder_lstm_forward.1} parent=11 // pred_fallthru
        _
      // Predicated region
      $region57: #{conv_autoencoder_lstm_forward.1} parent=11 // pred_check
        %p395 = pneg %p300
      $region58: #{conv_autoencoder_lstm_forward.1} parent=11 // pred_check_branch
        %397 = sbr.rel (%p395) target = $region60
      $region59: #{conv_autoencoder_lstm_forward.1} parent=11 // pred_region
        _
      $region60: #{conv_autoencoder_lstm_forward.1} parent=11 // pred_fallthru
        _
      // Predicated region
      $region61: #{conv_autoencoder_lstm_forward.1} parent=11 // pred_check
        %p398 = pneg %p321
      $region62: #{conv_autoencoder_lstm_forward.1} parent=11 // pred_check_branch
        %400 = sbr.rel (%p398) target = $region64
      $region63: #{conv_autoencoder_lstm_forward.1} parent=11 // pred_region
        _
      $region64: #{conv_autoencoder_lstm_forward.1} parent=11 // pred_fallthru
        _
    $region12: #{conv_autoencoder_lstm_forward.1} parent=5 // pred_fallthru
      _
    %p401 = scmp.lt.s32.totalorder %s22, 2
    // Predicated region
    $region65: #{conv_autoencoder_lstm_forward.1} parent=5 // pred_check
      %p402 = pneg %p401
    $region66: #{conv_autoencoder_lstm_forward.1} parent=5 // pred_check_branch
      %404 = sbr.rel (%p402) target = $region68
    $region67: #{conv_autoencoder_lstm_forward.1} parent=5 // pred_region
      // Predicated region
      $region69: #{conv_autoencoder_lstm_forward.1} parent=67 // pred_check
        %p405 = pneg %p42
      $region70: #{conv_autoencoder_lstm_forward.1} parent=67 // pred_check_branch
        %407 = sbr.rel (%p405) target = $region72
      $region71: #{conv_autoencoder_lstm_forward.1} parent=67 // pred_region
        %p408 = scmp.lt.s32.totalorder %s22, 1
        %s409 = scalar_select %p408, %s22, 1
        %s410 = smul.addr %s409, 2
        %s411 = smul.addr %s410, 8
        %s412 = scalar_lea.vmem %s0, %s411
      $region72: #{conv_autoencoder_lstm_forward.1} parent=67 // pred_fallthru
        _
    $region68: #{conv_autoencoder_lstm_forward.1} parent=5 // pred_fallthru
      _
    %p413 = scmp.le.s32.totalorder 1, %s22
    %p414 = scmp.lt.s32.totalorder %s22, 3
    %p415 = pnand %p413, %p414
    %p416 = pneg %p415
    // Predicated region
    $region73: #{conv_autoencoder_lstm_forward.1} parent=5 // pred_check
      _
    $region74: #{conv_autoencoder_lstm_forward.1} parent=5 // pred_check_branch
      %418 = sbr.rel (%p415) target = $region76
    $region75: #{conv_autoencoder_lstm_forward.1} parent=5 // pred_region
      %s419 = ssub.s32 %s22, 1
      %p420 = scmp.lt.s32.totalorder %s27, 1
      %s421 = scalar_select %p420, %s27, 1
      %s422 = smul.addr %s421, 2
      %s423 = smul.addr %s422, 8
      %s424 = scalar_lea.vmem %s0, %s423
      %p425 = pneg %p48
      %p426 = pneg %p45
      %p427 = pneg %p69
      %p428 = pneg %p66
      %p429 = pneg %p90
      %p430 = pneg %p87
      %p431 = pneg %p111
      %p432 = pneg %p108
      %p433 = pneg %p132
      %p434 = pneg %p129
      %p435 = pneg %p153
      %p436 = pneg %p150
      %p437 = pneg %p174
      %p438 = pneg %p171
      %p439 = pneg %p195
      %p440 = pneg %p192
      %p441 = pneg %p216
      %p442 = pneg %p213
      %p443 = pneg %p237
      %p444 = pneg %p234
      %p445 = pneg %p258
      %p446 = pneg %p255
      %p447 = pneg %p279
      %p448 = pneg %p276
      %p449 = pneg %p300
      %p450 = pneg %p297
      %p451 = pneg %p321
      %p452 = pneg %p318
      %p453 = pneg %p347
      %p454 = pneg %p344
      %p455 = scmp.lt.s32.totalorder %s27, 1
      %s456 = scalar_select %p455, %s27, 1
      %s457 = scalar_lea.vmem %s14, %s456
      %p458 = scmp.lt.s32.totalorder %s27, 1
      %s459 = scalar_select %p458, %s27, 1
      %s460 = smul.addr %s459, 2
      %s461 = smul.addr %s460, 8
      %s462 = scalar_lea.vmem %s0, %s461
      %p463 = scmp.lt.s32.totalorder %s27, 1
      %s464 = scalar_select %p463, %s27, 1
      %s465 = scalar_lea.vmem %s14, %s464
      %v466 = vld [vmem:[%s462] sm:$0xff]
      %v467 = vld [vmem:[%s462 + $0x8] sm:$0xff]
      %v468 = vlaneseq
      %v469 = vshrl.u32 %v468, 7
      %v470 = vadd.s32 %v469, 8
      %v471 = vlaneseq
      %v472 = vand.u32 %v471, 127
      %v473 = vadd.s32 %v469, 4294967295
      %v474 = vadd.s32 %v470, 4294967295
      %vm475 = vcmp.eq.s32.totalorder %v472, %v473
      %vm476 = vcmp.eq.s32.totalorder %v472, %v474
      %v477 = vsel %vm475, 1.0, 0.0
      %v478 = vsel %vm476, 1.0, 0.0
      %vm479 = vcmask 130048
      %v481 = vsel %vm479, %v477, 0
      %v484 = vsel %vm479, %v478, 0
      %486 = vmatprep.subr.mxu0 0.0
      %487 = vmatpush1.msra.mxu0 0.0
      %488 = vmatprep.subr.mxu0 0.0
      %489 = vmatpush1.msra.mxu0 0.0
      %490 = vmatprep.subr.mxu0 0.0
      %491 = vmatpush1.msra.mxu0 0.0
      %492 = vmatprep.subr.mxu0 0.0
      %493 = vmatpush1.msra.mxu0 0.0
      %494 = vmatprep.subr.mxu0 0.0
      %495 = vmatpush1.msra.mxu0 0.0
      %496 = vmatprep.subr.mxu0 0.0
      %497 = vmatpush1.msra.mxu0 0.0
      %498 = vmatprep.subr.mxu0 0.0
      %499 = vmatpush1.msra.mxu0 0.0
      %500 = vmatprep.subr.mxu0 0.0
      %501 = vmatpush1.msra.mxu0 0.0
      %502 = vmatprep.subr.mxu0 0.0
      %503 = vmatpush1.msra.mxu0 0.0
      %504 = vmatprep.subr.mxu0 0.0
      %505 = vmatpush1.msra.mxu0 0.0
      %506 = vmatprep.subr.mxu0 0.0
      %507 = vmatpush1.msra.mxu0 0.0
      %508 = vmatprep.subr.mxu0 0.0
      %509 = vmatpush1.msra.mxu0 0.0
      %510 = vmatprep.subr.mxu0 0.0
      %511 = vmatpush1.msra.mxu0 0.0
      %512 = vmatprep.subr.mxu0 0.0
      %513 = vmatpush1.msra.mxu0 0.0
      %514 = vmatprep.subr.mxu0 0.0
      %515 = vmatpush1.msra.mxu0 %v467
      %516 = vmatprep.subr.mxu0 0.0
      %517 = vmatpush1.msra.mxu0 %v466
      %518 = vmatprep.subr.mxu0 0.0
      %519 = vmatpush2.msra.mxu0 0.0
      %520 = vmatprep.subr.mxu0 0.0
      %521 = vmatpush2.msra.mxu0 0.0
      %522 = vmatprep.subr.mxu0 0.0
      %523 = vmatpush2.msra.mxu0 0.0
      %524 = vmatprep.subr.mxu0 0.0
      %525 = vmatpush2.msra.mxu0 0.0
      %526 = vmatprep.subr.mxu0 0.0
      %527 = vmatpush2.msra.mxu0 0.0
      %528 = vmatprep.subr.mxu0 0.0
      %529 = vmatpush2.msra.mxu0 0.0
      %530 = vmatprep.subr.mxu0 0.0
      %531 = vmatpush2.msra.mxu0 0.0
      %532 = vmatprep.subr.mxu0 0.0
      %533 = vmatpush2.msra.mxu0 0.0
      %534 = vmatprep.subr.mxu0 0.0
      %535 = vmatpush2.msra.mxu0 0.0
      %536 = vmatprep.subr.mxu0 0.0
      %537 = vmatpush2.msra.mxu0 0.0
      %538 = vmatprep.subr.mxu0 0.0
      %539 = vmatpush2.msra.mxu0 0.0
      %540 = vmatprep.subr.mxu0 0.0
      %541 = vmatpush2.msra.mxu0 0.0
      %542 = vmatprep.subr.mxu0 0.0
      %543 = vmatpush2.msra.mxu0 0.0
      %544 = vmatprep.subr.mxu0 0.0
      %545 = vmatpush2.msra.mxu0 0.0
      %546 = vmatprep.subr.mxu0 0.0
      %547 = vmatpush2.msra.mxu0 0.0
      %548 = vmatprep.subr.mxu0 0.0
      %549 = vmatpush2.msra.mxu0 0.0
      %550 = vmatprep.mubr.f32.mxu0 0.0
      %551 = vmatmul.mubr.f32.gmra.mxu0 %v481
      %v552 = vpop.f32.mrf.mxu0
      %v553 = vadd.f32 0.0, %v552
      %v554 = vpop.f32.mrf.mxu0
      %555 = vmatprep.mubr.f32.mxu0 0.0
      %556 = vmatmul.mubr.f32.gmra.mxu0 %v484
      %v557 = vpop.f32.mrf.mxu0
      %v558 = vadd.f32 0.0, %v557
      %v559 = vpop.f32.mrf.mxu0
      %560 = vdwg.mxu0
      %v561 = vld [vmem:[%s1] sm:$0xf]
      %s562 = scalar_lea.vmem %s1, 4
      %v563 = vld [vmem:[%s562] sm:$0xf]
      %vm564 = vcmask 31744
      %v566 = vsel %vm564, %v466, 0
      %v569 = vsel %vm564, %v467, 0
      %vm571 = vcmask 1043456
      %v573 = vsel %vm571, %v563, 0
      %575 = vmatprep.subr.mxu0 0.0
      %576 = vmatpush1.msra.mxu0 0.0
      %577 = vmatprep.subr.mxu0 0.0
      %578 = vmatpush1.msra.mxu0 0.0
      %579 = vmatprep.subr.mxu0 0.0
      %580 = vmatpush1.msra.mxu0 0.0
      %581 = vmatprep.subr.mxu0 0.0
      %582 = vmatpush1.msra.mxu0 0.0
      %583 = vmatprep.subr.mxu0 0.0
      %584 = vmatpush1.msra.mxu0 0.0
      %585 = vmatprep.subr.mxu0 0.0
      %586 = vmatpush1.msra.mxu0 0.0
      %587 = vmatprep.subr.mxu0 0.0
      %588 = vmatpush1.msra.mxu0 0.0
      %589 = vmatprep.subr.mxu0 0.0
      %590 = vmatpush1.msra.mxu0 0.0
      %591 = vmatprep.subr.mxu0 0.0
      %592 = vmatpush1.msra.mxu0 0.0
      %593 = vmatprep.subr.mxu0 0.0
      %594 = vmatpush1.msra.mxu0 0.0
      %595 = vmatprep.subr.mxu0 0.0
      %596 = vmatpush1.msra.mxu0 0.0
      %597 = vmatprep.subr.mxu0 0.0
      %598 = vmatpush1.msra.mxu0 0.0
      %599 = vmatprep.subr.mxu0 0.0
      %600 = vmatpush1.msra.mxu0 0.0
      %601 = vmatprep.subr.mxu0 0.0
      %602 = vmatpush1.msra.mxu0 0.0
      %603 = vmatprep.subr.mxu0 0.0
      %604 = vmatpush1.msra.mxu0 0.0
      %605 = vmatprep.subr.mxu0 0.0
      %606 = vmatpush1.msra.mxu0 %v573
      %607 = vmatprep.subr.mxu0 0.0
      %608 = vmatpush2.msra.mxu0 0.0
      %609 = vmatprep.subr.mxu0 0.0
      %610 = vmatpush2.msra.mxu0 0.0
      %611 = vmatprep.subr.mxu0 0.0
      %612 = vmatpush2.msra.mxu0 0.0
      %613 = vmatprep.subr.mxu0 0.0
      %614 = vmatpush2.msra.mxu0 0.0
      %615 = vmatprep.subr.mxu0 0.0
      %616 = vmatpush2.msra.mxu0 0.0
      %617 = vmatprep.subr.mxu0 0.0
      %618 = vmatpush2.msra.mxu0 0.0
      %619 = vmatprep.subr.mxu0 0.0
      %620 = vmatpush2.msra.mxu0 0.0
      %621 = vmatprep.subr.mxu0 0.0
      %622 = vmatpush2.msra.mxu0 0.0
      %623 = vmatprep.subr.mxu0 0.0
      %624 = vmatpush2.msra.mxu0 0.0
      %625 = vmatprep.subr.mxu0 0.0
      %626 = vmatpush2.msra.mxu0 0.0
      %627 = vmatprep.subr.mxu0 0.0
      %628 = vmatpush2.msra.mxu0 0.0
      %629 = vmatprep.subr.mxu0 0.0
      %630 = vmatpush2.msra.mxu0 0.0
      %631 = vmatprep.subr.mxu0 0.0
      %632 = vmatpush2.msra.mxu0 0.0
      %633 = vmatprep.subr.mxu0 0.0
      %634 = vmatpush2.msra.mxu0 0.0
      %635 = vmatprep.subr.mxu0 0.0
      %636 = vmatpush2.msra.mxu0 0.0
      %637 = vmatprep.subr.mxu0 0.0
      %638 = vmatpush2.msra.mxu0 0.0
      %639 = vmatprep.mubr.f32.mxu0 0.0
      %640 = vmatmul.mubr.f32.gmra.mxu0 %v566
      %v641 = vpop.f32.mrf.mxu0
      %v642 = vadd.f32 0.0, %v641
      %v643 = vpop.f32.mrf.mxu0
      %644 = vmatprep.mubr.f32.mxu0 0.0
      %645 = vmatmul.mubr.f32.gmra.mxu0 %v569
      %v646 = vpop.f32.mrf.mxu0
      %v647 = vadd.f32 0.0, %v646
      %v648 = vpop.f32.mrf.mxu0
      %649 = vdwg.mxu0
      %v651 = vsel %vm564, %v553, 0
      %v654 = vsel %vm564, %v558, 0
      %v657 = vsel %vm571, %v561, 0
      %659 = vmatprep.subr.mxu0 0.0
      %660 = vmatpush1.msra.mxu0 0.0
      %661 = vmatprep.subr.mxu0 0.0
      %662 = vmatpush1.msra.mxu0 0.0
      %663 = vmatprep.subr.mxu0 0.0
      %664 = vmatpush1.msra.mxu0 0.0
      %665 = vmatprep.subr.mxu0 0.0
      %666 = vmatpush1.msra.mxu0 0.0
      %667 = vmatprep.subr.mxu0 0.0
      %668 = vmatpush1.msra.mxu0 0.0
      %669 = vmatprep.subr.mxu0 0.0
      %670 = vmatpush1.msra.mxu0 0.0
      %671 = vmatprep.subr.mxu0 0.0
      %672 = vmatpush1.msra.mxu0 0.0
      %673 = vmatprep.subr.mxu0 0.0
      %674 = vmatpush1.msra.mxu0 0.0
      %675 = vmatprep.subr.mxu0 0.0
      %676 = vmatpush1.msra.mxu0 0.0
      %677 = vmatprep.subr.mxu0 0.0
      %678 = vmatpush1.msra.mxu0 0.0
      %679 = vmatprep.subr.mxu0 0.0
      %680 = vmatpush1.msra.mxu0 0.0
      %681 = vmatprep.subr.mxu0 0.0
      %682 = vmatpush1.msra.mxu0 0.0
      %683 = vmatprep.subr.mxu0 0.0
      %684 = vmatpush1.msra.mxu0 0.0
      %685 = vmatprep.subr.mxu0 0.0
      %686 = vmatpush1.msra.mxu0 0.0
      %687 = vmatprep.subr.mxu0 0.0
      %688 = vmatpush1.msra.mxu0 0.0
      %689 = vmatprep.subr.mxu0 0.0
      %690 = vmatpush1.msra.mxu0 %v657
      %691 = vmatprep.subr.mxu0 0.0
      %692 = vmatpush2.msra.mxu0 0.0
      %693 = vmatprep.subr.mxu0 0.0
      %694 = vmatpush2.msra.mxu0 0.0
      %695 = vmatprep.subr.mxu0 0.0
      %696 = vmatpush2.msra.mxu0 0.0
      %697 = vmatprep.subr.mxu0 0.0
      %698 = vmatpush2.msra.mxu0 0.0
      %699 = vmatprep.subr.mxu0 0.0
      %700 = vmatpush2.msra.mxu0 0.0
      %701 = vmatprep.subr.mxu0 0.0
      %702 = vmatpush2.msra.mxu0 0.0
      %703 = vmatprep.subr.mxu0 0.0
      %704 = vmatpush2.msra.mxu0 0.0
      %705 = vmatprep.subr.mxu0 0.0
      %706 = vmatpush2.msra.mxu0 0.0
      %707 = vmatprep.subr.mxu0 0.0
      %708 = vmatpush2.msra.mxu0 0.0
      %709 = vmatprep.subr.mxu0 0.0
      %710 = vmatpush2.msra.mxu0 0.0
      %711 = vmatprep.subr.mxu0 0.0
      %712 = vmatpush2.msra.mxu0 0.0
      %713 = vmatprep.subr.mxu0 0.0
      %714 = vmatpush2.msra.mxu0 0.0
      %715 = vmatprep.subr.mxu0 0.0
      %716 = vmatpush2.msra.mxu0 0.0
      %717 = vmatprep.subr.mxu0 0.0
      %718 = vmatpush2.msra.mxu0 0.0
      %719 = vmatprep.subr.mxu0 0.0
      %720 = vmatpush2.msra.mxu0 0.0
      %721 = vmatprep.subr.mxu0 0.0
      %722 = vmatpush2.msra.mxu0 0.0
      %723 = vmatprep.mubr.f32.mxu0 0.0
      %724 = vmatmul.mubr.f32.gmra.mxu0 %v651
      %v725 = vpop.f32.mrf.mxu0
      %v726 = vadd.f32 %v642, %v725
      %v727 = vpop.f32.mrf.mxu0
      %728 = vmatprep.mubr.f32.mxu0 0.0
      %729 = vmatmul.mubr.f32.gmra.mxu0 %v654
      %v730 = vpop.f32.mrf.mxu0
      %v731 = vadd.f32 %v647, %v730
      %v732 = vpop.f32.mrf.mxu0
      %733 = vdwg.mxu0
      %v734 = vadd.s32 %v469, 1
      %v735 = vadd.s32 %v470, 1
      %vm736 = vcmp.eq.s32.totalorder %v472, %v734
      %vm737 = vcmp.eq.s32.totalorder %v472, %v735
      %v738 = vsel %vm736, 1.0, 0.0
      %v739 = vsel %vm737, 1.0, 0.0
      %v741 = vsel %vm479, %v738, 0
      %v744 = vsel %vm479, %v739, 0
      %746 = vmatprep.subr.mxu0 0.0
      %747 = vmatpush1.msra.mxu0 0.0
      %748 = vmatprep.subr.mxu0 0.0
      %749 = vmatpush1.msra.mxu0 0.0
      %750 = vmatprep.subr.mxu0 0.0
      %751 = vmatpush1.msra.mxu0 0.0
      %752 = vmatprep.subr.mxu0 0.0
      %753 = vmatpush1.msra.mxu0 0.0
      %754 = vmatprep.subr.mxu0 0.0
      %755 = vmatpush1.msra.mxu0 0.0
      %756 = vmatprep.subr.mxu0 0.0
      %757 = vmatpush1.msra.mxu0 0.0
      %758 = vmatprep.subr.mxu0 0.0
      %759 = vmatpush1.msra.mxu0 0.0
      %760 = vmatprep.subr.mxu0 0.0
      %761 = vmatpush1.msra.mxu0 0.0
      %762 = vmatprep.subr.mxu0 0.0
      %763 = vmatpush1.msra.mxu0 0.0
      %764 = vmatprep.subr.mxu0 0.0
      %765 = vmatpush1.msra.mxu0 0.0
      %766 = vmatprep.subr.mxu0 0.0
      %767 = vmatpush1.msra.mxu0 0.0
      %768 = vmatprep.subr.mxu0 0.0
      %769 = vmatpush1.msra.mxu0 0.0
      %770 = vmatprep.subr.mxu0 0.0
      %771 = vmatpush1.msra.mxu0 0.0
      %772 = vmatprep.subr.mxu0 0.0
      %773 = vmatpush1.msra.mxu0 0.0
      %774 = vmatprep.subr.mxu0 0.0
      %775 = vmatpush1.msra.mxu0 %v467
      %776 = vmatprep.subr.mxu0 0.0
      %777 = vmatpush1.msra.mxu0 %v466
      %778 = vmatprep.subr.mxu0 0.0
      %779 = vmatpush2.msra.mxu0 0.0
      %780 = vmatprep.subr.mxu0 0.0
      %781 = vmatpush2.msra.mxu0 0.0
      %782 = vmatprep.subr.mxu0 0.0
      %783 = vmatpush2.msra.mxu0 0.0
      %784 = vmatprep.subr.mxu0 0.0
      %785 = vmatpush2.msra.mxu0 0.0
      %786 = vmatprep.subr.mxu0 0.0
      %787 = vmatpush2.msra.mxu0 0.0
      %788 = vmatprep.subr.mxu0 0.0
      %789 = vmatpush2.msra.mxu0 0.0
      %790 = vmatprep.subr.mxu0 0.0
      %791 = vmatpush2.msra.mxu0 0.0
      %792 = vmatprep.subr.mxu0 0.0
      %793 = vmatpush2.msra.mxu0 0.0
      %794 = vmatprep.subr.mxu0 0.0
      %795 = vmatpush2.msra.mxu0 0.0
      %796 = vmatprep.subr.mxu0 0.0
      %797 = vmatpush2.msra.mxu0 0.0
      %798 = vmatprep.subr.mxu0 0.0
      %799 = vmatpush2.msra.mxu0 0.0
      %800 = vmatprep.subr.mxu0 0.0
      %801 = vmatpush2.msra.mxu0 0.0
      %802 = vmatprep.subr.mxu0 0.0
      %803 = vmatpush2.msra.mxu0 0.0
      %804 = vmatprep.subr.mxu0 0.0
      %805 = vmatpush2.msra.mxu0 0.0
      %806 = vmatprep.subr.mxu0 0.0
      %807 = vmatpush2.msra.mxu0 0.0
      %808 = vmatprep.subr.mxu0 0.0
      %809 = vmatpush2.msra.mxu0 0.0
      %810 = vmatprep.mubr.f32.mxu0 0.0
      %811 = vmatmul.mubr.f32.gmra.mxu0 %v741
      %v812 = vpop.f32.mrf.mxu0
      %v813 = vadd.f32 0.0, %v812
      %v814 = vpop.f32.mrf.mxu0
      %815 = vmatprep.mubr.f32.mxu0 0.0
      %816 = vmatmul.mubr.f32.gmra.mxu0 %v744
      %v817 = vpop.f32.mrf.mxu0
      %v818 = vadd.f32 0.0, %v817
      %v819 = vpop.f32.mrf.mxu0
      %820 = vdwg.mxu0
      %s821 = scalar_lea.vmem %s1, 8
      %v822 = vld [vmem:[%s821] sm:$0xf]
      %v824 = vsel %vm564, %v813, 0
      %v827 = vsel %vm564, %v818, 0
      %v830 = vsel %vm571, %v822, 0
      %832 = vmatprep.subr.mxu0 0.0
      %833 = vmatpush1.msra.mxu0 0.0
      %834 = vmatprep.subr.mxu0 0.0
      %835 = vmatpush1.msra.mxu0 0.0
      %836 = vmatprep.subr.mxu0 0.0
      %837 = vmatpush1.msra.mxu0 0.0
      %838 = vmatprep.subr.mxu0 0.0
      %839 = vmatpush1.msra.mxu0 0.0
      %840 = vmatprep.subr.mxu0 0.0
      %841 = vmatpush1.msra.mxu0 0.0
      %842 = vmatprep.subr.mxu0 0.0
      %843 = vmatpush1.msra.mxu0 0.0
      %844 = vmatprep.subr.mxu0 0.0
      %845 = vmatpush1.msra.mxu0 0.0
      %846 = vmatprep.subr.mxu0 0.0
      %847 = vmatpush1.msra.mxu0 0.0
      %848 = vmatprep.subr.mxu0 0.0
      %849 = vmatpush1.msra.mxu0 0.0
      %850 = vmatprep.subr.mxu0 0.0
      %851 = vmatpush1.msra.mxu0 0.0
      %852 = vmatprep.subr.mxu0 0.0
      %853 = vmatpush1.msra.mxu0 0.0
      %854 = vmatprep.subr.mxu0 0.0
      %855 = vmatpush1.msra.mxu0 0.0
      %856 = vmatprep.subr.mxu0 0.0
      %857 = vmatpush1.msra.mxu0 0.0
      %858 = vmatprep.subr.mxu0 0.0
      %859 = vmatpush1.msra.mxu0 0.0
      %860 = vmatprep.subr.mxu0 0.0
      %861 = vmatpush1.msra.mxu0 0.0
      %862 = vmatprep.subr.mxu0 0.0
      %863 = vmatpush1.msra.mxu0 %v830
      %864 = vmatprep.subr.mxu0 0.0
      %865 = vmatpush2.msra.mxu0 0.0
      %866 = vmatprep.subr.mxu0 0.0
      %867 = vmatpush2.msra.mxu0 0.0
      %868 = vmatprep.subr.mxu0 0.0
      %869 = vmatpush2.msra.mxu0 0.0
      %870 = vmatprep.subr.mxu0 0.0
      %871 = vmatpush2.msra.mxu0 0.0
      %872 = vmatprep.subr.mxu0 0.0
      %873 = vmatpush2.msra.mxu0 0.0
      %874 = vmatprep.subr.mxu0 0.0
      %875 = vmatpush2.msra.mxu0 0.0
      %876 = vmatprep.subr.mxu0 0.0
      %877 = vmatpush2.msra.mxu0 0.0
      %878 = vmatprep.subr.mxu0 0.0
      %879 = vmatpush2.msra.mxu0 0.0
      %880 = vmatprep.subr.mxu0 0.0
      %881 = vmatpush2.msra.mxu0 0.0
      %882 = vmatprep.subr.mxu0 0.0
      %883 = vmatpush2.msra.mxu0 0.0
      %884 = vmatprep.subr.mxu0 0.0
      %885 = vmatpush2.msra.mxu0 0.0
      %886 = vmatprep.subr.mxu0 0.0
      %887 = vmatpush2.msra.mxu0 0.0
      %888 = vmatprep.subr.mxu0 0.0
      %889 = vmatpush2.msra.mxu0 0.0
      %890 = vmatprep.subr.mxu0 0.0
      %891 = vmatpush2.msra.mxu0 0.0
      %892 = vmatprep.subr.mxu0 0.0
      %893 = vmatpush2.msra.mxu0 0.0
      %894 = vmatprep.subr.mxu0 0.0
      %895 = vmatpush2.msra.mxu0 0.0
      %896 = vmatprep.mubr.f32.mxu0 0.0
      %897 = vmatmul.mubr.f32.gmra.mxu0 %v824
      %v898 = vpop.f32.mrf.mxu0
      %v899 = vadd.f32 0.0, %v898
      %v900 = vpop.f32.mrf.mxu0
      %901 = vmatprep.mubr.f32.mxu0 0.0
      %902 = vmatmul.mubr.f32.gmra.mxu0 %v827
      %v903 = vpop.f32.mrf.mxu0
      %v904 = vadd.f32 0.0, %v903
      %v905 = vpop.f32.mrf.mxu0
      %906 = vdwg.mxu0
      %v907 = vadd.f32 %v726, %v899
      %v908 = vadd.f32 %v731, %v904
      %v909 = vld [vmem:[%s2] sm:$0x1]
      %v911 = vlaneseq
      %v912 = vshrl.u32 %v911, 7
      %v913 = vsub.s32 0, %v912
      %v914 = vrot.slane %v909, %v913
      %v916 = vadd.f32 %v907, %v914
      %v917 = vadd.f32 %v908, %v914
      %v918 = vmax.f32 %v916, 0.0
      %v919 = vmax.f32 %v917, 0.0
      %v920 = vmul.u32 %v469, 2
      %vm921 = vcmp.eq.s32.totalorder %v472, %v920
      %v922 = vsel %vm921, 1.0, 0.0
      %v924 = vsel %vm479, %v922, 0
      %926 = vmatprep.subr.mxu0 0.0
      %927 = vmatpush1.msra.mxu0 0.0
      %928 = vmatprep.subr.mxu0 0.0
      %929 = vmatpush1.msra.mxu0 0.0
      %930 = vmatprep.subr.mxu0 0.0
      %931 = vmatpush1.msra.mxu0 0.0
      %932 = vmatprep.subr.mxu0 0.0
      %933 = vmatpush1.msra.mxu0 0.0
      %934 = vmatprep.subr.mxu0 0.0
      %935 = vmatpush1.msra.mxu0 0.0
      %936 = vmatprep.subr.mxu0 0.0
      %937 = vmatpush1.msra.mxu0 0.0
      %938 = vmatprep.subr.mxu0 0.0
      %939 = vmatpush1.msra.mxu0 0.0
      %940 = vmatprep.subr.mxu0 0.0
      %941 = vmatpush1.msra.mxu0 0.0
      %942 = vmatprep.subr.mxu0 0.0
      %943 = vmatpush1.msra.mxu0 0.0
      %944 = vmatprep.subr.mxu0 0.0
      %945 = vmatpush1.msra.mxu0 0.0
      %946 = vmatprep.subr.mxu0 0.0
      %947 = vmatpush1.msra.mxu0 0.0
      %948 = vmatprep.subr.mxu0 0.0
      %949 = vmatpush1.msra.mxu0 0.0
      %950 = vmatprep.subr.mxu0 0.0
      %951 = vmatpush1.msra.mxu0 0.0
      %952 = vmatprep.subr.mxu0 0.0
      %953 = vmatpush1.msra.mxu0 0.0
      %954 = vmatprep.subr.mxu0 0.0
      %955 = vmatpush1.msra.mxu0 %v919
      %956 = vmatprep.subr.mxu0 0.0
      %957 = vmatpush1.msra.mxu0 %v918
      %958 = vmatprep.subr.mxu0 0.0
      %959 = vmatpush2.msra.mxu0 0.0
      %960 = vmatprep.subr.mxu0 0.0
      %961 = vmatpush2.msra.mxu0 0.0
      %962 = vmatprep.subr.mxu0 0.0
      %963 = vmatpush2.msra.mxu0 0.0
      %964 = vmatprep.subr.mxu0 0.0
      %965 = vmatpush2.msra.mxu0 0.0
      %966 = vmatprep.subr.mxu0 0.0
      %967 = vmatpush2.msra.mxu0 0.0
      %968 = vmatprep.subr.mxu0 0.0
      %969 = vmatpush2.msra.mxu0 0.0
      %970 = vmatprep.subr.mxu0 0.0
      %971 = vmatpush2.msra.mxu0 0.0
      %972 = vmatprep.subr.mxu0 0.0
      %973 = vmatpush2.msra.mxu0 0.0
      %974 = vmatprep.subr.mxu0 0.0
      %975 = vmatpush2.msra.mxu0 0.0
      %976 = vmatprep.subr.mxu0 0.0
      %977 = vmatpush2.msra.mxu0 0.0
      %978 = vmatprep.subr.mxu0 0.0
      %979 = vmatpush2.msra.mxu0 0.0
      %980 = vmatprep.subr.mxu0 0.0
      %981 = vmatpush2.msra.mxu0 0.0
      %982 = vmatprep.subr.mxu0 0.0
      %983 = vmatpush2.msra.mxu0 0.0
      %984 = vmatprep.subr.mxu0 0.0
      %985 = vmatpush2.msra.mxu0 0.0
      %986 = vmatprep.subr.mxu0 0.0
      %987 = vmatpush2.msra.mxu0 0.0
      %988 = vmatprep.subr.mxu0 0.0
      %989 = vmatpush2.msra.mxu0 0.0
      %990 = vmatprep.mubr.f32.mxu0 0.0
      %991 = vmatmul.mubr.f32.gmra.mxu0 %v924
      %v992 = vpop.f32.mrf.mxu0
      %v993 = vadd.f32 0.0, %v992
      %v994 = vpop.f32.mrf.mxu0
      %995 = vdwg.mxu0
      %v996 = vadd.s32 %v920, 1
      %vm997 = vcmp.eq.s32.totalorder %v472, %v996
      %v998 = vsel %vm997, 1.0, 0.0
      %v1000 = vsel %vm479, %v998, 0
      %1002 = vmatprep.subr.mxu0 0.0
      %1003 = vmatpush1.msra.mxu0 0.0
      %1004 = vmatprep.subr.mxu0 0.0
      %1005 = vmatpush1.msra.mxu0 0.0
      %1006 = vmatprep.subr.mxu0 0.0
      %1007 = vmatpush1.msra.mxu0 0.0
      %1008 = vmatprep.subr.mxu0 0.0
      %1009 = vmatpush1.msra.mxu0 0.0
      %1010 = vmatprep.subr.mxu0 0.0
      %1011 = vmatpush1.msra.mxu0 0.0
      %1012 = vmatprep.subr.mxu0 0.0
      %1013 = vmatpush1.msra.mxu0 0.0
      %1014 = vmatprep.subr.mxu0 0.0
      %1015 = vmatpush1.msra.mxu0 0.0
      %1016 = vmatprep.subr.mxu0 0.0
      %1017 = vmatpush1.msra.mxu0 0.0
      %1018 = vmatprep.subr.mxu0 0.0
      %1019 = vmatpush1.msra.mxu0 0.0
      %1020 = vmatprep.subr.mxu0 0.0
      %1021 = vmatpush1.msra.mxu0 0.0
      %1022 = vmatprep.subr.mxu0 0.0
      %1023 = vmatpush1.msra.mxu0 0.0
      %1024 = vmatprep.subr.mxu0 0.0
      %1025 = vmatpush1.msra.mxu0 0.0
      %1026 = vmatprep.subr.mxu0 0.0
      %1027 = vmatpush1.msra.mxu0 0.0
      %1028 = vmatprep.subr.mxu0 0.0
      %1029 = vmatpush1.msra.mxu0 0.0
      %1030 = vmatprep.subr.mxu0 0.0
      %1031 = vmatpush1.msra.mxu0 %v919
      %1032 = vmatprep.subr.mxu0 0.0
      %1033 = vmatpush1.msra.mxu0 %v918
      %1034 = vmatprep.subr.mxu0 0.0
      %1035 = vmatpush2.msra.mxu0 0.0
      %1036 = vmatprep.subr.mxu0 0.0
      %1037 = vmatpush2.msra.mxu0 0.0
      %1038 = vmatprep.subr.mxu0 0.0
      %1039 = vmatpush2.msra.mxu0 0.0
      %1040 = vmatprep.subr.mxu0 0.0
      %1041 = vmatpush2.msra.mxu0 0.0
      %1042 = vmatprep.subr.mxu0 0.0
      %1043 = vmatpush2.msra.mxu0 0.0
      %1044 = vmatprep.subr.mxu0 0.0
      %1045 = vmatpush2.msra.mxu0 0.0
      %1046 = vmatprep.subr.mxu0 0.0
      %1047 = vmatpush2.msra.mxu0 0.0
      %1048 = vmatprep.subr.mxu0 0.0
      %1049 = vmatpush2.msra.mxu0 0.0
      %1050 = vmatprep.subr.mxu0 0.0
      %1051 = vmatpush2.msra.mxu0 0.0
      %1052 = vmatprep.subr.mxu0 0.0
      %1053 = vmatpush2.msra.mxu0 0.0
      %1054 = vmatprep.subr.mxu0 0.0
      %1055 = vmatpush2.msra.mxu0 0.0
      %1056 = vmatprep.subr.mxu0 0.0
      %1057 = vmatpush2.msra.mxu0 0.0
      %1058 = vmatprep.subr.mxu0 0.0
      %1059 = vmatpush2.msra.mxu0 0.0
      %1060 = vmatprep.subr.mxu0 0.0
      %1061 = vmatpush2.msra.mxu0 0.0
      %1062 = vmatprep.subr.mxu0 0.0
      %1063 = vmatpush2.msra.mxu0 0.0
      %1064 = vmatprep.subr.mxu0 0.0
      %1065 = vmatpush2.msra.mxu0 0.0
      %1066 = vmatprep.mubr.f32.mxu0 0.0
      %1067 = vmatmul.mubr.f32.gmra.mxu0 %v1000
      %v1068 = vpop.f32.mrf.mxu0
      %v1069 = vadd.f32 0.0, %v1068
      %v1070 = vpop.f32.mrf.mxu0
      %1071 = vdwg.mxu0
      %v1072 = vmax.f32 %v993, %v1069
      %vm1073 = vcmask 64512
      %v1074 = vsel %vm1073, %v477, 0
      %1076 = vmatprep.subr.mxu0 0.0
      %1077 = vmatpush1.msra.mxu0 0.0
      %1078 = vmatprep.subr.mxu0 0.0
      %1079 = vmatpush1.msra.mxu0 0.0
      %1080 = vmatprep.subr.mxu0 0.0
      %1081 = vmatpush1.msra.mxu0 0.0
      %1082 = vmatprep.subr.mxu0 0.0
      %1083 = vmatpush1.msra.mxu0 0.0
      %1084 = vmatprep.subr.mxu0 0.0
      %1085 = vmatpush1.msra.mxu0 0.0
      %1086 = vmatprep.subr.mxu0 0.0
      %1087 = vmatpush1.msra.mxu0 0.0
      %1088 = vmatprep.subr.mxu0 0.0
      %1089 = vmatpush1.msra.mxu0 0.0
      %1090 = vmatprep.subr.mxu0 0.0
      %1091 = vmatpush1.msra.mxu0 0.0
      %1092 = vmatprep.subr.mxu0 0.0
      %1093 = vmatpush1.msra.mxu0 0.0
      %1094 = vmatprep.subr.mxu0 0.0
      %1095 = vmatpush1.msra.mxu0 0.0
      %1096 = vmatprep.subr.mxu0 0.0
      %1097 = vmatpush1.msra.mxu0 0.0
      %1098 = vmatprep.subr.mxu0 0.0
      %1099 = vmatpush1.msra.mxu0 0.0
      %1100 = vmatprep.subr.mxu0 0.0
      %1101 = vmatpush1.msra.mxu0 0.0
      %1102 = vmatprep.subr.mxu0 0.0
      %1103 = vmatpush1.msra.mxu0 0.0
      %1104 = vmatprep.subr.mxu0 0.0
      %1105 = vmatpush1.msra.mxu0 0.0
      %1106 = vmatprep.subr.mxu0 0.0
      %1107 = vmatpush1.msra.mxu0 %v1072
      %1108 = vmatprep.subr.mxu0 0.0
      %1109 = vmatpush2.msra.mxu0 0.0
      %1110 = vmatprep.subr.mxu0 0.0
      %1111 = vmatpush2.msra.mxu0 0.0
      %1112 = vmatprep.subr.mxu0 0.0
      %1113 = vmatpush2.msra.mxu0 0.0
      %1114 = vmatprep.subr.mxu0 0.0
      %1115 = vmatpush2.msra.mxu0 0.0
      %1116 = vmatprep.subr.mxu0 0.0
      %1117 = vmatpush2.msra.mxu0 0.0
      %1118 = vmatprep.subr.mxu0 0.0
      %1119 = vmatpush2.msra.mxu0 0.0
      %1120 = vmatprep.subr.mxu0 0.0
      %1121 = vmatpush2.msra.mxu0 0.0
      %1122 = vmatprep.subr.mxu0 0.0
      %1123 = vmatpush2.msra.mxu0 0.0
      %1124 = vmatprep.subr.mxu0 0.0
      %1125 = vmatpush2.msra.mxu0 0.0
      %1126 = vmatprep.subr.mxu0 0.0
      %1127 = vmatpush2.msra.mxu0 0.0
      %1128 = vmatprep.subr.mxu0 0.0
      %1129 = vmatpush2.msra.mxu0 0.0
      %1130 = vmatprep.subr.mxu0 0.0
      %1131 = vmatpush2.msra.mxu0 0.0
      %1132 = vmatprep.subr.mxu0 0.0
      %1133 = vmatpush2.msra.mxu0 0.0
      %1134 = vmatprep.subr.mxu0 0.0
      %1135 = vmatpush2.msra.mxu0 0.0
      %1136 = vmatprep.subr.mxu0 0.0
      %1137 = vmatpush2.msra.mxu0 0.0
      %1138 = vmatprep.subr.mxu0 0.0
      %1139 = vmatpush2.msra.mxu0 0.0
      %1140 = vmatprep.mubr.f32.mxu0 0.0
      %1141 = vmatmul.mubr.f32.gmra.mxu0 %v1074
      %v1142 = vpop.f32.mrf.mxu0
      %v1143 = vadd.f32 0.0, %v1142
      %v1144 = vpop.f32.mrf.mxu0
      %1145 = vdwg.mxu0
      %v1146 = vld [vmem:[%s3] sm:$0xff]
      %v1147 = vld [vmem:[%s3 + $0x8] sm:$0xff]
      %v1148 = vld [vmem:[%s3 + $0x10] sm:$0xff]
      %v1149 = vld [vmem:[%s3 + $0x18] sm:$0xff]
      %v1150 = vld [vmem:[%s3 + $0x20] sm:$0xff]
      %v1151 = vld [vmem:[%s3 + $0x28] sm:$0xff]
      %v1152 = vld [vmem:[%s3 + $0x30] sm:$0xff]
      %v1153 = vld [vmem:[%s3 + $0x38] sm:$0xff]
      %s1154 = scalar_lea.vmem %s3, 64
      %v1155 = vld [vmem:[%s1154] sm:$0xff]
      %v1156 = vld [vmem:[%s1154 + $0x8] sm:$0xff]
      %v1157 = vld [vmem:[%s1154 + $0x10] sm:$0xff]
      %v1158 = vld [vmem:[%s1154 + $0x18] sm:$0xff]
      %v1159 = vld [vmem:[%s1154 + $0x20] sm:$0xff]
      %v1160 = vld [vmem:[%s1154 + $0x28] sm:$0xff]
      %v1161 = vld [vmem:[%s1154 + $0x30] sm:$0xff]
      %v1162 = vld [vmem:[%s1154 + $0x38] sm:$0xff]
      %vm1163 = vcmask 523264
      %v1165 = vsel %vm1163, %v1072, 0
      %1167 = vmatprep.subr.mxu0 0.0
      %1168 = vmatpush1.msra.mxu0 0.0
      %1169 = vmatprep.subr.mxu0 0.0
      %1170 = vmatpush1.msra.mxu0 0.0
      %1171 = vmatprep.subr.mxu0 0.0
      %1172 = vmatpush1.msra.mxu0 0.0
      %1173 = vmatprep.subr.mxu0 0.0
      %1174 = vmatpush1.msra.mxu0 0.0
      %1175 = vmatprep.subr.mxu0 0.0
      %1176 = vmatpush1.msra.mxu0 0.0
      %1177 = vmatprep.subr.mxu0 0.0
      %1178 = vmatpush1.msra.mxu0 0.0
      %1179 = vmatprep.subr.mxu0 0.0
      %1180 = vmatpush1.msra.mxu0 0.0
      %1181 = vmatprep.subr.mxu0 0.0
      %1182 = vmatpush1.msra.mxu0 0.0
      %1183 = vmatprep.subr.mxu0 0.0
      %1184 = vmatpush1.msra.mxu0 %v1162
      %1185 = vmatprep.subr.mxu0 0.0
      %1186 = vmatpush1.msra.mxu0 %v1161
      %1187 = vmatprep.subr.mxu0 0.0
      %1188 = vmatpush1.msra.mxu0 %v1160
      %1189 = vmatprep.subr.mxu0 0.0
      %1190 = vmatpush1.msra.mxu0 %v1159
      %1191 = vmatprep.subr.mxu0 0.0
      %1192 = vmatpush1.msra.mxu0 %v1158
      %1193 = vmatprep.subr.mxu0 0.0
      %1194 = vmatpush1.msra.mxu0 %v1157
      %1195 = vmatprep.subr.mxu0 0.0
      %1196 = vmatpush1.msra.mxu0 %v1156
      %1197 = vmatprep.subr.mxu0 0.0
      %1198 = vmatpush1.msra.mxu0 %v1155
      %1199 = vmatprep.subr.mxu0 0.0
      %1200 = vmatpush2.msra.mxu0 0.0
      %1201 = vmatprep.subr.mxu0 0.0
      %1202 = vmatpush2.msra.mxu0 0.0
      %1203 = vmatprep.subr.mxu0 0.0
      %1204 = vmatpush2.msra.mxu0 0.0
      %1205 = vmatprep.subr.mxu0 0.0
      %1206 = vmatpush2.msra.mxu0 0.0
      %1207 = vmatprep.subr.mxu0 0.0
      %1208 = vmatpush2.msra.mxu0 0.0
      %1209 = vmatprep.subr.mxu0 0.0
      %1210 = vmatpush2.msra.mxu0 0.0
      %1211 = vmatprep.subr.mxu0 0.0
      %1212 = vmatpush2.msra.mxu0 0.0
      %1213 = vmatprep.subr.mxu0 0.0
      %1214 = vmatpush2.msra.mxu0 0.0
      %1215 = vmatprep.subr.mxu0 0.0
      %1216 = vmatpush2.msra.mxu0 0.0
      %1217 = vmatprep.subr.mxu0 0.0
      %1218 = vmatpush2.msra.mxu0 0.0
      %1219 = vmatprep.subr.mxu0 0.0
      %1220 = vmatpush2.msra.mxu0 0.0
      %1221 = vmatprep.subr.mxu0 0.0
      %1222 = vmatpush2.msra.mxu0 0.0
      %1223 = vmatprep.subr.mxu0 0.0
      %1224 = vmatpush2.msra.mxu0 0.0
      %1225 = vmatprep.subr.mxu0 0.0
      %1226 = vmatpush2.msra.mxu0 0.0
      %1227 = vmatprep.subr.mxu0 0.0
      %1228 = vmatpush2.msra.mxu0 0.0
      %1229 = vmatprep.subr.mxu0 0.0
      %1230 = vmatpush2.msra.mxu0 0.0
      %1231 = vmatprep.mubr.f32.mxu0 0.0
      %1232 = vmatmul.mubr.f32.gmra.mxu0 %v1165
      %v1233 = vpop.f32.mrf.mxu0
      %v1234 = vadd.f32 0.0, %v1233
      %v1235 = vpop.f32.mrf.mxu0
      %1236 = vdwg.mxu0
      %v1238 = vsel %vm1163, %v1143, 0
      %1240 = vmatprep.subr.mxu0 0.0
      %1241 = vmatpush1.msra.mxu0 0.0
      %1242 = vmatprep.subr.mxu0 0.0
      %1243 = vmatpush1.msra.mxu0 0.0
      %1244 = vmatprep.subr.mxu0 0.0
      %1245 = vmatpush1.msra.mxu0 0.0
      %1246 = vmatprep.subr.mxu0 0.0
      %1247 = vmatpush1.msra.mxu0 0.0
      %1248 = vmatprep.subr.mxu0 0.0
      %1249 = vmatpush1.msra.mxu0 0.0
      %1250 = vmatprep.subr.mxu0 0.0
      %1251 = vmatpush1.msra.mxu0 0.0
      %1252 = vmatprep.subr.mxu0 0.0
      %1253 = vmatpush1.msra.mxu0 0.0
      %1254 = vmatprep.subr.mxu0 0.0
      %1255 = vmatpush1.msra.mxu0 0.0
      %1256 = vmatprep.subr.mxu0 0.0
      %1257 = vmatpush1.msra.mxu0 %v1153
      %1258 = vmatprep.subr.mxu0 0.0
      %1259 = vmatpush1.msra.mxu0 %v1152
      %1260 = vmatprep.subr.mxu0 0.0
      %1261 = vmatpush1.msra.mxu0 %v1151
      %1262 = vmatprep.subr.mxu0 0.0
      %1263 = vmatpush1.msra.mxu0 %v1150
      %1264 = vmatprep.subr.mxu0 0.0
      %1265 = vmatpush1.msra.mxu0 %v1149
      %1266 = vmatprep.subr.mxu0 0.0
      %1267 = vmatpush1.msra.mxu0 %v1148
      %1268 = vmatprep.subr.mxu0 0.0
      %1269 = vmatpush1.msra.mxu0 %v1147
      %1270 = vmatprep.subr.mxu0 0.0
      %1271 = vmatpush1.msra.mxu0 %v1146
      %1272 = vmatprep.subr.mxu0 0.0
      %1273 = vmatpush2.msra.mxu0 0.0
      %1274 = vmatprep.subr.mxu0 0.0
      %1275 = vmatpush2.msra.mxu0 0.0
      %1276 = vmatprep.subr.mxu0 0.0
      %1277 = vmatpush2.msra.mxu0 0.0
      %1278 = vmatprep.subr.mxu0 0.0
      %1279 = vmatpush2.msra.mxu0 0.0
      %1280 = vmatprep.subr.mxu0 0.0
      %1281 = vmatpush2.msra.mxu0 0.0
      %1282 = vmatprep.subr.mxu0 0.0
      %1283 = vmatpush2.msra.mxu0 0.0
      %1284 = vmatprep.subr.mxu0 0.0
      %1285 = vmatpush2.msra.mxu0 0.0
      %1286 = vmatprep.subr.mxu0 0.0
      %1287 = vmatpush2.msra.mxu0 0.0
      %1288 = vmatprep.subr.mxu0 0.0
      %1289 = vmatpush2.msra.mxu0 0.0
      %1290 = vmatprep.subr.mxu0 0.0
      %1291 = vmatpush2.msra.mxu0 0.0
      %1292 = vmatprep.subr.mxu0 0.0
      %1293 = vmatpush2.msra.mxu0 0.0
      %1294 = vmatprep.subr.mxu0 0.0
      %1295 = vmatpush2.msra.mxu0 0.0
      %1296 = vmatprep.subr.mxu0 0.0
      %1297 = vmatpush2.msra.mxu0 0.0
      %1298 = vmatprep.subr.mxu0 0.0
      %1299 = vmatpush2.msra.mxu0 0.0
      %1300 = vmatprep.subr.mxu0 0.0
      %1301 = vmatpush2.msra.mxu0 0.0
      %1302 = vmatprep.subr.mxu0 0.0
      %1303 = vmatpush2.msra.mxu0 0.0
      %1304 = vmatprep.mubr.f32.mxu0 0.0
      %1305 = vmatmul.mubr.f32.gmra.mxu0 %v1238
      %v1306 = vpop.f32.mrf.mxu0
      %v1307 = vadd.f32 %v1234, %v1306
      %v1308 = vpop.f32.mrf.mxu0
      %1309 = vdwg.mxu0
      %v1310 = vsel %vm1073, %v738, 0
      %1312 = vmatprep.subr.mxu0 0.0
      %1313 = vmatpush1.msra.mxu0 0.0
      %1314 = vmatprep.subr.mxu0 0.0
      %1315 = vmatpush1.msra.mxu0 0.0
      %1316 = vmatprep.subr.mxu0 0.0
      %1317 = vmatpush1.msra.mxu0 0.0
      %1318 = vmatprep.subr.mxu0 0.0
      %1319 = vmatpush1.msra.mxu0 0.0
      %1320 = vmatprep.subr.mxu0 0.0
      %1321 = vmatpush1.msra.mxu0 0.0
      %1322 = vmatprep.subr.mxu0 0.0
      %1323 = vmatpush1.msra.mxu0 0.0
      %1324 = vmatprep.subr.mxu0 0.0
      %1325 = vmatpush1.msra.mxu0 0.0
      %1326 = vmatprep.subr.mxu0 0.0
      %1327 = vmatpush1.msra.mxu0 0.0
      %1328 = vmatprep.subr.mxu0 0.0
      %1329 = vmatpush1.msra.mxu0 0.0
      %1330 = vmatprep.subr.mxu0 0.0
      %1331 = vmatpush1.msra.mxu0 0.0
      %1332 = vmatprep.subr.mxu0 0.0
      %1333 = vmatpush1.msra.mxu0 0.0
      %1334 = vmatprep.subr.mxu0 0.0
      %1335 = vmatpush1.msra.mxu0 0.0
      %1336 = vmatprep.subr.mxu0 0.0
      %1337 = vmatpush1.msra.mxu0 0.0
      %1338 = vmatprep.subr.mxu0 0.0
      %1339 = vmatpush1.msra.mxu0 0.0
      %1340 = vmatprep.subr.mxu0 0.0
      %1341 = vmatpush1.msra.mxu0 0.0
      %1342 = vmatprep.subr.mxu0 0.0
      %1343 = vmatpush1.msra.mxu0 %v1072
      %1344 = vmatprep.subr.mxu0 0.0
      %1345 = vmatpush2.msra.mxu0 0.0
      %1346 = vmatprep.subr.mxu0 0.0
      %1347 = vmatpush2.msra.mxu0 0.0
      %1348 = vmatprep.subr.mxu0 0.0
      %1349 = vmatpush2.msra.mxu0 0.0
      %1350 = vmatprep.subr.mxu0 0.0
      %1351 = vmatpush2.msra.mxu0 0.0
      %1352 = vmatprep.subr.mxu0 0.0
      %1353 = vmatpush2.msra.mxu0 0.0
      %1354 = vmatprep.subr.mxu0 0.0
      %1355 = vmatpush2.msra.mxu0 0.0
      %1356 = vmatprep.subr.mxu0 0.0
      %1357 = vmatpush2.msra.mxu0 0.0
      %1358 = vmatprep.subr.mxu0 0.0
      %1359 = vmatpush2.msra.mxu0 0.0
      %1360 = vmatprep.subr.mxu0 0.0
      %1361 = vmatpush2.msra.mxu0 0.0
      %1362 = vmatprep.subr.mxu0 0.0
      %1363 = vmatpush2.msra.mxu0 0.0
      %1364 = vmatprep.subr.mxu0 0.0
      %1365 = vmatpush2.msra.mxu0 0.0
      %1366 = vmatprep.subr.mxu0 0.0
      %1367 = vmatpush2.msra.mxu0 0.0
      %1368 = vmatprep.subr.mxu0 0.0
      %1369 = vmatpush2.msra.mxu0 0.0
      %1370 = vmatprep.subr.mxu0 0.0
      %1371 = vmatpush2.msra.mxu0 0.0
      %1372 = vmatprep.subr.mxu0 0.0
      %1373 = vmatpush2.msra.mxu0 0.0
      %1374 = vmatprep.subr.mxu0 0.0
      %1375 = vmatpush2.msra.mxu0 0.0
      %1376 = vmatprep.mubr.f32.mxu0 0.0
      %1377 = vmatmul.mubr.f32.gmra.mxu0 %v1310
      %v1378 = vpop.f32.mrf.mxu0
      %v1379 = vadd.f32 0.0, %v1378
      %v1380 = vpop.f32.mrf.mxu0
      %1381 = vdwg.mxu0
      %s1382 = scalar_lea.vmem %s3, 128
      %v1383 = vld [vmem:[%s1382] sm:$0xff]
      %v1384 = vld [vmem:[%s1382 + $0x8] sm:$0xff]
      %v1385 = vld [vmem:[%s1382 + $0x10] sm:$0xff]
      %v1386 = vld [vmem:[%s1382 + $0x18] sm:$0xff]
      %v1387 = vld [vmem:[%s1382 + $0x20] sm:$0xff]
      %v1388 = vld [vmem:[%s1382 + $0x28] sm:$0xff]
      %v1389 = vld [vmem:[%s1382 + $0x30] sm:$0xff]
      %v1390 = vld [vmem:[%s1382 + $0x38] sm:$0xff]
      %v1392 = vsel %vm1163, %v1379, 0
      %1394 = vmatprep.subr.mxu0 0.0
      %1395 = vmatpush1.msra.mxu0 0.0
      %1396 = vmatprep.subr.mxu0 0.0
      %1397 = vmatpush1.msra.mxu0 0.0
      %1398 = vmatprep.subr.mxu0 0.0
      %1399 = vmatpush1.msra.mxu0 0.0
      %1400 = vmatprep.subr.mxu0 0.0
      %1401 = vmatpush1.msra.mxu0 0.0
      %1402 = vmatprep.subr.mxu0 0.0
      %1403 = vmatpush1.msra.mxu0 0.0
      %1404 = vmatprep.subr.mxu0 0.0
      %1405 = vmatpush1.msra.mxu0 0.0
      %1406 = vmatprep.subr.mxu0 0.0
      %1407 = vmatpush1.msra.mxu0 0.0
      %1408 = vmatprep.subr.mxu0 0.0
      %1409 = vmatpush1.msra.mxu0 0.0
      %1410 = vmatprep.subr.mxu0 0.0
      %1411 = vmatpush1.msra.mxu0 %v1390
      %1412 = vmatprep.subr.mxu0 0.0
      %1413 = vmatpush1.msra.mxu0 %v1389
      %1414 = vmatprep.subr.mxu0 0.0
      %1415 = vmatpush1.msra.mxu0 %v1388
      %1416 = vmatprep.subr.mxu0 0.0
      %1417 = vmatpush1.msra.mxu0 %v1387
      %1418 = vmatprep.subr.mxu0 0.0
      %1419 = vmatpush1.msra.mxu0 %v1386
      %1420 = vmatprep.subr.mxu0 0.0
      %1421 = vmatpush1.msra.mxu0 %v1385
      %1422 = vmatprep.subr.mxu0 0.0
      %1423 = vmatpush1.msra.mxu0 %v1384
      %1424 = vmatprep.subr.mxu0 0.0
      %1425 = vmatpush1.msra.mxu0 %v1383
      %1426 = vmatprep.subr.mxu0 0.0
      %1427 = vmatpush2.msra.mxu0 0.0
      %1428 = vmatprep.subr.mxu0 0.0
      %1429 = vmatpush2.msra.mxu0 0.0
      %1430 = vmatprep.subr.mxu0 0.0
      %1431 = vmatpush2.msra.mxu0 0.0
      %1432 = vmatprep.subr.mxu0 0.0
      %1433 = vmatpush2.msra.mxu0 0.0
      %1434 = vmatprep.subr.mxu0 0.0
      %1435 = vmatpush2.msra.mxu0 0.0
      %1436 = vmatprep.subr.mxu0 0.0
      %1437 = vmatpush2.msra.mxu0 0.0
      %1438 = vmatprep.subr.mxu0 0.0
      %1439 = vmatpush2.msra.mxu0 0.0
      %1440 = vmatprep.subr.mxu0 0.0
      %1441 = vmatpush2.msra.mxu0 0.0
      %1442 = vmatprep.subr.mxu0 0.0
      %1443 = vmatpush2.msra.mxu0 0.0
      %1444 = vmatprep.subr.mxu0 0.0
      %1445 = vmatpush2.msra.mxu0 0.0
      %1446 = vmatprep.subr.mxu0 0.0
      %1447 = vmatpush2.msra.mxu0 0.0
      %1448 = vmatprep.subr.mxu0 0.0
      %1449 = vmatpush2.msra.mxu0 0.0
      %1450 = vmatprep.subr.mxu0 0.0
      %1451 = vmatpush2.msra.mxu0 0.0
      %1452 = vmatprep.subr.mxu0 0.0
      %1453 = vmatpush2.msra.mxu0 0.0
      %1454 = vmatprep.subr.mxu0 0.0
      %1455 = vmatpush2.msra.mxu0 0.0
      %1456 = vmatprep.subr.mxu0 0.0
      %1457 = vmatpush2.msra.mxu0 0.0
      %1458 = vmatprep.mubr.f32.mxu0 0.0
      %1459 = vmatmul.mubr.f32.gmra.mxu0 %v1392
      %v1460 = vpop.f32.mrf.mxu0
      %v1461 = vadd.f32 0.0, %v1460
      %v1462 = vpop.f32.mrf.mxu0
      %1463 = vdwg.mxu0
      %v1464 = vadd.f32 %v1307, %v1461
      %v1465 = vld [vmem:[%s4] sm:$0x1]
      %v1467 = vlaneseq
      %v1468 = vshrl.u32 %v1467, 7
      %v1469 = vsub.s32 0, %v1468
      %v1470 = vrot.slane %v1465, %v1469
      %v1472 = vadd.f32 %v1464, %v1470
      %v1473 = vmax.f32 %v1472, 0.0
      %v1474 = vsel %vm1073, %v922, 0
      %1476 = vmatprep.subr.mxu0 0.0
      %1477 = vmatpush1.msra.mxu0 0.0
      %1478 = vmatprep.subr.mxu0 0.0
      %1479 = vmatpush1.msra.mxu0 0.0
      %1480 = vmatprep.subr.mxu0 0.0
      %1481 = vmatpush1.msra.mxu0 0.0
      %1482 = vmatprep.subr.mxu0 0.0
      %1483 = vmatpush1.msra.mxu0 0.0
      %1484 = vmatprep.subr.mxu0 0.0
      %1485 = vmatpush1.msra.mxu0 0.0
      %1486 = vmatprep.subr.mxu0 0.0
      %1487 = vmatpush1.msra.mxu0 0.0
      %1488 = vmatprep.subr.mxu0 0.0
      %1489 = vmatpush1.msra.mxu0 0.0
      %1490 = vmatprep.subr.mxu0 0.0
      %1491 = vmatpush1.msra.mxu0 0.0
      %1492 = vmatprep.subr.mxu0 0.0
      %1493 = vmatpush1.msra.mxu0 0.0
      %1494 = vmatprep.subr.mxu0 0.0
      %1495 = vmatpush1.msra.mxu0 0.0
      %1496 = vmatprep.subr.mxu0 0.0
      %1497 = vmatpush1.msra.mxu0 0.0
      %1498 = vmatprep.subr.mxu0 0.0
      %1499 = vmatpush1.msra.mxu0 0.0
      %1500 = vmatprep.subr.mxu0 0.0
      %1501 = vmatpush1.msra.mxu0 0.0
      %1502 = vmatprep.subr.mxu0 0.0
      %1503 = vmatpush1.msra.mxu0 0.0
      %1504 = vmatprep.subr.mxu0 0.0
      %1505 = vmatpush1.msra.mxu0 0.0
      %1506 = vmatprep.subr.mxu0 0.0
      %1507 = vmatpush1.msra.mxu0 %v1473
      %1508 = vmatprep.subr.mxu0 0.0
      %1509 = vmatpush2.msra.mxu0 0.0
      %1510 = vmatprep.subr.mxu0 0.0
      %1511 = vmatpush2.msra.mxu0 0.0
      %1512 = vmatprep.subr.mxu0 0.0
      %1513 = vmatpush2.msra.mxu0 0.0
      %1514 = vmatprep.subr.mxu0 0.0
      %1515 = vmatpush2.msra.mxu0 0.0
      %1516 = vmatprep.subr.mxu0 0.0
      %1517 = vmatpush2.msra.mxu0 0.0
      %1518 = vmatprep.subr.mxu0 0.0
      %1519 = vmatpush2.msra.mxu0 0.0
      %1520 = vmatprep.subr.mxu0 0.0
      %1521 = vmatpush2.msra.mxu0 0.0
      %1522 = vmatprep.subr.mxu0 0.0
      %1523 = vmatpush2.msra.mxu0 0.0
      %1524 = vmatprep.subr.mxu0 0.0
      %1525 = vmatpush2.msra.mxu0 0.0
      %1526 = vmatprep.subr.mxu0 0.0
      %1527 = vmatpush2.msra.mxu0 0.0
      %1528 = vmatprep.subr.mxu0 0.0
      %1529 = vmatpush2.msra.mxu0 0.0
      %1530 = vmatprep.subr.mxu0 0.0
      %1531 = vmatpush2.msra.mxu0 0.0
      %1532 = vmatprep.subr.mxu0 0.0
      %1533 = vmatpush2.msra.mxu0 0.0
      %1534 = vmatprep.subr.mxu0 0.0
      %1535 = vmatpush2.msra.mxu0 0.0
      %1536 = vmatprep.subr.mxu0 0.0
      %1537 = vmatpush2.msra.mxu0 0.0
      %1538 = vmatprep.subr.mxu0 0.0
      %1539 = vmatpush2.msra.mxu0 0.0
      %1540 = vmatprep.mubr.f32.mxu0 0.0
      %1541 = vmatmul.mubr.f32.gmra.mxu0 %v1474
      %v1542 = vpop.f32.mrf.mxu0
      %v1543 = vadd.f32 0.0, %v1542
      %v1544 = vpop.f32.mrf.mxu0
      %1545 = vdwg.mxu0
      %v1546 = vsel %vm1073, %v998, 0
      %1548 = vmatprep.subr.mxu0 0.0
      %1549 = vmatpush1.msra.mxu0 0.0
      %1550 = vmatprep.subr.mxu0 0.0
      %1551 = vmatpush1.msra.mxu0 0.0
      %1552 = vmatprep.subr.mxu0 0.0
      %1553 = vmatpush1.msra.mxu0 0.0
      %1554 = vmatprep.subr.mxu0 0.0
      %1555 = vmatpush1.msra.mxu0 0.0
      %1556 = vmatprep.subr.mxu0 0.0
      %1557 = vmatpush1.msra.mxu0 0.0
      %1558 = vmatprep.subr.mxu0 0.0
      %1559 = vmatpush1.msra.mxu0 0.0
      %1560 = vmatprep.subr.mxu0 0.0
      %1561 = vmatpush1.msra.mxu0 0.0
      %1562 = vmatprep.subr.mxu0 0.0
      %1563 = vmatpush1.msra.mxu0 0.0
      %1564 = vmatprep.subr.mxu0 0.0
      %1565 = vmatpush1.msra.mxu0 0.0
      %1566 = vmatprep.subr.mxu0 0.0
      %1567 = vmatpush1.msra.mxu0 0.0
      %1568 = vmatprep.subr.mxu0 0.0
      %1569 = vmatpush1.msra.mxu0 0.0
      %1570 = vmatprep.subr.mxu0 0.0
      %1571 = vmatpush1.msra.mxu0 0.0
      %1572 = vmatprep.subr.mxu0 0.0
      %1573 = vmatpush1.msra.mxu0 0.0
      %1574 = vmatprep.subr.mxu0 0.0
      %1575 = vmatpush1.msra.mxu0 0.0
      %1576 = vmatprep.subr.mxu0 0.0
      %1577 = vmatpush1.msra.mxu0 0.0
      %1578 = vmatprep.subr.mxu0 0.0
      %1579 = vmatpush1.msra.mxu0 %v1473
      %1580 = vmatprep.subr.mxu0 0.0
      %1581 = vmatpush2.msra.mxu0 0.0
      %1582 = vmatprep.subr.mxu0 0.0
      %1583 = vmatpush2.msra.mxu0 0.0
      %1584 = vmatprep.subr.mxu0 0.0
      %1585 = vmatpush2.msra.mxu0 0.0
      %1586 = vmatprep.subr.mxu0 0.0
      %1587 = vmatpush2.msra.mxu0 0.0
      %1588 = vmatprep.subr.mxu0 0.0
      %1589 = vmatpush2.msra.mxu0 0.0
      %1590 = vmatprep.subr.mxu0 0.0
      %1591 = vmatpush2.msra.mxu0 0.0
      %1592 = vmatprep.subr.mxu0 0.0
      %1593 = vmatpush2.msra.mxu0 0.0
      %1594 = vmatprep.subr.mxu0 0.0
      %1595 = vmatpush2.msra.mxu0 0.0
      %1596 = vmatprep.subr.mxu0 0.0
      %1597 = vmatpush2.msra.mxu0 0.0
      %1598 = vmatprep.subr.mxu0 0.0
      %1599 = vmatpush2.msra.mxu0 0.0
      %1600 = vmatprep.subr.mxu0 0.0
      %1601 = vmatpush2.msra.mxu0 0.0
      %1602 = vmatprep.subr.mxu0 0.0
      %1603 = vmatpush2.msra.mxu0 0.0
      %1604 = vmatprep.subr.mxu0 0.0
      %1605 = vmatpush2.msra.mxu0 0.0
      %1606 = vmatprep.subr.mxu0 0.0
      %1607 = vmatpush2.msra.mxu0 0.0
      %1608 = vmatprep.subr.mxu0 0.0
      %1609 = vmatpush2.msra.mxu0 0.0
      %1610 = vmatprep.subr.mxu0 0.0
      %1611 = vmatpush2.msra.mxu0 0.0
      %1612 = vmatprep.mubr.f32.mxu0 0.0
      %1613 = vmatmul.mubr.f32.gmra.mxu0 %v1546
      %v1614 = vpop.f32.mrf.mxu0
      %v1615 = vadd.f32 0.0, %v1614
      %v1616 = vpop.f32.mrf.mxu0
      %1617 = vdwg.mxu0
      %v1618 = vmax.f32 %v1543, %v1615
      %v1619 = vsel %vm564, %v477, 0
      %v1622 = vsel %vm571, %v1618, 0
      %1624 = vmatprep.subr.mxu0 0.0
      %1625 = vmatpush1.msra.mxu0 0.0
      %1626 = vmatprep.subr.mxu0 0.0
      %1627 = vmatpush1.msra.mxu0 0.0
      %1628 = vmatprep.subr.mxu0 0.0
      %1629 = vmatpush1.msra.mxu0 0.0
      %1630 = vmatprep.subr.mxu0 0.0
      %1631 = vmatpush1.msra.mxu0 0.0
      %1632 = vmatprep.subr.mxu0 0.0
      %1633 = vmatpush1.msra.mxu0 0.0
      %1634 = vmatprep.subr.mxu0 0.0
      %1635 = vmatpush1.msra.mxu0 0.0
      %1636 = vmatprep.subr.mxu0 0.0
      %1637 = vmatpush1.msra.mxu0 0.0
      %1638 = vmatprep.subr.mxu0 0.0
      %1639 = vmatpush1.msra.mxu0 0.0
      %1640 = vmatprep.subr.mxu0 0.0
      %1641 = vmatpush1.msra.mxu0 0.0
      %1642 = vmatprep.subr.mxu0 0.0
      %1643 = vmatpush1.msra.mxu0 0.0
      %1644 = vmatprep.subr.mxu0 0.0
      %1645 = vmatpush1.msra.mxu0 0.0
      %1646 = vmatprep.subr.mxu0 0.0
      %1647 = vmatpush1.msra.mxu0 0.0
      %1648 = vmatprep.subr.mxu0 0.0
      %1649 = vmatpush1.msra.mxu0 0.0
      %1650 = vmatprep.subr.mxu0 0.0
      %1651 = vmatpush1.msra.mxu0 0.0
      %1652 = vmatprep.subr.mxu0 0.0
      %1653 = vmatpush1.msra.mxu0 0.0
      %1654 = vmatprep.subr.mxu0 0.0
      %1655 = vmatpush1.msra.mxu0 %v1622
      %1656 = vmatprep.subr.mxu0 0.0
      %1657 = vmatpush2.msra.mxu0 0.0
      %1658 = vmatprep.subr.mxu0 0.0
      %1659 = vmatpush2.msra.mxu0 0.0
      %1660 = vmatprep.subr.mxu0 0.0
      %1661 = vmatpush2.msra.mxu0 0.0
      %1662 = vmatprep.subr.mxu0 0.0
      %1663 = vmatpush2.msra.mxu0 0.0
      %1664 = vmatprep.subr.mxu0 0.0
      %1665 = vmatpush2.msra.mxu0 0.0
      %1666 = vmatprep.subr.mxu0 0.0
      %1667 = vmatpush2.msra.mxu0 0.0
      %1668 = vmatprep.subr.mxu0 0.0
      %1669 = vmatpush2.msra.mxu0 0.0
      %1670 = vmatprep.subr.mxu0 0.0
      %1671 = vmatpush2.msra.mxu0 0.0
      %1672 = vmatprep.subr.mxu0 0.0
      %1673 = vmatpush2.msra.mxu0 0.0
      %1674 = vmatprep.subr.mxu0 0.0
      %1675 = vmatpush2.msra.mxu0 0.0
      %1676 = vmatprep.subr.mxu0 0.0
      %1677 = vmatpush2.msra.mxu0 0.0
      %1678 = vmatprep.subr.mxu0 0.0
      %1679 = vmatpush2.msra.mxu0 0.0
      %1680 = vmatprep.subr.mxu0 0.0
      %1681 = vmatpush2.msra.mxu0 0.0
      %1682 = vmatprep.subr.mxu0 0.0
      %1683 = vmatpush2.msra.mxu0 0.0
      %1684 = vmatprep.subr.mxu0 0.0
      %1685 = vmatpush2.msra.mxu0 0.0
      %1686 = vmatprep.subr.mxu0 0.0
      %1687 = vmatpush2.msra.mxu0 0.0
      %1688 = vmatprep.mubr.f32.mxu0 0.0
      %1689 = vmatmul.mubr.f32.gmra.mxu0 %v1619
      %v1690 = vpop.f32.mrf.mxu0
      %v1691 = vadd.f32 0.0, %v1690
      %v1692 = vpop.f32.mrf.mxu0
      %1693 = vdwg.mxu0
      %v1694 = vsel %vm564, %v738, 0
      %1696 = vmatprep.subr.mxu0 0.0
      %1697 = vmatpush1.msra.mxu0 0.0
      %1698 = vmatprep.subr.mxu0 0.0
      %1699 = vmatpush1.msra.mxu0 0.0
      %1700 = vmatprep.subr.mxu0 0.0
      %1701 = vmatpush1.msra.mxu0 0.0
      %1702 = vmatprep.subr.mxu0 0.0
      %1703 = vmatpush1.msra.mxu0 0.0
      %1704 = vmatprep.subr.mxu0 0.0
      %1705 = vmatpush1.msra.mxu0 0.0
      %1706 = vmatprep.subr.mxu0 0.0
      %1707 = vmatpush1.msra.mxu0 0.0
      %1708 = vmatprep.subr.mxu0 0.0
      %1709 = vmatpush1.msra.mxu0 0.0
      %1710 = vmatprep.subr.mxu0 0.0
      %1711 = vmatpush1.msra.mxu0 0.0
      %1712 = vmatprep.subr.mxu0 0.0
      %1713 = vmatpush1.msra.mxu0 0.0
      %1714 = vmatprep.subr.mxu0 0.0
      %1715 = vmatpush1.msra.mxu0 0.0
      %1716 = vmatprep.subr.mxu0 0.0
      %1717 = vmatpush1.msra.mxu0 0.0
      %1718 = vmatprep.subr.mxu0 0.0
      %1719 = vmatpush1.msra.mxu0 0.0
      %1720 = vmatprep.subr.mxu0 0.0
      %1721 = vmatpush1.msra.mxu0 0.0
      %1722 = vmatprep.subr.mxu0 0.0
      %1723 = vmatpush1.msra.mxu0 0.0
      %1724 = vmatprep.subr.mxu0 0.0
      %1725 = vmatpush1.msra.mxu0 0.0
      %1726 = vmatprep.subr.mxu0 0.0
      %1727 = vmatpush1.msra.mxu0 %v1622
      %1728 = vmatprep.subr.mxu0 0.0
      %1729 = vmatpush2.msra.mxu0 0.0
      %1730 = vmatprep.subr.mxu0 0.0
      %1731 = vmatpush2.msra.mxu0 0.0
      %1732 = vmatprep.subr.mxu0 0.0
      %1733 = vmatpush2.msra.mxu0 0.0
      %1734 = vmatprep.subr.mxu0 0.0
      %1735 = vmatpush2.msra.mxu0 0.0
      %1736 = vmatprep.subr.mxu0 0.0
      %1737 = vmatpush2.msra.mxu0 0.0
      %1738 = vmatprep.subr.mxu0 0.0
      %1739 = vmatpush2.msra.mxu0 0.0
      %1740 = vmatprep.subr.mxu0 0.0
      %1741 = vmatpush2.msra.mxu0 0.0
      %1742 = vmatprep.subr.mxu0 0.0
      %1743 = vmatpush2.msra.mxu0 0.0
      %1744 = vmatprep.subr.mxu0 0.0
      %1745 = vmatpush2.msra.mxu0 0.0
      %1746 = vmatprep.subr.mxu0 0.0
      %1747 = vmatpush2.msra.mxu0 0.0
      %1748 = vmatprep.subr.mxu0 0.0
      %1749 = vmatpush2.msra.mxu0 0.0
      %1750 = vmatprep.subr.mxu0 0.0
      %1751 = vmatpush2.msra.mxu0 0.0
      %1752 = vmatprep.subr.mxu0 0.0
      %1753 = vmatpush2.msra.mxu0 0.0
      %1754 = vmatprep.subr.mxu0 0.0
      %1755 = vmatpush2.msra.mxu0 0.0
      %1756 = vmatprep.subr.mxu0 0.0
      %1757 = vmatpush2.msra.mxu0 0.0
      %1758 = vmatprep.subr.mxu0 0.0
      %1759 = vmatpush2.msra.mxu0 0.0
      %1760 = vmatprep.mubr.f32.mxu0 0.0
      %1761 = vmatmul.mubr.f32.gmra.mxu0 %v1694
      %v1762 = vpop.f32.mrf.mxu0
      %v1763 = vadd.f32 0.0, %v1762
      %v1764 = vpop.f32.mrf.mxu0
      %1765 = vdwg.mxu0
      %s1766 = scalar_lea.vmem %s5, 128
      %v1767 = vld [vmem:[%s1766] sm:$0xff]
      %v1768 = vld [vmem:[%s1766 + $0x8] sm:$0xff]
      %v1769 = vld [vmem:[%s1766 + $0x10] sm:$0xff]
      %v1770 = vld [vmem:[%s1766 + $0x18] sm:$0xff]
      %v1771 = vld [vmem:[%s1766 + $0x20] sm:$0xff]
      %v1772 = vld [vmem:[%s1766 + $0x28] sm:$0xff]
      %v1773 = vld [vmem:[%s1766 + $0x30] sm:$0xff]
      %v1774 = vld [vmem:[%s1766 + $0x38] sm:$0xff]
      %v1775 = vld [vmem:[%s1766 + $0x40] sm:$0xff]
      %v1776 = vld [vmem:[%s1766 + $0x48] sm:$0xff]
      %v1777 = vld [vmem:[%s1766 + $0x50] sm:$0xff]
      %v1778 = vld [vmem:[%s1766 + $0x58] sm:$0xff]
      %v1779 = vld [vmem:[%s1766 + $0x60] sm:$0xff]
      %v1780 = vld [vmem:[%s1766 + $0x68] sm:$0xff]
      %v1781 = vld [vmem:[%s1766 + $0x70] sm:$0xff]
      %v1782 = vld [vmem:[%s1766 + $0x78] sm:$0xff]
      %s1783 = scalar_lea.vmem %s5, 384
      %v1784 = vld [vmem:[%s1783] sm:$0xff]
      %v1785 = vld [vmem:[%s1783 + $0x8] sm:$0xff]
      %v1786 = vld [vmem:[%s1783 + $0x10] sm:$0xff]
      %v1787 = vld [vmem:[%s1783 + $0x18] sm:$0xff]
      %v1788 = vld [vmem:[%s1783 + $0x20] sm:$0xff]
      %v1789 = vld [vmem:[%s1783 + $0x28] sm:$0xff]
      %v1790 = vld [vmem:[%s1783 + $0x30] sm:$0xff]
      %v1791 = vld [vmem:[%s1783 + $0x38] sm:$0xff]
      %v1792 = vld [vmem:[%s1783 + $0x40] sm:$0xff]
      %v1793 = vld [vmem:[%s1783 + $0x48] sm:$0xff]
      %v1794 = vld [vmem:[%s1783 + $0x50] sm:$0xff]
      %v1795 = vld [vmem:[%s1783 + $0x58] sm:$0xff]
      %v1796 = vld [vmem:[%s1783 + $0x60] sm:$0xff]
      %v1797 = vld [vmem:[%s1783 + $0x68] sm:$0xff]
      %v1798 = vld [vmem:[%s1783 + $0x70] sm:$0xff]
      %v1799 = vld [vmem:[%s1783 + $0x78] sm:$0xff]
      %1800 = vmatprep.subr.mxu0 0.0
      %1801 = vmatpush1.msra.mxu0 %v1799
      %1802 = vmatprep.subr.mxu0 0.0
      %1803 = vmatpush1.msra.mxu0 %v1798
      %1804 = vmatprep.subr.mxu0 0.0
      %1805 = vmatpush1.msra.mxu0 %v1797
      %1806 = vmatprep.subr.mxu0 0.0
      %1807 = vmatpush1.msra.mxu0 %v1796
      %1808 = vmatprep.subr.mxu0 0.0
      %1809 = vmatpush1.msra.mxu0 %v1795
      %1810 = vmatprep.subr.mxu0 0.0
      %1811 = vmatpush1.msra.mxu0 %v1794
      %1812 = vmatprep.subr.mxu0 0.0
      %1813 = vmatpush1.msra.mxu0 %v1793
      %1814 = vmatprep.subr.mxu0 0.0
      %1815 = vmatpush1.msra.mxu0 %v1792
      %1816 = vmatprep.subr.mxu0 0.0
      %1817 = vmatpush1.msra.mxu0 %v1791
      %1818 = vmatprep.subr.mxu0 0.0
      %1819 = vmatpush1.msra.mxu0 %v1790
      %1820 = vmatprep.subr.mxu0 0.0
      %1821 = vmatpush1.msra.mxu0 %v1789
      %1822 = vmatprep.subr.mxu0 0.0
      %1823 = vmatpush1.msra.mxu0 %v1788
      %1824 = vmatprep.subr.mxu0 0.0
      %1825 = vmatpush1.msra.mxu0 %v1787
      %1826 = vmatprep.subr.mxu0 0.0
      %1827 = vmatpush1.msra.mxu0 %v1786
      %1828 = vmatprep.subr.mxu0 0.0
      %1829 = vmatpush1.msra.mxu0 %v1785
      %1830 = vmatprep.subr.mxu0 0.0
      %1831 = vmatpush1.msra.mxu0 %v1784
      %1832 = vmatprep.subr.mxu0 0.0
      %1833 = vmatpush2.msra.mxu0 0.0
      %1834 = vmatprep.subr.mxu0 0.0
      %1835 = vmatpush2.msra.mxu0 0.0
      %1836 = vmatprep.subr.mxu0 0.0
      %1837 = vmatpush2.msra.mxu0 0.0
      %1838 = vmatprep.subr.mxu0 0.0
      %1839 = vmatpush2.msra.mxu0 0.0
      %1840 = vmatprep.subr.mxu0 0.0
      %1841 = vmatpush2.msra.mxu0 0.0
      %1842 = vmatprep.subr.mxu0 0.0
      %1843 = vmatpush2.msra.mxu0 0.0
      %1844 = vmatprep.subr.mxu0 0.0
      %1845 = vmatpush2.msra.mxu0 0.0
      %1846 = vmatprep.subr.mxu0 0.0
      %1847 = vmatpush2.msra.mxu0 0.0
      %1848 = vmatprep.subr.mxu0 0.0
      %1849 = vmatpush2.msra.mxu0 0.0
      %1850 = vmatprep.subr.mxu0 0.0
      %1851 = vmatpush2.msra.mxu0 0.0
      %1852 = vmatprep.subr.mxu0 0.0
      %1853 = vmatpush2.msra.mxu0 0.0
      %1854 = vmatprep.subr.mxu0 0.0
      %1855 = vmatpush2.msra.mxu0 0.0
      %1856 = vmatprep.subr.mxu0 0.0
      %1857 = vmatpush2.msra.mxu0 0.0
      %1858 = vmatprep.subr.mxu0 0.0
      %1859 = vmatpush2.msra.mxu0 0.0
      %1860 = vmatprep.subr.mxu0 0.0
      %1861 = vmatpush2.msra.mxu0 0.0
      %1862 = vmatprep.subr.mxu0 0.0
      %1863 = vmatpush2.msra.mxu0 0.0
      %1864 = vmatprep.mubr.f32.mxu0 0.0
      %1865 = vmatmul.mubr.f32.gmra.mxu0 %v1691
      %v1866 = vpop.f32.mrf.mxu0
      %v1867 = vadd.f32 0.0, %v1866
      %v1868 = vpop.f32.mrf.mxu0
      %1869 = vdwg.mxu0
      %1870 = vmatprep.subr.mxu0 0.0
      %1871 = vmatpush1.msra.mxu0 %v1782
      %1872 = vmatprep.subr.mxu0 0.0
      %1873 = vmatpush1.msra.mxu0 %v1781
      %1874 = vmatprep.subr.mxu0 0.0
      %1875 = vmatpush1.msra.mxu0 %v1780
      %1876 = vmatprep.subr.mxu0 0.0
      %1877 = vmatpush1.msra.mxu0 %v1779
      %1878 = vmatprep.subr.mxu0 0.0
      %1879 = vmatpush1.msra.mxu0 %v1778
      %1880 = vmatprep.subr.mxu0 0.0
      %1881 = vmatpush1.msra.mxu0 %v1777
      %1882 = vmatprep.subr.mxu0 0.0
      %1883 = vmatpush1.msra.mxu0 %v1776
      %1884 = vmatprep.subr.mxu0 0.0
      %1885 = vmatpush1.msra.mxu0 %v1775
      %1886 = vmatprep.subr.mxu0 0.0
      %1887 = vmatpush1.msra.mxu0 %v1774
      %1888 = vmatprep.subr.mxu0 0.0
      %1889 = vmatpush1.msra.mxu0 %v1773
      %1890 = vmatprep.subr.mxu0 0.0
      %1891 = vmatpush1.msra.mxu0 %v1772
      %1892 = vmatprep.subr.mxu0 0.0
      %1893 = vmatpush1.msra.mxu0 %v1771
      %1894 = vmatprep.subr.mxu0 0.0
      %1895 = vmatpush1.msra.mxu0 %v1770
      %1896 = vmatprep.subr.mxu0 0.0
      %1897 = vmatpush1.msra.mxu0 %v1769
      %1898 = vmatprep.subr.mxu0 0.0
      %1899 = vmatpush1.msra.mxu0 %v1768
      %1900 = vmatprep.subr.mxu0 0.0
      %1901 = vmatpush1.msra.mxu0 %v1767
      %1902 = vmatprep.subr.mxu0 0.0
      %1903 = vmatpush2.msra.mxu0 0.0
      %1904 = vmatprep.subr.mxu0 0.0
      %1905 = vmatpush2.msra.mxu0 0.0
      %1906 = vmatprep.subr.mxu0 0.0
      %1907 = vmatpush2.msra.mxu0 0.0
      %1908 = vmatprep.subr.mxu0 0.0
      %1909 = vmatpush2.msra.mxu0 0.0
      %1910 = vmatprep.subr.mxu0 0.0
      %1911 = vmatpush2.msra.mxu0 0.0
      %1912 = vmatprep.subr.mxu0 0.0
      %1913 = vmatpush2.msra.mxu0 0.0
      %1914 = vmatprep.subr.mxu0 0.0
      %1915 = vmatpush2.msra.mxu0 0.0
      %1916 = vmatprep.subr.mxu0 0.0
      %1917 = vmatpush2.msra.mxu0 0.0
      %1918 = vmatprep.subr.mxu0 0.0
      %1919 = vmatpush2.msra.mxu0 0.0
      %1920 = vmatprep.subr.mxu0 0.0
      %1921 = vmatpush2.msra.mxu0 0.0
      %1922 = vmatprep.subr.mxu0 0.0
      %1923 = vmatpush2.msra.mxu0 0.0
      %1924 = vmatprep.subr.mxu0 0.0
      %1925 = vmatpush2.msra.mxu0 0.0
      %1926 = vmatprep.subr.mxu0 0.0
      %1927 = vmatpush2.msra.mxu0 0.0
      %1928 = vmatprep.subr.mxu0 0.0
      %1929 = vmatpush2.msra.mxu0 0.0
      %1930 = vmatprep.subr.mxu0 0.0
      %1931 = vmatpush2.msra.mxu0 0.0
      %1932 = vmatprep.subr.mxu0 0.0
      %1933 = vmatpush2.msra.mxu0 0.0
      %1934 = vmatprep.mubr.f32.mxu0 0.0
      %1935 = vmatmul.mubr.f32.gmra.mxu0 %v1618
      %v1936 = vpop.f32.mrf.mxu0
      %v1937 = vadd.f32 %v1867, %v1936
      %v1938 = vpop.f32.mrf.mxu0
      %1939 = vdwg.mxu0
      %v1940 = vld [vmem:[%s6] sm:$0x1]
      %v1942 = vlaneseq
      %v1943 = vshrl.u32 %v1942, 7
      %v1944 = vsub.s32 0, %v1943
      %v1945 = vrot.slane %v1940, %v1944
      %v1947 = vadd.f32 %v1937, %v1945
      %v1948 = vmax.f32 %v1947, 0.0
      %s1949 = scalar_lea.vmem %s5, 256
      %v1950 = vld [vmem:[%s1949] sm:$0xff]
      %v1951 = vld [vmem:[%s1949 + $0x8] sm:$0xff]
      %v1952 = vld [vmem:[%s1949 + $0x10] sm:$0xff]
      %v1953 = vld [vmem:[%s1949 + $0x18] sm:$0xff]
      %v1954 = vld [vmem:[%s1949 + $0x20] sm:$0xff]
      %v1955 = vld [vmem:[%s1949 + $0x28] sm:$0xff]
      %v1956 = vld [vmem:[%s1949 + $0x30] sm:$0xff]
      %v1957 = vld [vmem:[%s1949 + $0x38] sm:$0xff]
      %v1958 = vld [vmem:[%s1949 + $0x40] sm:$0xff]
      %v1959 = vld [vmem:[%s1949 + $0x48] sm:$0xff]
      %v1960 = vld [vmem:[%s1949 + $0x50] sm:$0xff]
      %v1961 = vld [vmem:[%s1949 + $0x58] sm:$0xff]
      %v1962 = vld [vmem:[%s1949 + $0x60] sm:$0xff]
      %v1963 = vld [vmem:[%s1949 + $0x68] sm:$0xff]
      %v1964 = vld [vmem:[%s1949 + $0x70] sm:$0xff]
      %v1965 = vld [vmem:[%s1949 + $0x78] sm:$0xff]
      %v1966 = vld [vmem:[%s5] sm:$0xff]
      %v1967 = vld [vmem:[%s5 + $0x8] sm:$0xff]
      %v1968 = vld [vmem:[%s5 + $0x10] sm:$0xff]
      %v1969 = vld [vmem:[%s5 + $0x18] sm:$0xff]
      %v1970 = vld [vmem:[%s5 + $0x20] sm:$0xff]
      %v1971 = vld [vmem:[%s5 + $0x28] sm:$0xff]
      %v1972 = vld [vmem:[%s5 + $0x30] sm:$0xff]
      %v1973 = vld [vmem:[%s5 + $0x38] sm:$0xff]
      %v1974 = vld [vmem:[%s5 + $0x40] sm:$0xff]
      %v1975 = vld [vmem:[%s5 + $0x48] sm:$0xff]
      %v1976 = vld [vmem:[%s5 + $0x50] sm:$0xff]
      %v1977 = vld [vmem:[%s5 + $0x58] sm:$0xff]
      %v1978 = vld [vmem:[%s5 + $0x60] sm:$0xff]
      %v1979 = vld [vmem:[%s5 + $0x68] sm:$0xff]
      %v1980 = vld [vmem:[%s5 + $0x70] sm:$0xff]
      %v1981 = vld [vmem:[%s5 + $0x78] sm:$0xff]
      %1982 = vmatprep.subr.mxu0 0.0
      %1983 = vmatpush1.msra.mxu0 %v1981
      %1984 = vmatprep.subr.mxu0 0.0
      %1985 = vmatpush1.msra.mxu0 %v1980
      %1986 = vmatprep.subr.mxu0 0.0
      %1987 = vmatpush1.msra.mxu0 %v1979
      %1988 = vmatprep.subr.mxu0 0.0
      %1989 = vmatpush1.msra.mxu0 %v1978
      %1990 = vmatprep.subr.mxu0 0.0
      %1991 = vmatpush1.msra.mxu0 %v1977
      %1992 = vmatprep.subr.mxu0 0.0
      %1993 = vmatpush1.msra.mxu0 %v1976
      %1994 = vmatprep.subr.mxu0 0.0
      %1995 = vmatpush1.msra.mxu0 %v1975
      %1996 = vmatprep.subr.mxu0 0.0
      %1997 = vmatpush1.msra.mxu0 %v1974
      %1998 = vmatprep.subr.mxu0 0.0
      %1999 = vmatpush1.msra.mxu0 %v1973
      %2000 = vmatprep.subr.mxu0 0.0
      %2001 = vmatpush1.msra.mxu0 %v1972
      %2002 = vmatprep.subr.mxu0 0.0
      %2003 = vmatpush1.msra.mxu0 %v1971
      %2004 = vmatprep.subr.mxu0 0.0
      %2005 = vmatpush1.msra.mxu0 %v1970
      %2006 = vmatprep.subr.mxu0 0.0
      %2007 = vmatpush1.msra.mxu0 %v1969
      %2008 = vmatprep.subr.mxu0 0.0
      %2009 = vmatpush1.msra.mxu0 %v1968
      %2010 = vmatprep.subr.mxu0 0.0
      %2011 = vmatpush1.msra.mxu0 %v1967
      %2012 = vmatprep.subr.mxu0 0.0
      %2013 = vmatpush1.msra.mxu0 %v1966
      %2014 = vmatprep.subr.mxu0 0.0
      %2015 = vmatpush2.msra.mxu0 0.0
      %2016 = vmatprep.subr.mxu0 0.0
      %2017 = vmatpush2.msra.mxu0 0.0
      %2018 = vmatprep.subr.mxu0 0.0
      %2019 = vmatpush2.msra.mxu0 0.0
      %2020 = vmatprep.subr.mxu0 0.0
      %2021 = vmatpush2.msra.mxu0 0.0
      %2022 = vmatprep.subr.mxu0 0.0
      %2023 = vmatpush2.msra.mxu0 0.0
      %2024 = vmatprep.subr.mxu0 0.0
      %2025 = vmatpush2.msra.mxu0 0.0
      %2026 = vmatprep.subr.mxu0 0.0
      %2027 = vmatpush2.msra.mxu0 0.0
      %2028 = vmatprep.subr.mxu0 0.0
      %2029 = vmatpush2.msra.mxu0 0.0
      %2030 = vmatprep.subr.mxu0 0.0
      %2031 = vmatpush2.msra.mxu0 0.0
      %2032 = vmatprep.subr.mxu0 0.0
      %2033 = vmatpush2.msra.mxu0 0.0
      %2034 = vmatprep.subr.mxu0 0.0
      %2035 = vmatpush2.msra.mxu0 0.0
      %2036 = vmatprep.subr.mxu0 0.0
      %2037 = vmatpush2.msra.mxu0 0.0
      %2038 = vmatprep.subr.mxu0 0.0
      %2039 = vmatpush2.msra.mxu0 0.0
      %2040 = vmatprep.subr.mxu0 0.0
      %2041 = vmatpush2.msra.mxu0 0.0
      %2042 = vmatprep.subr.mxu0 0.0
      %2043 = vmatpush2.msra.mxu0 0.0
      %2044 = vmatprep.subr.mxu0 0.0
      %2045 = vmatpush2.msra.mxu0 0.0
      %2046 = vmatprep.mubr.f32.mxu0 0.0
      %2047 = vmatmul.mubr.f32.gmra.mxu0 %v1763
      %v2048 = vpop.f32.mrf.mxu0
      %v2049 = vadd.f32 0.0, %v2048
      %v2050 = vpop.f32.mrf.mxu0
      %2051 = vdwg.mxu0
      %2052 = vmatprep.subr.mxu0 0.0
      %2053 = vmatpush1.msra.mxu0 %v1965
      %2054 = vmatprep.subr.mxu0 0.0
      %2055 = vmatpush1.msra.mxu0 %v1964
      %2056 = vmatprep.subr.mxu0 0.0
      %2057 = vmatpush1.msra.mxu0 %v1963
      %2058 = vmatprep.subr.mxu0 0.0
      %2059 = vmatpush1.msra.mxu0 %v1962
      %2060 = vmatprep.subr.mxu0 0.0
      %2061 = vmatpush1.msra.mxu0 %v1961
      %2062 = vmatprep.subr.mxu0 0.0
      %2063 = vmatpush1.msra.mxu0 %v1960
      %2064 = vmatprep.subr.mxu0 0.0
      %2065 = vmatpush1.msra.mxu0 %v1959
      %2066 = vmatprep.subr.mxu0 0.0
      %2067 = vmatpush1.msra.mxu0 %v1958
      %2068 = vmatprep.subr.mxu0 0.0
      %2069 = vmatpush1.msra.mxu0 %v1957
      %2070 = vmatprep.subr.mxu0 0.0
      %2071 = vmatpush1.msra.mxu0 %v1956
      %2072 = vmatprep.subr.mxu0 0.0
      %2073 = vmatpush1.msra.mxu0 %v1955
      %2074 = vmatprep.subr.mxu0 0.0
      %2075 = vmatpush1.msra.mxu0 %v1954
      %2076 = vmatprep.subr.mxu0 0.0
      %2077 = vmatpush1.msra.mxu0 %v1953
      %2078 = vmatprep.subr.mxu0 0.0
      %2079 = vmatpush1.msra.mxu0 %v1952
      %2080 = vmatprep.subr.mxu0 0.0
      %2081 = vmatpush1.msra.mxu0 %v1951
      %2082 = vmatprep.subr.mxu0 0.0
      %2083 = vmatpush1.msra.mxu0 %v1950
      %2084 = vmatprep.subr.mxu0 0.0
      %2085 = vmatpush2.msra.mxu0 0.0
      %2086 = vmatprep.subr.mxu0 0.0
      %2087 = vmatpush2.msra.mxu0 0.0
      %2088 = vmatprep.subr.mxu0 0.0
      %2089 = vmatpush2.msra.mxu0 0.0
      %2090 = vmatprep.subr.mxu0 0.0
      %2091 = vmatpush2.msra.mxu0 0.0
      %2092 = vmatprep.subr.mxu0 0.0
      %2093 = vmatpush2.msra.mxu0 0.0
      %2094 = vmatprep.subr.mxu0 0.0
      %2095 = vmatpush2.msra.mxu0 0.0
      %2096 = vmatprep.subr.mxu0 0.0
      %2097 = vmatpush2.msra.mxu0 0.0
      %2098 = vmatprep.subr.mxu0 0.0
      %2099 = vmatpush2.msra.mxu0 0.0
      %2100 = vmatprep.subr.mxu0 0.0
      %2101 = vmatpush2.msra.mxu0 0.0
      %2102 = vmatprep.subr.mxu0 0.0
      %2103 = vmatpush2.msra.mxu0 0.0
      %2104 = vmatprep.subr.mxu0 0.0
      %2105 = vmatpush2.msra.mxu0 0.0
      %2106 = vmatprep.subr.mxu0 0.0
      %2107 = vmatpush2.msra.mxu0 0.0
      %2108 = vmatprep.subr.mxu0 0.0
      %2109 = vmatpush2.msra.mxu0 0.0
      %2110 = vmatprep.subr.mxu0 0.0
      %2111 = vmatpush2.msra.mxu0 0.0
      %2112 = vmatprep.subr.mxu0 0.0
      %2113 = vmatpush2.msra.mxu0 0.0
      %2114 = vmatprep.subr.mxu0 0.0
      %2115 = vmatpush2.msra.mxu0 0.0
      %2116 = vmatprep.mubr.f32.mxu0 0.0
      %2117 = vmatmul.mubr.f32.gmra.mxu0 %v1618
      %v2118 = vpop.f32.mrf.mxu0
      %v2119 = vadd.f32 %v2049, %v2118
      %v2120 = vpop.f32.mrf.mxu0
      %2121 = vdwg.mxu0
      %v2122 = vadd.f32 %v2119, %v1945
      %v2123 = vmax.f32 %v2122, 0.0
      %v2124 = vmul.u32 %v472, 2
      %vm2125 = vcmp.eq.s32.totalorder %v469, %v2124
      %v2126 = vsel %vm2125, 1.0, 0.0
      %v2127 = vadd.s32 %v2124, 1
      %vm2128 = vcmp.eq.s32.totalorder %v469, %v2127
      %v2129 = vsel %vm2128, 1.0, 0.0
      %v2131 = vsel %vm564, %v2129, 0
      %v2134 = vsel %vm571, %v2123, 0
      %2136 = vmatprep.subr.mxu0 0.0
      %2137 = vmatpush1.msra.mxu0 0.0
      %2138 = vmatprep.subr.mxu0 0.0
      %2139 = vmatpush1.msra.mxu0 0.0
      %2140 = vmatprep.subr.mxu0 0.0
      %2141 = vmatpush1.msra.mxu0 0.0
      %2142 = vmatprep.subr.mxu0 0.0
      %2143 = vmatpush1.msra.mxu0 0.0
      %2144 = vmatprep.subr.mxu0 0.0
      %2145 = vmatpush1.msra.mxu0 0.0
      %2146 = vmatprep.subr.mxu0 0.0
      %2147 = vmatpush1.msra.mxu0 0.0
      %2148 = vmatprep.subr.mxu0 0.0
      %2149 = vmatpush1.msra.mxu0 0.0
      %2150 = vmatprep.subr.mxu0 0.0
      %2151 = vmatpush1.msra.mxu0 0.0
      %2152 = vmatprep.subr.mxu0 0.0
      %2153 = vmatpush1.msra.mxu0 0.0
      %2154 = vmatprep.subr.mxu0 0.0
      %2155 = vmatpush1.msra.mxu0 0.0
      %2156 = vmatprep.subr.mxu0 0.0
      %2157 = vmatpush1.msra.mxu0 0.0
      %2158 = vmatprep.subr.mxu0 0.0
      %2159 = vmatpush1.msra.mxu0 0.0
      %2160 = vmatprep.subr.mxu0 0.0
      %2161 = vmatpush1.msra.mxu0 0.0
      %2162 = vmatprep.subr.mxu0 0.0
      %2163 = vmatpush1.msra.mxu0 0.0
      %2164 = vmatprep.subr.mxu0 0.0
      %2165 = vmatpush1.msra.mxu0 0.0
      %2166 = vmatprep.subr.mxu0 0.0
      %2167 = vmatpush1.msra.mxu0 %v2134
      %2168 = vmatprep.subr.mxu0 0.0
      %2169 = vmatpush2.msra.mxu0 0.0
      %2170 = vmatprep.subr.mxu0 0.0
      %2171 = vmatpush2.msra.mxu0 0.0
      %2172 = vmatprep.subr.mxu0 0.0
      %2173 = vmatpush2.msra.mxu0 0.0
      %2174 = vmatprep.subr.mxu0 0.0
      %2175 = vmatpush2.msra.mxu0 0.0
      %2176 = vmatprep.subr.mxu0 0.0
      %2177 = vmatpush2.msra.mxu0 0.0
      %2178 = vmatprep.subr.mxu0 0.0
      %2179 = vmatpush2.msra.mxu0 0.0
      %2180 = vmatprep.subr.mxu0 0.0
      %2181 = vmatpush2.msra.mxu0 0.0
      %2182 = vmatprep.subr.mxu0 0.0
      %2183 = vmatpush2.msra.mxu0 0.0
      %2184 = vmatprep.subr.mxu0 0.0
      %2185 = vmatpush2.msra.mxu0 0.0
      %2186 = vmatprep.subr.mxu0 0.0
      %2187 = vmatpush2.msra.mxu0 0.0
      %2188 = vmatprep.subr.mxu0 0.0
      %2189 = vmatpush2.msra.mxu0 0.0
      %2190 = vmatprep.subr.mxu0 0.0
      %2191 = vmatpush2.msra.mxu0 0.0
      %2192 = vmatprep.subr.mxu0 0.0
      %2193 = vmatpush2.msra.mxu0 0.0
      %2194 = vmatprep.subr.mxu0 0.0
      %2195 = vmatpush2.msra.mxu0 0.0
      %2196 = vmatprep.subr.mxu0 0.0
      %2197 = vmatpush2.msra.mxu0 0.0
      %2198 = vmatprep.subr.mxu0 0.0
      %2199 = vmatpush2.msra.mxu0 0.0
      %2200 = vmatprep.mubr.f32.mxu0 0.0
      %2201 = vmatmul.mubr.f32.gmra.mxu0 %v2131
      %v2202 = vpop.f32.mrf.mxu0
      %v2203 = vadd.f32 0.0, %v2202
      %v2204 = vpop.f32.mrf.mxu0
      %2205 = vdwg.mxu0
      %v2207 = vsel %vm564, %v2126, 0
      %v2210 = vsel %vm571, %v1948, 0
      %2212 = vmatprep.subr.mxu0 0.0
      %2213 = vmatpush1.msra.mxu0 0.0
      %2214 = vmatprep.subr.mxu0 0.0
      %2215 = vmatpush1.msra.mxu0 0.0
      %2216 = vmatprep.subr.mxu0 0.0
      %2217 = vmatpush1.msra.mxu0 0.0
      %2218 = vmatprep.subr.mxu0 0.0
      %2219 = vmatpush1.msra.mxu0 0.0
      %2220 = vmatprep.subr.mxu0 0.0
      %2221 = vmatpush1.msra.mxu0 0.0
      %2222 = vmatprep.subr.mxu0 0.0
      %2223 = vmatpush1.msra.mxu0 0.0
      %2224 = vmatprep.subr.mxu0 0.0
      %2225 = vmatpush1.msra.mxu0 0.0
      %2226 = vmatprep.subr.mxu0 0.0
      %2227 = vmatpush1.msra.mxu0 0.0
      %2228 = vmatprep.subr.mxu0 0.0
      %2229 = vmatpush1.msra.mxu0 0.0
      %2230 = vmatprep.subr.mxu0 0.0
      %2231 = vmatpush1.msra.mxu0 0.0
      %2232 = vmatprep.subr.mxu0 0.0
      %2233 = vmatpush1.msra.mxu0 0.0
      %2234 = vmatprep.subr.mxu0 0.0
      %2235 = vmatpush1.msra.mxu0 0.0
      %2236 = vmatprep.subr.mxu0 0.0
      %2237 = vmatpush1.msra.mxu0 0.0
      %2238 = vmatprep.subr.mxu0 0.0
      %2239 = vmatpush1.msra.mxu0 0.0
      %2240 = vmatprep.subr.mxu0 0.0
      %2241 = vmatpush1.msra.mxu0 0.0
      %2242 = vmatprep.subr.mxu0 0.0
      %2243 = vmatpush1.msra.mxu0 %v2210
      %2244 = vmatprep.subr.mxu0 0.0
      %2245 = vmatpush2.msra.mxu0 0.0
      %2246 = vmatprep.subr.mxu0 0.0
      %2247 = vmatpush2.msra.mxu0 0.0
      %2248 = vmatprep.subr.mxu0 0.0
      %2249 = vmatpush2.msra.mxu0 0.0
      %2250 = vmatprep.subr.mxu0 0.0
      %2251 = vmatpush2.msra.mxu0 0.0
      %2252 = vmatprep.subr.mxu0 0.0
      %2253 = vmatpush2.msra.mxu0 0.0
      %2254 = vmatprep.subr.mxu0 0.0
      %2255 = vmatpush2.msra.mxu0 0.0
      %2256 = vmatprep.subr.mxu0 0.0
      %2257 = vmatpush2.msra.mxu0 0.0
      %2258 = vmatprep.subr.mxu0 0.0
      %2259 = vmatpush2.msra.mxu0 0.0
      %2260 = vmatprep.subr.mxu0 0.0
      %2261 = vmatpush2.msra.mxu0 0.0
      %2262 = vmatprep.subr.mxu0 0.0
      %2263 = vmatpush2.msra.mxu0 0.0
      %2264 = vmatprep.subr.mxu0 0.0
      %2265 = vmatpush2.msra.mxu0 0.0
      %2266 = vmatprep.subr.mxu0 0.0
      %2267 = vmatpush2.msra.mxu0 0.0
      %2268 = vmatprep.subr.mxu0 0.0
      %2269 = vmatpush2.msra.mxu0 0.0
      %2270 = vmatprep.subr.mxu0 0.0
      %2271 = vmatpush2.msra.mxu0 0.0
      %2272 = vmatprep.subr.mxu0 0.0
      %2273 = vmatpush2.msra.mxu0 0.0
      %2274 = vmatprep.subr.mxu0 0.0
      %2275 = vmatpush2.msra.mxu0 0.0
      %2276 = vmatprep.mubr.f32.mxu0 0.0
      %2277 = vmatmul.mubr.f32.gmra.mxu0 %v2207
      %v2278 = vpop.f32.mrf.mxu0
      %v2279 = vadd.f32 %v2203, %v2278
      %v2280 = vpop.f32.mrf.mxu0
      %2281 = vdwg.mxu0
      %2282 = vmatprep.subr.mxu0 0.0
      %2283 = vmatpush1.msra.mxu0 0.0
      %2284 = vmatprep.subr.mxu0 0.0
      %2285 = vmatpush1.msra.mxu0 0.0
      %2286 = vmatprep.subr.mxu0 0.0
      %2287 = vmatpush1.msra.mxu0 0.0
      %2288 = vmatprep.subr.mxu0 0.0
      %2289 = vmatpush1.msra.mxu0 0.0
      %2290 = vmatprep.subr.mxu0 0.0
      %2291 = vmatpush1.msra.mxu0 0.0
      %2292 = vmatprep.subr.mxu0 0.0
      %2293 = vmatpush1.msra.mxu0 0.0
      %2294 = vmatprep.subr.mxu0 0.0
      %2295 = vmatpush1.msra.mxu0 0.0
      %2296 = vmatprep.subr.mxu0 0.0
      %2297 = vmatpush1.msra.mxu0 0.0
      %2298 = vmatprep.subr.mxu0 0.0
      %2299 = vmatpush1.msra.mxu0 0.0
      %2300 = vmatprep.subr.mxu0 0.0
      %2301 = vmatpush1.msra.mxu0 0.0
      %2302 = vmatprep.subr.mxu0 0.0
      %2303 = vmatpush1.msra.mxu0 0.0
      %2304 = vmatprep.subr.mxu0 0.0
      %2305 = vmatpush1.msra.mxu0 0.0
      %2306 = vmatprep.subr.mxu0 0.0
      %2307 = vmatpush1.msra.mxu0 0.0
      %2308 = vmatprep.subr.mxu0 0.0
      %2309 = vmatpush1.msra.mxu0 0.0
      %2310 = vmatprep.subr.mxu0 0.0
      %2311 = vmatpush1.msra.mxu0 0.0
      %2312 = vmatprep.subr.mxu0 0.0
      %2313 = vmatpush1.msra.mxu0 %v2279
      %2314 = vmatprep.subr.mxu0 0.0
      %2315 = vmatpush2.msra.mxu0 0.0
      %2316 = vmatprep.subr.mxu0 0.0
      %2317 = vmatpush2.msra.mxu0 0.0
      %2318 = vmatprep.subr.mxu0 0.0
      %2319 = vmatpush2.msra.mxu0 0.0
      %2320 = vmatprep.subr.mxu0 0.0
      %2321 = vmatpush2.msra.mxu0 0.0
      %2322 = vmatprep.subr.mxu0 0.0
      %2323 = vmatpush2.msra.mxu0 0.0
      %2324 = vmatprep.subr.mxu0 0.0
      %2325 = vmatpush2.msra.mxu0 0.0
      %2326 = vmatprep.subr.mxu0 0.0
      %2327 = vmatpush2.msra.mxu0 0.0
      %2328 = vmatprep.subr.mxu0 0.0
      %2329 = vmatpush2.msra.mxu0 0.0
      %2330 = vmatprep.subr.mxu0 0.0
      %2331 = vmatpush2.msra.mxu0 0.0
      %2332 = vmatprep.subr.mxu0 0.0
      %2333 = vmatpush2.msra.mxu0 0.0
      %2334 = vmatprep.subr.mxu0 0.0
      %2335 = vmatpush2.msra.mxu0 0.0
      %2336 = vmatprep.subr.mxu0 0.0
      %2337 = vmatpush2.msra.mxu0 0.0
      %2338 = vmatprep.subr.mxu0 0.0
      %2339 = vmatpush2.msra.mxu0 0.0
      %2340 = vmatprep.subr.mxu0 0.0
      %2341 = vmatpush2.msra.mxu0 0.0
      %2342 = vmatprep.subr.mxu0 0.0
      %2343 = vmatpush2.msra.mxu0 0.0
      %2344 = vmatprep.subr.mxu0 0.0
      %2345 = vmatpush2.msra.mxu0 0.0
      %2346 = vmatprep.mubr.f32.mxu0 0.0
      %2347 = vmatmul.mubr.f32.gmra.mxu0 %v1074
      %v2348 = vpop.f32.mrf.mxu0
      %v2349 = vadd.f32 0.0, %v2348
      %v2350 = vpop.f32.mrf.mxu0
      %2351 = vdwg.mxu0
      %2352 = vmatprep.subr.mxu0 0.0
      %2353 = vmatpush1.msra.mxu0 0.0
      %2354 = vmatprep.subr.mxu0 0.0
      %2355 = vmatpush1.msra.mxu0 0.0
      %2356 = vmatprep.subr.mxu0 0.0
      %2357 = vmatpush1.msra.mxu0 0.0
      %2358 = vmatprep.subr.mxu0 0.0
      %2359 = vmatpush1.msra.mxu0 0.0
      %2360 = vmatprep.subr.mxu0 0.0
      %2361 = vmatpush1.msra.mxu0 0.0
      %2362 = vmatprep.subr.mxu0 0.0
      %2363 = vmatpush1.msra.mxu0 0.0
      %2364 = vmatprep.subr.mxu0 0.0
      %2365 = vmatpush1.msra.mxu0 0.0
      %2366 = vmatprep.subr.mxu0 0.0
      %2367 = vmatpush1.msra.mxu0 0.0
      %2368 = vmatprep.subr.mxu0 0.0
      %2369 = vmatpush1.msra.mxu0 0.0
      %2370 = vmatprep.subr.mxu0 0.0
      %2371 = vmatpush1.msra.mxu0 0.0
      %2372 = vmatprep.subr.mxu0 0.0
      %2373 = vmatpush1.msra.mxu0 0.0
      %2374 = vmatprep.subr.mxu0 0.0
      %2375 = vmatpush1.msra.mxu0 0.0
      %2376 = vmatprep.subr.mxu0 0.0
      %2377 = vmatpush1.msra.mxu0 0.0
      %2378 = vmatprep.subr.mxu0 0.0
      %2379 = vmatpush1.msra.mxu0 0.0
      %2380 = vmatprep.subr.mxu0 0.0
      %2381 = vmatpush1.msra.mxu0 0.0
      %2382 = vmatprep.subr.mxu0 0.0
      %2383 = vmatpush1.msra.mxu0 %v2279
      %2384 = vmatprep.subr.mxu0 0.0
      %2385 = vmatpush2.msra.mxu0 0.0
      %2386 = vmatprep.subr.mxu0 0.0
      %2387 = vmatpush2.msra.mxu0 0.0
      %2388 = vmatprep.subr.mxu0 0.0
      %2389 = vmatpush2.msra.mxu0 0.0
      %2390 = vmatprep.subr.mxu0 0.0
      %2391 = vmatpush2.msra.mxu0 0.0
      %2392 = vmatprep.subr.mxu0 0.0
      %2393 = vmatpush2.msra.mxu0 0.0
      %2394 = vmatprep.subr.mxu0 0.0
      %2395 = vmatpush2.msra.mxu0 0.0
      %2396 = vmatprep.subr.mxu0 0.0
      %2397 = vmatpush2.msra.mxu0 0.0
      %2398 = vmatprep.subr.mxu0 0.0
      %2399 = vmatpush2.msra.mxu0 0.0
      %2400 = vmatprep.subr.mxu0 0.0
      %2401 = vmatpush2.msra.mxu0 0.0
      %2402 = vmatprep.subr.mxu0 0.0
      %2403 = vmatpush2.msra.mxu0 0.0
      %2404 = vmatprep.subr.mxu0 0.0
      %2405 = vmatpush2.msra.mxu0 0.0
      %2406 = vmatprep.subr.mxu0 0.0
      %2407 = vmatpush2.msra.mxu0 0.0
      %2408 = vmatprep.subr.mxu0 0.0
      %2409 = vmatpush2.msra.mxu0 0.0
      %2410 = vmatprep.subr.mxu0 0.0
      %2411 = vmatpush2.msra.mxu0 0.0
      %2412 = vmatprep.subr.mxu0 0.0
      %2413 = vmatpush2.msra.mxu0 0.0
      %2414 = vmatprep.subr.mxu0 0.0
      %2415 = vmatpush2.msra.mxu0 0.0
      %2416 = vmatprep.mubr.f32.mxu0 0.0
      %2417 = vmatmul.mubr.f32.gmra.mxu0 %v1310
      %v2418 = vpop.f32.mrf.mxu0
      %v2419 = vadd.f32 0.0, %v2418
      %v2420 = vpop.f32.mrf.mxu0
      %2421 = vdwg.mxu0
      %s2422 = scalar_lea.vmem %s7, 64
      %v2423 = vld [vmem:[%s2422] sm:$0xff]
      %v2424 = vld [vmem:[%s2422 + $0x8] sm:$0xff]
      %v2425 = vld [vmem:[%s2422 + $0x10] sm:$0xff]
      %v2426 = vld [vmem:[%s2422 + $0x18] sm:$0xff]
      %v2427 = vld [vmem:[%s2422 + $0x20] sm:$0xff]
      %v2428 = vld [vmem:[%s2422 + $0x28] sm:$0xff]
      %v2429 = vld [vmem:[%s2422 + $0x30] sm:$0xff]
      %v2430 = vld [vmem:[%s2422 + $0x38] sm:$0xff]
      %s2431 = scalar_lea.vmem %s7, 192
      %v2432 = vld [vmem:[%s2431] sm:$0xff]
      %v2433 = vld [vmem:[%s2431 + $0x8] sm:$0xff]
      %v2434 = vld [vmem:[%s2431 + $0x10] sm:$0xff]
      %v2435 = vld [vmem:[%s2431 + $0x18] sm:$0xff]
      %v2436 = vld [vmem:[%s2431 + $0x20] sm:$0xff]
      %v2437 = vld [vmem:[%s2431 + $0x28] sm:$0xff]
      %v2438 = vld [vmem:[%s2431 + $0x30] sm:$0xff]
      %v2439 = vld [vmem:[%s2431 + $0x38] sm:$0xff]
      %v2441 = vsel %vm1163, %v2349, 0
      %2443 = vmatprep.subr.mxu0 0.0
      %2444 = vmatpush1.msra.mxu0 0.0
      %2445 = vmatprep.subr.mxu0 0.0
      %2446 = vmatpush1.msra.mxu0 0.0
      %2447 = vmatprep.subr.mxu0 0.0
      %2448 = vmatpush1.msra.mxu0 0.0
      %2449 = vmatprep.subr.mxu0 0.0
      %2450 = vmatpush1.msra.mxu0 0.0
      %2451 = vmatprep.subr.mxu0 0.0
      %2452 = vmatpush1.msra.mxu0 0.0
      %2453 = vmatprep.subr.mxu0 0.0
      %2454 = vmatpush1.msra.mxu0 0.0
      %2455 = vmatprep.subr.mxu0 0.0
      %2456 = vmatpush1.msra.mxu0 0.0
      %2457 = vmatprep.subr.mxu0 0.0
      %2458 = vmatpush1.msra.mxu0 0.0
      %2459 = vmatprep.subr.mxu0 0.0
      %2460 = vmatpush1.msra.mxu0 %v2439
      %2461 = vmatprep.subr.mxu0 0.0
      %2462 = vmatpush1.msra.mxu0 %v2438
      %2463 = vmatprep.subr.mxu0 0.0
      %2464 = vmatpush1.msra.mxu0 %v2437
      %2465 = vmatprep.subr.mxu0 0.0
      %2466 = vmatpush1.msra.mxu0 %v2436
      %2467 = vmatprep.subr.mxu0 0.0
      %2468 = vmatpush1.msra.mxu0 %v2435
      %2469 = vmatprep.subr.mxu0 0.0
      %2470 = vmatpush1.msra.mxu0 %v2434
      %2471 = vmatprep.subr.mxu0 0.0
      %2472 = vmatpush1.msra.mxu0 %v2433
      %2473 = vmatprep.subr.mxu0 0.0
      %2474 = vmatpush1.msra.mxu0 %v2432
      %2475 = vmatprep.subr.mxu0 0.0
      %2476 = vmatpush2.msra.mxu0 0.0
      %2477 = vmatprep.subr.mxu0 0.0
      %2478 = vmatpush2.msra.mxu0 0.0
      %2479 = vmatprep.subr.mxu0 0.0
      %2480 = vmatpush2.msra.mxu0 0.0
      %2481 = vmatprep.subr.mxu0 0.0
      %2482 = vmatpush2.msra.mxu0 0.0
      %2483 = vmatprep.subr.mxu0 0.0
      %2484 = vmatpush2.msra.mxu0 0.0
      %2485 = vmatprep.subr.mxu0 0.0
      %2486 = vmatpush2.msra.mxu0 0.0
      %2487 = vmatprep.subr.mxu0 0.0
      %2488 = vmatpush2.msra.mxu0 0.0
      %2489 = vmatprep.subr.mxu0 0.0
      %2490 = vmatpush2.msra.mxu0 0.0
      %2491 = vmatprep.subr.mxu0 0.0
      %2492 = vmatpush2.msra.mxu0 0.0
      %2493 = vmatprep.subr.mxu0 0.0
      %2494 = vmatpush2.msra.mxu0 0.0
      %2495 = vmatprep.subr.mxu0 0.0
      %2496 = vmatpush2.msra.mxu0 0.0
      %2497 = vmatprep.subr.mxu0 0.0
      %2498 = vmatpush2.msra.mxu0 0.0
      %2499 = vmatprep.subr.mxu0 0.0
      %2500 = vmatpush2.msra.mxu0 0.0
      %2501 = vmatprep.subr.mxu0 0.0
      %2502 = vmatpush2.msra.mxu0 0.0
      %2503 = vmatprep.subr.mxu0 0.0
      %2504 = vmatpush2.msra.mxu0 0.0
      %2505 = vmatprep.subr.mxu0 0.0
      %2506 = vmatpush2.msra.mxu0 0.0
      %2507 = vmatprep.mubr.f32.mxu0 0.0
      %2508 = vmatmul.mubr.f32.gmra.mxu0 %v2441
      %v2509 = vpop.f32.mrf.mxu0
      %v2510 = vadd.f32 0.0, %v2509
      %v2511 = vpop.f32.mrf.mxu0
      %2512 = vdwg.mxu0
      %v2514 = vsel %vm1163, %v2279, 0
      %2516 = vmatprep.subr.mxu0 0.0
      %2517 = vmatpush1.msra.mxu0 0.0
      %2518 = vmatprep.subr.mxu0 0.0
      %2519 = vmatpush1.msra.mxu0 0.0
      %2520 = vmatprep.subr.mxu0 0.0
      %2521 = vmatpush1.msra.mxu0 0.0
      %2522 = vmatprep.subr.mxu0 0.0
      %2523 = vmatpush1.msra.mxu0 0.0
      %2524 = vmatprep.subr.mxu0 0.0
      %2525 = vmatpush1.msra.mxu0 0.0
      %2526 = vmatprep.subr.mxu0 0.0
      %2527 = vmatpush1.msra.mxu0 0.0
      %2528 = vmatprep.subr.mxu0 0.0
      %2529 = vmatpush1.msra.mxu0 0.0
      %2530 = vmatprep.subr.mxu0 0.0
      %2531 = vmatpush1.msra.mxu0 0.0
      %2532 = vmatprep.subr.mxu0 0.0
      %2533 = vmatpush1.msra.mxu0 %v2430
      %2534 = vmatprep.subr.mxu0 0.0
      %2535 = vmatpush1.msra.mxu0 %v2429
      %2536 = vmatprep.subr.mxu0 0.0
      %2537 = vmatpush1.msra.mxu0 %v2428
      %2538 = vmatprep.subr.mxu0 0.0
      %2539 = vmatpush1.msra.mxu0 %v2427
      %2540 = vmatprep.subr.mxu0 0.0
      %2541 = vmatpush1.msra.mxu0 %v2426
      %2542 = vmatprep.subr.mxu0 0.0
      %2543 = vmatpush1.msra.mxu0 %v2425
      %2544 = vmatprep.subr.mxu0 0.0
      %2545 = vmatpush1.msra.mxu0 %v2424
      %2546 = vmatprep.subr.mxu0 0.0
      %2547 = vmatpush1.msra.mxu0 %v2423
      %2548 = vmatprep.subr.mxu0 0.0
      %2549 = vmatpush2.msra.mxu0 0.0
      %2550 = vmatprep.subr.mxu0 0.0
      %2551 = vmatpush2.msra.mxu0 0.0
      %2552 = vmatprep.subr.mxu0 0.0
      %2553 = vmatpush2.msra.mxu0 0.0
      %2554 = vmatprep.subr.mxu0 0.0
      %2555 = vmatpush2.msra.mxu0 0.0
      %2556 = vmatprep.subr.mxu0 0.0
      %2557 = vmatpush2.msra.mxu0 0.0
      %2558 = vmatprep.subr.mxu0 0.0
      %2559 = vmatpush2.msra.mxu0 0.0
      %2560 = vmatprep.subr.mxu0 0.0
      %2561 = vmatpush2.msra.mxu0 0.0
      %2562 = vmatprep.subr.mxu0 0.0
      %2563 = vmatpush2.msra.mxu0 0.0
      %2564 = vmatprep.subr.mxu0 0.0
      %2565 = vmatpush2.msra.mxu0 0.0
      %2566 = vmatprep.subr.mxu0 0.0
      %2567 = vmatpush2.msra.mxu0 0.0
      %2568 = vmatprep.subr.mxu0 0.0
      %2569 = vmatpush2.msra.mxu0 0.0
      %2570 = vmatprep.subr.mxu0 0.0
      %2571 = vmatpush2.msra.mxu0 0.0
      %2572 = vmatprep.subr.mxu0 0.0
      %2573 = vmatpush2.msra.mxu0 0.0
      %2574 = vmatprep.subr.mxu0 0.0
      %2575 = vmatpush2.msra.mxu0 0.0
      %2576 = vmatprep.subr.mxu0 0.0
      %2577 = vmatpush2.msra.mxu0 0.0
      %2578 = vmatprep.subr.mxu0 0.0
      %2579 = vmatpush2.msra.mxu0 0.0
      %2580 = vmatprep.mubr.f32.mxu0 0.0
      %2581 = vmatmul.mubr.f32.gmra.mxu0 %v2514
      %v2582 = vpop.f32.mrf.mxu0
      %v2583 = vadd.f32 %v2510, %v2582
      %v2584 = vpop.f32.mrf.mxu0
      %2585 = vdwg.mxu0
      %v2586 = vld [vmem:[%s8] sm:$0x1]
      %v2588 = vlaneseq
      %v2589 = vshrl.u32 %v2588, 7
      %v2590 = vsub.s32 0, %v2589
      %v2591 = vrot.slane %v2586, %v2590
      %v2593 = vadd.f32 %v2583, %v2591
      %v2594 = vmax.f32 %v2593, 0.0
      %s2595 = scalar_lea.vmem %s7, 128
      %v2596 = vld [vmem:[%s2595] sm:$0xff]
      %v2597 = vld [vmem:[%s2595 + $0x8] sm:$0xff]
      %v2598 = vld [vmem:[%s2595 + $0x10] sm:$0xff]
      %v2599 = vld [vmem:[%s2595 + $0x18] sm:$0xff]
      %v2600 = vld [vmem:[%s2595 + $0x20] sm:$0xff]
      %v2601 = vld [vmem:[%s2595 + $0x28] sm:$0xff]
      %v2602 = vld [vmem:[%s2595 + $0x30] sm:$0xff]
      %v2603 = vld [vmem:[%s2595 + $0x38] sm:$0xff]
      %v2604 = vld [vmem:[%s7] sm:$0xff]
      %v2605 = vld [vmem:[%s7 + $0x8] sm:$0xff]
      %v2606 = vld [vmem:[%s7 + $0x10] sm:$0xff]
      %v2607 = vld [vmem:[%s7 + $0x18] sm:$0xff]
      %v2608 = vld [vmem:[%s7 + $0x20] sm:$0xff]
      %v2609 = vld [vmem:[%s7 + $0x28] sm:$0xff]
      %v2610 = vld [vmem:[%s7 + $0x30] sm:$0xff]
      %v2611 = vld [vmem:[%s7 + $0x38] sm:$0xff]
      %v2613 = vsel %vm1163, %v2419, 0
      %2615 = vmatprep.subr.mxu0 0.0
      %2616 = vmatpush1.msra.mxu0 0.0
      %2617 = vmatprep.subr.mxu0 0.0
      %2618 = vmatpush1.msra.mxu0 0.0
      %2619 = vmatprep.subr.mxu0 0.0
      %2620 = vmatpush1.msra.mxu0 0.0
      %2621 = vmatprep.subr.mxu0 0.0
      %2622 = vmatpush1.msra.mxu0 0.0
      %2623 = vmatprep.subr.mxu0 0.0
      %2624 = vmatpush1.msra.mxu0 0.0
      %2625 = vmatprep.subr.mxu0 0.0
      %2626 = vmatpush1.msra.mxu0 0.0
      %2627 = vmatprep.subr.mxu0 0.0
      %2628 = vmatpush1.msra.mxu0 0.0
      %2629 = vmatprep.subr.mxu0 0.0
      %2630 = vmatpush1.msra.mxu0 0.0
      %2631 = vmatprep.subr.mxu0 0.0
      %2632 = vmatpush1.msra.mxu0 %v2611
      %2633 = vmatprep.subr.mxu0 0.0
      %2634 = vmatpush1.msra.mxu0 %v2610
      %2635 = vmatprep.subr.mxu0 0.0
      %2636 = vmatpush1.msra.mxu0 %v2609
      %2637 = vmatprep.subr.mxu0 0.0
      %2638 = vmatpush1.msra.mxu0 %v2608
      %2639 = vmatprep.subr.mxu0 0.0
      %2640 = vmatpush1.msra.mxu0 %v2607
      %2641 = vmatprep.subr.mxu0 0.0
      %2642 = vmatpush1.msra.mxu0 %v2606
      %2643 = vmatprep.subr.mxu0 0.0
      %2644 = vmatpush1.msra.mxu0 %v2605
      %2645 = vmatprep.subr.mxu0 0.0
      %2646 = vmatpush1.msra.mxu0 %v2604
      %2647 = vmatprep.subr.mxu0 0.0
      %2648 = vmatpush2.msra.mxu0 0.0
      %2649 = vmatprep.subr.mxu0 0.0
      %2650 = vmatpush2.msra.mxu0 0.0
      %2651 = vmatprep.subr.mxu0 0.0
      %2652 = vmatpush2.msra.mxu0 0.0
      %2653 = vmatprep.subr.mxu0 0.0
      %2654 = vmatpush2.msra.mxu0 0.0
      %2655 = vmatprep.subr.mxu0 0.0
      %2656 = vmatpush2.msra.mxu0 0.0
      %2657 = vmatprep.subr.mxu0 0.0
      %2658 = vmatpush2.msra.mxu0 0.0
      %2659 = vmatprep.subr.mxu0 0.0
      %2660 = vmatpush2.msra.mxu0 0.0
      %2661 = vmatprep.subr.mxu0 0.0
      %2662 = vmatpush2.msra.mxu0 0.0
      %2663 = vmatprep.subr.mxu0 0.0
      %2664 = vmatpush2.msra.mxu0 0.0
      %2665 = vmatprep.subr.mxu0 0.0
      %2666 = vmatpush2.msra.mxu0 0.0
      %2667 = vmatprep.subr.mxu0 0.0
      %2668 = vmatpush2.msra.mxu0 0.0
      %2669 = vmatprep.subr.mxu0 0.0
      %2670 = vmatpush2.msra.mxu0 0.0
      %2671 = vmatprep.subr.mxu0 0.0
      %2672 = vmatpush2.msra.mxu0 0.0
      %2673 = vmatprep.subr.mxu0 0.0
      %2674 = vmatpush2.msra.mxu0 0.0
      %2675 = vmatprep.subr.mxu0 0.0
      %2676 = vmatpush2.msra.mxu0 0.0
      %2677 = vmatprep.subr.mxu0 0.0
      %2678 = vmatpush2.msra.mxu0 0.0
      %2679 = vmatprep.mubr.f32.mxu0 0.0
      %2680 = vmatmul.mubr.f32.gmra.mxu0 %v2613
      %v2681 = vpop.f32.mrf.mxu0
      %v2682 = vadd.f32 0.0, %v2681
      %v2683 = vpop.f32.mrf.mxu0
      %2684 = vdwg.mxu0
      %2685 = vmatprep.subr.mxu0 0.0
      %2686 = vmatpush1.msra.mxu0 0.0
      %2687 = vmatprep.subr.mxu0 0.0
      %2688 = vmatpush1.msra.mxu0 0.0
      %2689 = vmatprep.subr.mxu0 0.0
      %2690 = vmatpush1.msra.mxu0 0.0
      %2691 = vmatprep.subr.mxu0 0.0
      %2692 = vmatpush1.msra.mxu0 0.0
      %2693 = vmatprep.subr.mxu0 0.0
      %2694 = vmatpush1.msra.mxu0 0.0
      %2695 = vmatprep.subr.mxu0 0.0
      %2696 = vmatpush1.msra.mxu0 0.0
      %2697 = vmatprep.subr.mxu0 0.0
      %2698 = vmatpush1.msra.mxu0 0.0
      %2699 = vmatprep.subr.mxu0 0.0
      %2700 = vmatpush1.msra.mxu0 0.0
      %2701 = vmatprep.subr.mxu0 0.0
      %2702 = vmatpush1.msra.mxu0 %v2603
      %2703 = vmatprep.subr.mxu0 0.0
      %2704 = vmatpush1.msra.mxu0 %v2602
      %2705 = vmatprep.subr.mxu0 0.0
      %2706 = vmatpush1.msra.mxu0 %v2601
      %2707 = vmatprep.subr.mxu0 0.0
      %2708 = vmatpush1.msra.mxu0 %v2600
      %2709 = vmatprep.subr.mxu0 0.0
      %2710 = vmatpush1.msra.mxu0 %v2599
      %2711 = vmatprep.subr.mxu0 0.0
      %2712 = vmatpush1.msra.mxu0 %v2598
      %2713 = vmatprep.subr.mxu0 0.0
      %2714 = vmatpush1.msra.mxu0 %v2597
      %2715 = vmatprep.subr.mxu0 0.0
      %2716 = vmatpush1.msra.mxu0 %v2596
      %2717 = vmatprep.subr.mxu0 0.0
      %2718 = vmatpush2.msra.mxu0 0.0
      %2719 = vmatprep.subr.mxu0 0.0
      %2720 = vmatpush2.msra.mxu0 0.0
      %2721 = vmatprep.subr.mxu0 0.0
      %2722 = vmatpush2.msra.mxu0 0.0
      %2723 = vmatprep.subr.mxu0 0.0
      %2724 = vmatpush2.msra.mxu0 0.0
      %2725 = vmatprep.subr.mxu0 0.0
      %2726 = vmatpush2.msra.mxu0 0.0
      %2727 = vmatprep.subr.mxu0 0.0
      %2728 = vmatpush2.msra.mxu0 0.0
      %2729 = vmatprep.subr.mxu0 0.0
      %2730 = vmatpush2.msra.mxu0 0.0
      %2731 = vmatprep.subr.mxu0 0.0
      %2732 = vmatpush2.msra.mxu0 0.0
      %2733 = vmatprep.subr.mxu0 0.0
      %2734 = vmatpush2.msra.mxu0 0.0
      %2735 = vmatprep.subr.mxu0 0.0
      %2736 = vmatpush2.msra.mxu0 0.0
      %2737 = vmatprep.subr.mxu0 0.0
      %2738 = vmatpush2.msra.mxu0 0.0
      %2739 = vmatprep.subr.mxu0 0.0
      %2740 = vmatpush2.msra.mxu0 0.0
      %2741 = vmatprep.subr.mxu0 0.0
      %2742 = vmatpush2.msra.mxu0 0.0
      %2743 = vmatprep.subr.mxu0 0.0
      %2744 = vmatpush2.msra.mxu0 0.0
      %2745 = vmatprep.subr.mxu0 0.0
      %2746 = vmatpush2.msra.mxu0 0.0
      %2747 = vmatprep.subr.mxu0 0.0
      %2748 = vmatpush2.msra.mxu0 0.0
      %2749 = vmatprep.mubr.f32.mxu0 0.0
      %2750 = vmatmul.mubr.f32.gmra.mxu0 %v2514
      %v2751 = vpop.f32.mrf.mxu0
      %v2752 = vadd.f32 %v2682, %v2751
      %v2753 = vpop.f32.mrf.mxu0
      %2754 = vdwg.mxu0
      %v2755 = vadd.f32 %v2752, %v2591
      %v2756 = vmax.f32 %v2755, 0.0
      %vm2757 = vcmp.eq.s32.totalorder %v470, %v2124
      %v2758 = vsel %vm2757, 1.0, 0.0
      %vm2759 = vcmp.eq.s32.totalorder %v470, %v2127
      %v2760 = vsel %vm2759, 1.0, 0.0
      %v2761 = vsel %vm1073, %v2129, 0
      %v2764 = vsel %vm1073, %v2760, 0
      %2766 = vmatprep.subr.mxu0 0.0
      %2767 = vmatpush1.msra.mxu0 0.0
      %2768 = vmatprep.subr.mxu0 0.0
      %2769 = vmatpush1.msra.mxu0 0.0
      %2770 = vmatprep.subr.mxu0 0.0
      %2771 = vmatpush1.msra.mxu0 0.0
      %2772 = vmatprep.subr.mxu0 0.0
      %2773 = vmatpush1.msra.mxu0 0.0
      %2774 = vmatprep.subr.mxu0 0.0
      %2775 = vmatpush1.msra.mxu0 0.0
      %2776 = vmatprep.subr.mxu0 0.0
      %2777 = vmatpush1.msra.mxu0 0.0
      %2778 = vmatprep.subr.mxu0 0.0
      %2779 = vmatpush1.msra.mxu0 0.0
      %2780 = vmatprep.subr.mxu0 0.0
      %2781 = vmatpush1.msra.mxu0 0.0
      %2782 = vmatprep.subr.mxu0 0.0
      %2783 = vmatpush1.msra.mxu0 0.0
      %2784 = vmatprep.subr.mxu0 0.0
      %2785 = vmatpush1.msra.mxu0 0.0
      %2786 = vmatprep.subr.mxu0 0.0
      %2787 = vmatpush1.msra.mxu0 0.0
      %2788 = vmatprep.subr.mxu0 0.0
      %2789 = vmatpush1.msra.mxu0 0.0
      %2790 = vmatprep.subr.mxu0 0.0
      %2791 = vmatpush1.msra.mxu0 0.0
      %2792 = vmatprep.subr.mxu0 0.0
      %2793 = vmatpush1.msra.mxu0 0.0
      %2794 = vmatprep.subr.mxu0 0.0
      %2795 = vmatpush1.msra.mxu0 0.0
      %2796 = vmatprep.subr.mxu0 0.0
      %2797 = vmatpush1.msra.mxu0 %v2756
      %2798 = vmatprep.subr.mxu0 0.0
      %2799 = vmatpush2.msra.mxu0 0.0
      %2800 = vmatprep.subr.mxu0 0.0
      %2801 = vmatpush2.msra.mxu0 0.0
      %2802 = vmatprep.subr.mxu0 0.0
      %2803 = vmatpush2.msra.mxu0 0.0
      %2804 = vmatprep.subr.mxu0 0.0
      %2805 = vmatpush2.msra.mxu0 0.0
      %2806 = vmatprep.subr.mxu0 0.0
      %2807 = vmatpush2.msra.mxu0 0.0
      %2808 = vmatprep.subr.mxu0 0.0
      %2809 = vmatpush2.msra.mxu0 0.0
      %2810 = vmatprep.subr.mxu0 0.0
      %2811 = vmatpush2.msra.mxu0 0.0
      %2812 = vmatprep.subr.mxu0 0.0
      %2813 = vmatpush2.msra.mxu0 0.0
      %2814 = vmatprep.subr.mxu0 0.0
      %2815 = vmatpush2.msra.mxu0 0.0
      %2816 = vmatprep.subr.mxu0 0.0
      %2817 = vmatpush2.msra.mxu0 0.0
      %2818 = vmatprep.subr.mxu0 0.0
      %2819 = vmatpush2.msra.mxu0 0.0
      %2820 = vmatprep.subr.mxu0 0.0
      %2821 = vmatpush2.msra.mxu0 0.0
      %2822 = vmatprep.subr.mxu0 0.0
      %2823 = vmatpush2.msra.mxu0 0.0
      %2824 = vmatprep.subr.mxu0 0.0
      %2825 = vmatpush2.msra.mxu0 0.0
      %2826 = vmatprep.subr.mxu0 0.0
      %2827 = vmatpush2.msra.mxu0 0.0
      %2828 = vmatprep.subr.mxu0 0.0
      %2829 = vmatpush2.msra.mxu0 0.0
      %2830 = vmatprep.mubr.f32.mxu0 0.0
      %2831 = vmatmul.mubr.f32.gmra.mxu0 %v2761
      %v2832 = vpop.f32.mrf.mxu0
      %v2833 = vadd.f32 0.0, %v2832
      %v2834 = vpop.f32.mrf.mxu0
      %2835 = vmatprep.mubr.f32.mxu0 0.0
      %2836 = vmatmul.mubr.f32.gmra.mxu0 %v2764
      %v2837 = vpop.f32.mrf.mxu0
      %v2838 = vadd.f32 0.0, %v2837
      %v2839 = vpop.f32.mrf.mxu0
      %2840 = vdwg.mxu0
      %v2841 = vsel %vm1073, %v2126, 0
      %v2844 = vsel %vm1073, %v2758, 0
      %2846 = vmatprep.subr.mxu0 0.0
      %2847 = vmatpush1.msra.mxu0 0.0
      %2848 = vmatprep.subr.mxu0 0.0
      %2849 = vmatpush1.msra.mxu0 0.0
      %2850 = vmatprep.subr.mxu0 0.0
      %2851 = vmatpush1.msra.mxu0 0.0
      %2852 = vmatprep.subr.mxu0 0.0
      %2853 = vmatpush1.msra.mxu0 0.0
      %2854 = vmatprep.subr.mxu0 0.0
      %2855 = vmatpush1.msra.mxu0 0.0
      %2856 = vmatprep.subr.mxu0 0.0
      %2857 = vmatpush1.msra.mxu0 0.0
      %2858 = vmatprep.subr.mxu0 0.0
      %2859 = vmatpush1.msra.mxu0 0.0
      %2860 = vmatprep.subr.mxu0 0.0
      %2861 = vmatpush1.msra.mxu0 0.0
      %2862 = vmatprep.subr.mxu0 0.0
      %2863 = vmatpush1.msra.mxu0 0.0
      %2864 = vmatprep.subr.mxu0 0.0
      %2865 = vmatpush1.msra.mxu0 0.0
      %2866 = vmatprep.subr.mxu0 0.0
      %2867 = vmatpush1.msra.mxu0 0.0
      %2868 = vmatprep.subr.mxu0 0.0
      %2869 = vmatpush1.msra.mxu0 0.0
      %2870 = vmatprep.subr.mxu0 0.0
      %2871 = vmatpush1.msra.mxu0 0.0
      %2872 = vmatprep.subr.mxu0 0.0
      %2873 = vmatpush1.msra.mxu0 0.0
      %2874 = vmatprep.subr.mxu0 0.0
      %2875 = vmatpush1.msra.mxu0 0.0
      %2876 = vmatprep.subr.mxu0 0.0
      %2877 = vmatpush1.msra.mxu0 %v2594
      %2878 = vmatprep.subr.mxu0 0.0
      %2879 = vmatpush2.msra.mxu0 0.0
      %2880 = vmatprep.subr.mxu0 0.0
      %2881 = vmatpush2.msra.mxu0 0.0
      %2882 = vmatprep.subr.mxu0 0.0
      %2883 = vmatpush2.msra.mxu0 0.0
      %2884 = vmatprep.subr.mxu0 0.0
      %2885 = vmatpush2.msra.mxu0 0.0
      %2886 = vmatprep.subr.mxu0 0.0
      %2887 = vmatpush2.msra.mxu0 0.0
      %2888 = vmatprep.subr.mxu0 0.0
      %2889 = vmatpush2.msra.mxu0 0.0
      %2890 = vmatprep.subr.mxu0 0.0
      %2891 = vmatpush2.msra.mxu0 0.0
      %2892 = vmatprep.subr.mxu0 0.0
      %2893 = vmatpush2.msra.mxu0 0.0
      %2894 = vmatprep.subr.mxu0 0.0
      %2895 = vmatpush2.msra.mxu0 0.0
      %2896 = vmatprep.subr.mxu0 0.0
      %2897 = vmatpush2.msra.mxu0 0.0
      %2898 = vmatprep.subr.mxu0 0.0
      %2899 = vmatpush2.msra.mxu0 0.0
      %2900 = vmatprep.subr.mxu0 0.0
      %2901 = vmatpush2.msra.mxu0 0.0
      %2902 = vmatprep.subr.mxu0 0.0
      %2903 = vmatpush2.msra.mxu0 0.0
      %2904 = vmatprep.subr.mxu0 0.0
      %2905 = vmatpush2.msra.mxu0 0.0
      %2906 = vmatprep.subr.mxu0 0.0
      %2907 = vmatpush2.msra.mxu0 0.0
      %2908 = vmatprep.subr.mxu0 0.0
      %2909 = vmatpush2.msra.mxu0 0.0
      %2910 = vmatprep.mubr.f32.mxu0 0.0
      %2911 = vmatmul.mubr.f32.gmra.mxu0 %v2841
      %v2912 = vpop.f32.mrf.mxu0
      %v2913 = vadd.f32 %v2833, %v2912
      %v2914 = vpop.f32.mrf.mxu0
      %2915 = vmatprep.mubr.f32.mxu0 0.0
      %2916 = vmatmul.mubr.f32.gmra.mxu0 %v2844
      %v2917 = vpop.f32.mrf.mxu0
      %v2918 = vadd.f32 %v2838, %v2917
      %v2919 = vpop.f32.mrf.mxu0
      %2920 = vdwg.mxu0
      %v2921 = vld [vmem:[%s9] sm:$0xf]
      %v2922 = vld [vmem:[%s10] sm:$0x1]
      %v2924 = vlaneseq
      %v2925 = vshrl.u32 %v2924, 7
      %v2926 = vsub.s32 0, %v2925
      %v2927 = vrot.slane %v2922, %v2926
      %v2930 = vsel %vm564, %v2913, 0
      %v2933 = vsel %vm564, %v2918, 0
      %v2936 = vsel %vm571, %v2921, 0
      %2938 = vmatprep.subr.mxu0 0.0
      %2939 = vmatpush1.msra.mxu0 0.0
      %2940 = vmatprep.subr.mxu0 0.0
      %2941 = vmatpush1.msra.mxu0 0.0
      %2942 = vmatprep.subr.mxu0 0.0
      %2943 = vmatpush1.msra.mxu0 0.0
      %2944 = vmatprep.subr.mxu0 0.0
      %2945 = vmatpush1.msra.mxu0 0.0
      %2946 = vmatprep.subr.mxu0 0.0
      %2947 = vmatpush1.msra.mxu0 0.0
      %2948 = vmatprep.subr.mxu0 0.0
      %2949 = vmatpush1.msra.mxu0 0.0
      %2950 = vmatprep.subr.mxu0 0.0
      %2951 = vmatpush1.msra.mxu0 0.0
      %2952 = vmatprep.subr.mxu0 0.0
      %2953 = vmatpush1.msra.mxu0 0.0
      %2954 = vmatprep.subr.mxu0 0.0
      %2955 = vmatpush1.msra.mxu0 0.0
      %2956 = vmatprep.subr.mxu0 0.0
      %2957 = vmatpush1.msra.mxu0 0.0
      %2958 = vmatprep.subr.mxu0 0.0
      %2959 = vmatpush1.msra.mxu0 0.0
      %2960 = vmatprep.subr.mxu0 0.0
      %2961 = vmatpush1.msra.mxu0 0.0
      %2962 = vmatprep.subr.mxu0 0.0
      %2963 = vmatpush1.msra.mxu0 0.0
      %2964 = vmatprep.subr.mxu0 0.0
      %2965 = vmatpush1.msra.mxu0 0.0
      %2966 = vmatprep.subr.mxu0 0.0
      %2967 = vmatpush1.msra.mxu0 0.0
      %2968 = vmatprep.subr.mxu0 0.0
      %2969 = vmatpush1.msra.mxu0 %v2936
      %2970 = vmatprep.subr.mxu0 0.0
      %2971 = vmatpush2.msra.mxu0 0.0
      %2972 = vmatprep.subr.mxu0 0.0
      %2973 = vmatpush2.msra.mxu0 0.0
      %2974 = vmatprep.subr.mxu0 0.0
      %2975 = vmatpush2.msra.mxu0 0.0
      %2976 = vmatprep.subr.mxu0 0.0
      %2977 = vmatpush2.msra.mxu0 0.0
      %2978 = vmatprep.subr.mxu0 0.0
      %2979 = vmatpush2.msra.mxu0 0.0
      %2980 = vmatprep.subr.mxu0 0.0
      %2981 = vmatpush2.msra.mxu0 0.0
      %2982 = vmatprep.subr.mxu0 0.0
      %2983 = vmatpush2.msra.mxu0 0.0
      %2984 = vmatprep.subr.mxu0 0.0
      %2985 = vmatpush2.msra.mxu0 0.0
      %2986 = vmatprep.subr.mxu0 0.0
      %2987 = vmatpush2.msra.mxu0 0.0
      %2988 = vmatprep.subr.mxu0 0.0
      %2989 = vmatpush2.msra.mxu0 0.0
      %2990 = vmatprep.subr.mxu0 0.0
      %2991 = vmatpush2.msra.mxu0 0.0
      %2992 = vmatprep.subr.mxu0 0.0
      %2993 = vmatpush2.msra.mxu0 0.0
      %2994 = vmatprep.subr.mxu0 0.0
      %2995 = vmatpush2.msra.mxu0 0.0
      %2996 = vmatprep.subr.mxu0 0.0
      %2997 = vmatpush2.msra.mxu0 0.0
      %2998 = vmatprep.subr.mxu0 0.0
      %2999 = vmatpush2.msra.mxu0 0.0
      %3000 = vmatprep.subr.mxu0 0.0
      %3001 = vmatpush2.msra.mxu0 0.0
      %3002 = vmatprep.mubr.f32.mxu0 0.0
      %3003 = vmatmul.mubr.f32.gmra.mxu0 %v2930
      %v3004 = vpop.f32.mrf.mxu0
      %v3005 = vadd.f32 %v2927, %v3004
      %v3006 = vpop.f32.mrf.mxu0
      %3007 = vmatprep.mubr.f32.mxu0 0.0
      %3008 = vmatmul.mubr.f32.gmra.mxu0 %v2933
      %v3009 = vpop.f32.mrf.mxu0
      %v3010 = vadd.f32 %v2927, %v3009
      %v3011 = vpop.f32.mrf.mxu0
      %3012 = vdwg.mxu0
      %3013 = vst [vmem:[#allocation2] sm:$0xff] %v3005
      %3014 = vst [vmem:[#allocation2 + $0x8] sm:$0xff] %v3010
      %v3015 = vld [vmem:[%s11] sm:$0xff]
      %v3016 = vld [vmem:[%s11 + $0x8] sm:$0xff]
      %v3017 = vld [vmem:[%s11 + $0x10] sm:$0xff]
      %v3018 = vld [vmem:[%s11 + $0x18] sm:$0xff]
      %v3019 = vld [vmem:[#allocation2] sm:$0x1]
      %vm3020 = vcmask 261120
      %v3022 = vsel %vm3020, 0.0, 0
      %3024 = vmatprep.subr.mxu0 0.0
      %3025 = vmatpush1.msra.mxu0 0.0
      %3026 = vmatprep.subr.mxu0 0.0
      %3027 = vmatpush1.msra.mxu0 0.0
      %3028 = vmatprep.subr.mxu0 0.0
      %3029 = vmatpush1.msra.mxu0 0.0
      %3030 = vmatprep.subr.mxu0 0.0
      %3031 = vmatpush1.msra.mxu0 0.0
      %3032 = vmatprep.subr.mxu0 0.0
      %3033 = vmatpush1.msra.mxu0 0.0
      %3034 = vmatprep.subr.mxu0 0.0
      %3035 = vmatpush1.msra.mxu0 0.0
      %3036 = vmatprep.subr.mxu0 0.0
      %3037 = vmatpush1.msra.mxu0 0.0
      %3038 = vmatprep.subr.mxu0 0.0
      %3039 = vmatpush1.msra.mxu0 0.0
      %3040 = vmatprep.subr.mxu0 0.0
      %3041 = vmatpush1.msra.mxu0 0.0
      %3042 = vmatprep.subr.mxu0 0.0
      %3043 = vmatpush1.msra.mxu0 0.0
      %3044 = vmatprep.subr.mxu0 0.0
      %3045 = vmatpush1.msra.mxu0 0.0
      %3046 = vmatprep.subr.mxu0 0.0
      %3047 = vmatpush1.msra.mxu0 0.0
      %3048 = vmatprep.subr.mxu0 0.0
      %3049 = vmatpush1.msra.mxu0 %v3018
      %3050 = vmatprep.subr.mxu0 0.0
      %3051 = vmatpush1.msra.mxu0 %v3017
      %3052 = vmatprep.subr.mxu0 0.0
      %3053 = vmatpush1.msra.mxu0 %v3016
      %3054 = vmatprep.subr.mxu0 0.0
      %3055 = vmatpush1.msra.mxu0 %v3015
      %3056 = vmatprep.subr.mxu0 0.0
      %3057 = vmatpush2.msra.mxu0 0.0
      %3058 = vmatprep.subr.mxu0 0.0
      %3059 = vmatpush2.msra.mxu0 0.0
      %3060 = vmatprep.subr.mxu0 0.0
      %3061 = vmatpush2.msra.mxu0 0.0
      %3062 = vmatprep.subr.mxu0 0.0
      %3063 = vmatpush2.msra.mxu0 0.0
      %3064 = vmatprep.subr.mxu0 0.0
      %3065 = vmatpush2.msra.mxu0 0.0
      %3066 = vmatprep.subr.mxu0 0.0
      %3067 = vmatpush2.msra.mxu0 0.0
      %3068 = vmatprep.subr.mxu0 0.0
      %3069 = vmatpush2.msra.mxu0 0.0
      %3070 = vmatprep.subr.mxu0 0.0
      %3071 = vmatpush2.msra.mxu0 0.0
      %3072 = vmatprep.subr.mxu0 0.0
      %3073 = vmatpush2.msra.mxu0 0.0
      %3074 = vmatprep.subr.mxu0 0.0
      %3075 = vmatpush2.msra.mxu0 0.0
      %3076 = vmatprep.subr.mxu0 0.0
      %3077 = vmatpush2.msra.mxu0 0.0
      %3078 = vmatprep.subr.mxu0 0.0
      %3079 = vmatpush2.msra.mxu0 0.0
      %3080 = vmatprep.subr.mxu0 0.0
      %3081 = vmatpush2.msra.mxu0 0.0
      %3082 = vmatprep.subr.mxu0 0.0
      %3083 = vmatpush2.msra.mxu0 0.0
      %3084 = vmatprep.subr.mxu0 0.0
      %3085 = vmatpush2.msra.mxu0 0.0
      %3086 = vmatprep.subr.mxu0 0.0
      %3087 = vmatpush2.msra.mxu0 0.0
      %3088 = vmatprep.mubr.f32.mxu0 0.0
      %3089 = vmatmul.mubr.f32.gmra.mxu0 %v3022
      %v3090 = vpop.f32.mrf.mxu0
      %v3091 = vadd.f32 0.0, %v3090
      %v3092 = vpop.f32.mrf.mxu0
      %3093 = vdwg.mxu0
      %v3094 = vadd.f32 %v3019, %v3091
      %v3095 = vxor.u32 %v3094, 2147483648
      %v3096 = vmul.f32 %v3095, 1.442695
      %v3097 = vpow.pop %v3096
      %v3098 = vadd.f32 %v3097, 1.0
      %v3099 = vrcp.pop %v3098
      %v3100 = vmul.f32 1.0, %v3099
      %v3101 = vtanh.pop %v3094
      %v3102 = vmul.f32 %v3100, 0.0
      %3104 = vrot.lane.b32.xlu0 %v3101, 64
      %v3105 = vpop.permute.xlu0 %3104
      %v3107 = vmul.f32 %v3100, %v3105
      %3109 = vrot.lane.b32.xlu0 %v3107, 32
      %v3110 = vpop.permute.xlu0 %3109
      %v3112 = vadd.f32 %v3102, %v3110
      %v3113 = vtanh.pop %v3112
      %3115 = vrot.lane.b32.xlu0 %v3113, 64
      %v3116 = vpop.permute.xlu0 %3115
      %v3118 = vmul.f32 %v3100, %v3116
      %v3119 = vld [vmem:[#allocation2 + $0x1] sm:$0x1]
      %3121 = vrot.lane.b32.xlu0 %v3118, 32
      %v3122 = vpop.permute.xlu0 %3121
      %v3123 = vsel %vm3020, %v3122, 0
      %3125 = vmatprep.subr.mxu0 0.0
      %3126 = vmatpush1.msra.mxu0 0.0
      %3127 = vmatprep.subr.mxu0 0.0
      %3128 = vmatpush1.msra.mxu0 0.0
      %3129 = vmatprep.subr.mxu0 0.0
      %3130 = vmatpush1.msra.mxu0 0.0
      %3131 = vmatprep.subr.mxu0 0.0
      %3132 = vmatpush1.msra.mxu0 0.0
      %3133 = vmatprep.subr.mxu0 0.0
      %3134 = vmatpush1.msra.mxu0 0.0
      %3135 = vmatprep.subr.mxu0 0.0
      %3136 = vmatpush1.msra.mxu0 0.0
      %3137 = vmatprep.subr.mxu0 0.0
      %3138 = vmatpush1.msra.mxu0 0.0
      %3139 = vmatprep.subr.mxu0 0.0
      %3140 = vmatpush1.msra.mxu0 0.0
      %3141 = vmatprep.subr.mxu0 0.0
      %3142 = vmatpush1.msra.mxu0 0.0
      %3143 = vmatprep.subr.mxu0 0.0
      %3144 = vmatpush1.msra.mxu0 0.0
      %3145 = vmatprep.subr.mxu0 0.0
      %3146 = vmatpush1.msra.mxu0 0.0
      %3147 = vmatprep.subr.mxu0 0.0
      %3148 = vmatpush1.msra.mxu0 0.0
      %3149 = vmatprep.subr.mxu0 0.0
      %3150 = vmatpush1.msra.mxu0 %v3018
      %3151 = vmatprep.subr.mxu0 0.0
      %3152 = vmatpush1.msra.mxu0 %v3017
      %3153 = vmatprep.subr.mxu0 0.0
      %3154 = vmatpush1.msra.mxu0 %v3016
      %3155 = vmatprep.subr.mxu0 0.0
      %3156 = vmatpush1.msra.mxu0 %v3015
      %3157 = vmatprep.subr.mxu0 0.0
      %3158 = vmatpush2.msra.mxu0 0.0
      %3159 = vmatprep.subr.mxu0 0.0
      %3160 = vmatpush2.msra.mxu0 0.0
      %3161 = vmatprep.subr.mxu0 0.0
      %3162 = vmatpush2.msra.mxu0 0.0
      %3163 = vmatprep.subr.mxu0 0.0
      %3164 = vmatpush2.msra.mxu0 0.0
      %3165 = vmatprep.subr.mxu0 0.0
      %3166 = vmatpush2.msra.mxu0 0.0
      %3167 = vmatprep.subr.mxu0 0.0
      %3168 = vmatpush2.msra.mxu0 0.0
      %3169 = vmatprep.subr.mxu0 0.0
      %3170 = vmatpush2.msra.mxu0 0.0
      %3171 = vmatprep.subr.mxu0 0.0
      %3172 = vmatpush2.msra.mxu0 0.0
      %3173 = vmatprep.subr.mxu0 0.0
      %3174 = vmatpush2.msra.mxu0 0.0
      %3175 = vmatprep.subr.mxu0 0.0
      %3176 = vmatpush2.msra.mxu0 0.0
      %3177 = vmatprep.subr.mxu0 0.0
      %3178 = vmatpush2.msra.mxu0 0.0
      %3179 = vmatprep.subr.mxu0 0.0
      %3180 = vmatpush2.msra.mxu0 0.0
      %3181 = vmatprep.subr.mxu0 0.0
      %3182 = vmatpush2.msra.mxu0 0.0
      %3183 = vmatprep.subr.mxu0 0.0
      %3184 = vmatpush2.msra.mxu0 0.0
      %3185 = vmatprep.subr.mxu0 0.0
      %3186 = vmatpush2.msra.mxu0 0.0
      %3187 = vmatprep.subr.mxu0 0.0
      %3188 = vmatpush2.msra.mxu0 0.0
      %3189 = vmatprep.mubr.f32.mxu0 0.0
      %3190 = vmatmul.mubr.f32.gmra.mxu0 %v3123
      %v3191 = vpop.f32.mrf.mxu0
      %v3192 = vadd.f32 0.0, %v3191
      %v3193 = vpop.f32.mrf.mxu0
      %3194 = vdwg.mxu0
      %v3195 = vadd.f32 %v3119, %v3192
      %v3196 = vxor.u32 %v3195, 2147483648
      %v3197 = vmul.f32 %v3196, 1.442695
      %v3198 = vpow.pop %v3197
      %v3199 = vadd.f32 %v3198, 1.0
      %v3200 = vrcp.pop %v3199
      %v3201 = vmul.f32 1.0, %v3200
      %v3202 = vtanh.pop %v3195
      %v3203 = vmul.f32 %v3201, %v3112
      %3205 = vrot.lane.b32.xlu0 %v3202, 64
      %v3206 = vpop.permute.xlu0 %3205
      %v3208 = vmul.f32 %v3201, %v3206
      %3210 = vrot.lane.b32.xlu0 %v3208, 32
      %v3211 = vpop.permute.xlu0 %3210
      %v3213 = vadd.f32 %v3203, %v3211
      %v3214 = vtanh.pop %v3213
      %3216 = vrot.lane.b32.xlu0 %v3214, 64
      %v3217 = vpop.permute.xlu0 %3216
      %v3219 = vmul.f32 %v3201, %v3217
      %v3220 = vld [vmem:[#allocation2 + $0x2] sm:$0x1]
      %3222 = vrot.lane.b32.xlu0 %v3219, 32
      %v3223 = vpop.permute.xlu0 %3222
      %v3224 = vsel %vm3020, %v3223, 0
      %3226 = vmatprep.subr.mxu0 0.0
      %3227 = vmatpush1.msra.mxu0 0.0
      %3228 = vmatprep.subr.mxu0 0.0
      %3229 = vmatpush1.msra.mxu0 0.0
      %3230 = vmatprep.subr.mxu0 0.0
      %3231 = vmatpush1.msra.mxu0 0.0
      %3232 = vmatprep.subr.mxu0 0.0
      %3233 = vmatpush1.msra.mxu0 0.0
      %3234 = vmatprep.subr.mxu0 0.0
      %3235 = vmatpush1.msra.mxu0 0.0
      %3236 = vmatprep.subr.mxu0 0.0
      %3237 = vmatpush1.msra.mxu0 0.0
      %3238 = vmatprep.subr.mxu0 0.0
      %3239 = vmatpush1.msra.mxu0 0.0
      %3240 = vmatprep.subr.mxu0 0.0
      %3241 = vmatpush1.msra.mxu0 0.0
      %3242 = vmatprep.subr.mxu0 0.0
      %3243 = vmatpush1.msra.mxu0 0.0
      %3244 = vmatprep.subr.mxu0 0.0
      %3245 = vmatpush1.msra.mxu0 0.0
      %3246 = vmatprep.subr.mxu0 0.0
      %3247 = vmatpush1.msra.mxu0 0.0
      %3248 = vmatprep.subr.mxu0 0.0
      %3249 = vmatpush1.msra.mxu0 0.0
      %3250 = vmatprep.subr.mxu0 0.0
      %3251 = vmatpush1.msra.mxu0 %v3018
      %3252 = vmatprep.subr.mxu0 0.0
      %3253 = vmatpush1.msra.mxu0 %v3017
      %3254 = vmatprep.subr.mxu0 0.0
      %3255 = vmatpush1.msra.mxu0 %v3016
      %3256 = vmatprep.subr.mxu0 0.0
      %3257 = vmatpush1.msra.mxu0 %v3015
      %3258 = vmatprep.subr.mxu0 0.0
      %3259 = vmatpush2.msra.mxu0 0.0
      %3260 = vmatprep.subr.mxu0 0.0
      %3261 = vmatpush2.msra.mxu0 0.0
      %3262 = vmatprep.subr.mxu0 0.0
      %3263 = vmatpush2.msra.mxu0 0.0
      %3264 = vmatprep.subr.mxu0 0.0
      %3265 = vmatpush2.msra.mxu0 0.0
      %3266 = vmatprep.subr.mxu0 0.0
      %3267 = vmatpush2.msra.mxu0 0.0
      %3268 = vmatprep.subr.mxu0 0.0
      %3269 = vmatpush2.msra.mxu0 0.0
      %3270 = vmatprep.subr.mxu0 0.0
      %3271 = vmatpush2.msra.mxu0 0.0
      %3272 = vmatprep.subr.mxu0 0.0
      %3273 = vmatpush2.msra.mxu0 0.0
      %3274 = vmatprep.subr.mxu0 0.0
      %3275 = vmatpush2.msra.mxu0 0.0
      %3276 = vmatprep.subr.mxu0 0.0
      %3277 = vmatpush2.msra.mxu0 0.0
      %3278 = vmatprep.subr.mxu0 0.0
      %3279 = vmatpush2.msra.mxu0 0.0
      %3280 = vmatprep.subr.mxu0 0.0
      %3281 = vmatpush2.msra.mxu0 0.0
      %3282 = vmatprep.subr.mxu0 0.0
      %3283 = vmatpush2.msra.mxu0 0.0
      %3284 = vmatprep.subr.mxu0 0.0
      %3285 = vmatpush2.msra.mxu0 0.0
      %3286 = vmatprep.subr.mxu0 0.0
      %3287 = vmatpush2.msra.mxu0 0.0
      %3288 = vmatprep.subr.mxu0 0.0
      %3289 = vmatpush2.msra.mxu0 0.0
      %3290 = vmatprep.mubr.f32.mxu0 0.0
      %3291 = vmatmul.mubr.f32.gmra.mxu0 %v3224
      %v3292 = vpop.f32.mrf.mxu0
      %v3293 = vadd.f32 0.0, %v3292
      %v3294 = vpop.f32.mrf.mxu0
      %3295 = vdwg.mxu0
      %v3296 = vadd.f32 %v3220, %v3293
      %v3297 = vxor.u32 %v3296, 2147483648
      %v3298 = vmul.f32 %v3297, 1.442695
      %v3299 = vpow.pop %v3298
      %v3300 = vadd.f32 %v3299, 1.0
      %v3301 = vrcp.pop %v3300
      %v3302 = vmul.f32 1.0, %v3301
      %v3303 = vtanh.pop %v3296
      %v3304 = vmul.f32 %v3302, %v3213
      %3306 = vrot.lane.b32.xlu0 %v3303, 64
      %v3307 = vpop.permute.xlu0 %3306
      %v3309 = vmul.f32 %v3302, %v3307
      %3311 = vrot.lane.b32.xlu0 %v3309, 32
      %v3312 = vpop.permute.xlu0 %3311
      %v3314 = vadd.f32 %v3304, %v3312
      %v3315 = vtanh.pop %v3314
      %3317 = vrot.lane.b32.xlu0 %v3315, 64
      %v3318 = vpop.permute.xlu0 %3317
      %v3320 = vmul.f32 %v3302, %v3318
      %v3321 = vld [vmem:[#allocation2 + $0x3] sm:$0x1]
      %3323 = vrot.lane.b32.xlu0 %v3320, 32
      %v3324 = vpop.permute.xlu0 %3323
      %v3325 = vsel %vm3020, %v3324, 0
      %3327 = vmatprep.subr.mxu0 0.0
      %3328 = vmatpush1.msra.mxu0 0.0
      %3329 = vmatprep.subr.mxu0 0.0
      %3330 = vmatpush1.msra.mxu0 0.0
      %3331 = vmatprep.subr.mxu0 0.0
      %3332 = vmatpush1.msra.mxu0 0.0
      %3333 = vmatprep.subr.mxu0 0.0
      %3334 = vmatpush1.msra.mxu0 0.0
      %3335 = vmatprep.subr.mxu0 0.0
      %3336 = vmatpush1.msra.mxu0 0.0
      %3337 = vmatprep.subr.mxu0 0.0
      %3338 = vmatpush1.msra.mxu0 0.0
      %3339 = vmatprep.subr.mxu0 0.0
      %3340 = vmatpush1.msra.mxu0 0.0
      %3341 = vmatprep.subr.mxu0 0.0
      %3342 = vmatpush1.msra.mxu0 0.0
      %3343 = vmatprep.subr.mxu0 0.0
      %3344 = vmatpush1.msra.mxu0 0.0
      %3345 = vmatprep.subr.mxu0 0.0
      %3346 = vmatpush1.msra.mxu0 0.0
      %3347 = vmatprep.subr.mxu0 0.0
      %3348 = vmatpush1.msra.mxu0 0.0
      %3349 = vmatprep.subr.mxu0 0.0
      %3350 = vmatpush1.msra.mxu0 0.0
      %3351 = vmatprep.subr.mxu0 0.0
      %3352 = vmatpush1.msra.mxu0 %v3018
      %3353 = vmatprep.subr.mxu0 0.0
      %3354 = vmatpush1.msra.mxu0 %v3017
      %3355 = vmatprep.subr.mxu0 0.0
      %3356 = vmatpush1.msra.mxu0 %v3016
      %3357 = vmatprep.subr.mxu0 0.0
      %3358 = vmatpush1.msra.mxu0 %v3015
      %3359 = vmatprep.subr.mxu0 0.0
      %3360 = vmatpush2.msra.mxu0 0.0
      %3361 = vmatprep.subr.mxu0 0.0
      %3362 = vmatpush2.msra.mxu0 0.0
      %3363 = vmatprep.subr.mxu0 0.0
      %3364 = vmatpush2.msra.mxu0 0.0
      %3365 = vmatprep.subr.mxu0 0.0
      %3366 = vmatpush2.msra.mxu0 0.0
      %3367 = vmatprep.subr.mxu0 0.0
      %3368 = vmatpush2.msra.mxu0 0.0
      %3369 = vmatprep.subr.mxu0 0.0
      %3370 = vmatpush2.msra.mxu0 0.0
      %3371 = vmatprep.subr.mxu0 0.0
      %3372 = vmatpush2.msra.mxu0 0.0
      %3373 = vmatprep.subr.mxu0 0.0
      %3374 = vmatpush2.msra.mxu0 0.0
      %3375 = vmatprep.subr.mxu0 0.0
      %3376 = vmatpush2.msra.mxu0 0.0
      %3377 = vmatprep.subr.mxu0 0.0
      %3378 = vmatpush2.msra.mxu0 0.0
      %3379 = vmatprep.subr.mxu0 0.0
      %3380 = vmatpush2.msra.mxu0 0.0
      %3381 = vmatprep.subr.mxu0 0.0
      %3382 = vmatpush2.msra.mxu0 0.0
      %3383 = vmatprep.subr.mxu0 0.0
      %3384 = vmatpush2.msra.mxu0 0.0
      %3385 = vmatprep.subr.mxu0 0.0
      %3386 = vmatpush2.msra.mxu0 0.0
      %3387 = vmatprep.subr.mxu0 0.0
      %3388 = vmatpush2.msra.mxu0 0.0
      %3389 = vmatprep.subr.mxu0 0.0
      %3390 = vmatpush2.msra.mxu0 0.0
      %3391 = vmatprep.mubr.f32.mxu0 0.0
      %3392 = vmatmul.mubr.f32.gmra.mxu0 %v3325
      %v3393 = vpop.f32.mrf.mxu0
      %v3394 = vadd.f32 0.0, %v3393
      %v3395 = vpop.f32.mrf.mxu0
      %3396 = vdwg.mxu0
      %v3397 = vadd.f32 %v3321, %v3394
      %v3398 = vxor.u32 %v3397, 2147483648
      %v3399 = vmul.f32 %v3398, 1.442695
      %v3400 = vpow.pop %v3399
      %v3401 = vadd.f32 %v3400, 1.0
      %v3402 = vrcp.pop %v3401
      %v3403 = vmul.f32 1.0, %v3402
      %v3404 = vtanh.pop %v3397
      %v3405 = vmul.f32 %v3403, %v3314
      %3407 = vrot.lane.b32.xlu0 %v3404, 64
      %v3408 = vpop.permute.xlu0 %3407
      %v3410 = vmul.f32 %v3403, %v3408
      %3412 = vrot.lane.b32.xlu0 %v3410, 32
      %v3413 = vpop.permute.xlu0 %3412
      %v3415 = vadd.f32 %v3405, %v3413
      %v3416 = vtanh.pop %v3415
      %3418 = vrot.lane.b32.xlu0 %v3416, 64
      %v3419 = vpop.permute.xlu0 %3418
      %v3421 = vmul.f32 %v3403, %v3419
      %v3422 = vld [vmem:[#allocation2 + $0x4] sm:$0x1]
      %3424 = vrot.lane.b32.xlu0 %v3421, 32
      %v3425 = vpop.permute.xlu0 %3424
      %v3426 = vsel %vm3020, %v3425, 0
      %3428 = vmatprep.subr.mxu0 0.0
      %3429 = vmatpush1.msra.mxu0 0.0
      %3430 = vmatprep.subr.mxu0 0.0
      %3431 = vmatpush1.msra.mxu0 0.0
      %3432 = vmatprep.subr.mxu0 0.0
      %3433 = vmatpush1.msra.mxu0 0.0
      %3434 = vmatprep.subr.mxu0 0.0
      %3435 = vmatpush1.msra.mxu0 0.0
      %3436 = vmatprep.subr.mxu0 0.0
      %3437 = vmatpush1.msra.mxu0 0.0
      %3438 = vmatprep.subr.mxu0 0.0
      %3439 = vmatpush1.msra.mxu0 0.0
      %3440 = vmatprep.subr.mxu0 0.0
      %3441 = vmatpush1.msra.mxu0 0.0
      %3442 = vmatprep.subr.mxu0 0.0
      %3443 = vmatpush1.msra.mxu0 0.0
      %3444 = vmatprep.subr.mxu0 0.0
      %3445 = vmatpush1.msra.mxu0 0.0
      %3446 = vmatprep.subr.mxu0 0.0
      %3447 = vmatpush1.msra.mxu0 0.0
      %3448 = vmatprep.subr.mxu0 0.0
      %3449 = vmatpush1.msra.mxu0 0.0
      %3450 = vmatprep.subr.mxu0 0.0
      %3451 = vmatpush1.msra.mxu0 0.0
      %3452 = vmatprep.subr.mxu0 0.0
      %3453 = vmatpush1.msra.mxu0 %v3018
      %3454 = vmatprep.subr.mxu0 0.0
      %3455 = vmatpush1.msra.mxu0 %v3017
      %3456 = vmatprep.subr.mxu0 0.0
      %3457 = vmatpush1.msra.mxu0 %v3016
      %3458 = vmatprep.subr.mxu0 0.0
      %3459 = vmatpush1.msra.mxu0 %v3015
      %3460 = vmatprep.subr.mxu0 0.0
      %3461 = vmatpush2.msra.mxu0 0.0
      %3462 = vmatprep.subr.mxu0 0.0
      %3463 = vmatpush2.msra.mxu0 0.0
      %3464 = vmatprep.subr.mxu0 0.0
      %3465 = vmatpush2.msra.mxu0 0.0
      %3466 = vmatprep.subr.mxu0 0.0
      %3467 = vmatpush2.msra.mxu0 0.0
      %3468 = vmatprep.subr.mxu0 0.0
      %3469 = vmatpush2.msra.mxu0 0.0
      %3470 = vmatprep.subr.mxu0 0.0
      %3471 = vmatpush2.msra.mxu0 0.0
      %3472 = vmatprep.subr.mxu0 0.0
      %3473 = vmatpush2.msra.mxu0 0.0
      %3474 = vmatprep.subr.mxu0 0.0
      %3475 = vmatpush2.msra.mxu0 0.0
      %3476 = vmatprep.subr.mxu0 0.0
      %3477 = vmatpush2.msra.mxu0 0.0
      %3478 = vmatprep.subr.mxu0 0.0
      %3479 = vmatpush2.msra.mxu0 0.0
      %3480 = vmatprep.subr.mxu0 0.0
      %3481 = vmatpush2.msra.mxu0 0.0
      %3482 = vmatprep.subr.mxu0 0.0
      %3483 = vmatpush2.msra.mxu0 0.0
      %3484 = vmatprep.subr.mxu0 0.0
      %3485 = vmatpush2.msra.mxu0 0.0
      %3486 = vmatprep.subr.mxu0 0.0
      %3487 = vmatpush2.msra.mxu0 0.0
      %3488 = vmatprep.subr.mxu0 0.0
      %3489 = vmatpush2.msra.mxu0 0.0
      %3490 = vmatprep.subr.mxu0 0.0
      %3491 = vmatpush2.msra.mxu0 0.0
      %3492 = vmatprep.mubr.f32.mxu0 0.0
      %3493 = vmatmul.mubr.f32.gmra.mxu0 %v3426
      %v3494 = vpop.f32.mrf.mxu0
      %v3495 = vadd.f32 0.0, %v3494
      %v3496 = vpop.f32.mrf.mxu0
      %3497 = vdwg.mxu0
      %v3498 = vadd.f32 %v3422, %v3495
      %v3499 = vxor.u32 %v3498, 2147483648
      %v3500 = vmul.f32 %v3499, 1.442695
      %v3501 = vpow.pop %v3500
      %v3502 = vadd.f32 %v3501, 1.0
      %v3503 = vrcp.pop %v3502
      %v3504 = vmul.f32 1.0, %v3503
      %v3505 = vtanh.pop %v3498
      %v3506 = vmul.f32 %v3504, %v3415
      %3508 = vrot.lane.b32.xlu0 %v3505, 64
      %v3509 = vpop.permute.xlu0 %3508
      %v3511 = vmul.f32 %v3504, %v3509
      %3513 = vrot.lane.b32.xlu0 %v3511, 32
      %v3514 = vpop.permute.xlu0 %3513
      %v3516 = vadd.f32 %v3506, %v3514
      %v3517 = vtanh.pop %v3516
      %3519 = vrot.lane.b32.xlu0 %v3517, 64
      %v3520 = vpop.permute.xlu0 %3519
      %v3522 = vmul.f32 %v3504, %v3520
      %v3523 = vld [vmem:[#allocation2 + $0x5] sm:$0x1]
      %3525 = vrot.lane.b32.xlu0 %v3522, 32
      %v3526 = vpop.permute.xlu0 %3525
      %v3527 = vsel %vm3020, %v3526, 0
      %3529 = vmatprep.subr.mxu0 0.0
      %3530 = vmatpush1.msra.mxu0 0.0
      %3531 = vmatprep.subr.mxu0 0.0
      %3532 = vmatpush1.msra.mxu0 0.0
      %3533 = vmatprep.subr.mxu0 0.0
      %3534 = vmatpush1.msra.mxu0 0.0
      %3535 = vmatprep.subr.mxu0 0.0
      %3536 = vmatpush1.msra.mxu0 0.0
      %3537 = vmatprep.subr.mxu0 0.0
      %3538 = vmatpush1.msra.mxu0 0.0
      %3539 = vmatprep.subr.mxu0 0.0
      %3540 = vmatpush1.msra.mxu0 0.0
      %3541 = vmatprep.subr.mxu0 0.0
      %3542 = vmatpush1.msra.mxu0 0.0
      %3543 = vmatprep.subr.mxu0 0.0
      %3544 = vmatpush1.msra.mxu0 0.0
      %3545 = vmatprep.subr.mxu0 0.0
      %3546 = vmatpush1.msra.mxu0 0.0
      %3547 = vmatprep.subr.mxu0 0.0
      %3548 = vmatpush1.msra.mxu0 0.0
      %3549 = vmatprep.subr.mxu0 0.0
      %3550 = vmatpush1.msra.mxu0 0.0
      %3551 = vmatprep.subr.mxu0 0.0
      %3552 = vmatpush1.msra.mxu0 0.0
      %3553 = vmatprep.subr.mxu0 0.0
      %3554 = vmatpush1.msra.mxu0 %v3018
      %3555 = vmatprep.subr.mxu0 0.0
      %3556 = vmatpush1.msra.mxu0 %v3017
      %3557 = vmatprep.subr.mxu0 0.0
      %3558 = vmatpush1.msra.mxu0 %v3016
      %3559 = vmatprep.subr.mxu0 0.0
      %3560 = vmatpush1.msra.mxu0 %v3015
      %3561 = vmatprep.subr.mxu0 0.0
      %3562 = vmatpush2.msra.mxu0 0.0
      %3563 = vmatprep.subr.mxu0 0.0
      %3564 = vmatpush2.msra.mxu0 0.0
      %3565 = vmatprep.subr.mxu0 0.0
      %3566 = vmatpush2.msra.mxu0 0.0
      %3567 = vmatprep.subr.mxu0 0.0
      %3568 = vmatpush2.msra.mxu0 0.0
      %3569 = vmatprep.subr.mxu0 0.0
      %3570 = vmatpush2.msra.mxu0 0.0
      %3571 = vmatprep.subr.mxu0 0.0
      %3572 = vmatpush2.msra.mxu0 0.0
      %3573 = vmatprep.subr.mxu0 0.0
      %3574 = vmatpush2.msra.mxu0 0.0
      %3575 = vmatprep.subr.mxu0 0.0
      %3576 = vmatpush2.msra.mxu0 0.0
      %3577 = vmatprep.subr.mxu0 0.0
      %3578 = vmatpush2.msra.mxu0 0.0
      %3579 = vmatprep.subr.mxu0 0.0
      %3580 = vmatpush2.msra.mxu0 0.0
      %3581 = vmatprep.subr.mxu0 0.0
      %3582 = vmatpush2.msra.mxu0 0.0
      %3583 = vmatprep.subr.mxu0 0.0
      %3584 = vmatpush2.msra.mxu0 0.0
      %3585 = vmatprep.subr.mxu0 0.0
      %3586 = vmatpush2.msra.mxu0 0.0
      %3587 = vmatprep.subr.mxu0 0.0
      %3588 = vmatpush2.msra.mxu0 0.0
      %3589 = vmatprep.subr.mxu0 0.0
      %3590 = vmatpush2.msra.mxu0 0.0
      %3591 = vmatprep.subr.mxu0 0.0
      %3592 = vmatpush2.msra.mxu0 0.0
      %3593 = vmatprep.mubr.f32.mxu0 0.0
      %3594 = vmatmul.mubr.f32.gmra.mxu0 %v3527
      %v3595 = vpop.f32.mrf.mxu0
      %v3596 = vadd.f32 0.0, %v3595
      %v3597 = vpop.f32.mrf.mxu0
      %3598 = vdwg.mxu0
      %v3599 = vadd.f32 %v3523, %v3596
      %v3600 = vxor.u32 %v3599, 2147483648
      %v3601 = vmul.f32 %v3600, 1.442695
      %v3602 = vpow.pop %v3601
      %v3603 = vadd.f32 %v3602, 1.0
      %v3604 = vrcp.pop %v3603
      %v3605 = vmul.f32 1.0, %v3604
      %v3606 = vtanh.pop %v3599
      %v3607 = vmul.f32 %v3605, %v3516
      %3609 = vrot.lane.b32.xlu0 %v3606, 64
      %v3610 = vpop.permute.xlu0 %3609
      %v3612 = vmul.f32 %v3605, %v3610
      %3614 = vrot.lane.b32.xlu0 %v3612, 32
      %v3615 = vpop.permute.xlu0 %3614
      %v3617 = vadd.f32 %v3607, %v3615
      %v3618 = vtanh.pop %v3617
      %3620 = vrot.lane.b32.xlu0 %v3618, 64
      %v3621 = vpop.permute.xlu0 %3620
      %v3623 = vmul.f32 %v3605, %v3621
      %v3624 = vld [vmem:[#allocation2 + $0x6] sm:$0x1]
      %3626 = vrot.lane.b32.xlu0 %v3623, 32
      %v3627 = vpop.permute.xlu0 %3626
      %v3628 = vsel %vm3020, %v3627, 0
      %3630 = vmatprep.subr.mxu0 0.0
      %3631 = vmatpush1.msra.mxu0 0.0
      %3632 = vmatprep.subr.mxu0 0.0
      %3633 = vmatpush1.msra.mxu0 0.0
      %3634 = vmatprep.subr.mxu0 0.0
      %3635 = vmatpush1.msra.mxu0 0.0
      %3636 = vmatprep.subr.mxu0 0.0
      %3637 = vmatpush1.msra.mxu0 0.0
      %3638 = vmatprep.subr.mxu0 0.0
      %3639 = vmatpush1.msra.mxu0 0.0
      %3640 = vmatprep.subr.mxu0 0.0
      %3641 = vmatpush1.msra.mxu0 0.0
      %3642 = vmatprep.subr.mxu0 0.0
      %3643 = vmatpush1.msra.mxu0 0.0
      %3644 = vmatprep.subr.mxu0 0.0
      %3645 = vmatpush1.msra.mxu0 0.0
      %3646 = vmatprep.subr.mxu0 0.0
      %3647 = vmatpush1.msra.mxu0 0.0
      %3648 = vmatprep.subr.mxu0 0.0
      %3649 = vmatpush1.msra.mxu0 0.0
      %3650 = vmatprep.subr.mxu0 0.0
      %3651 = vmatpush1.msra.mxu0 0.0
      %3652 = vmatprep.subr.mxu0 0.0
      %3653 = vmatpush1.msra.mxu0 0.0
      %3654 = vmatprep.subr.mxu0 0.0
      %3655 = vmatpush1.msra.mxu0 %v3018
      %3656 = vmatprep.subr.mxu0 0.0
      %3657 = vmatpush1.msra.mxu0 %v3017
      %3658 = vmatprep.subr.mxu0 0.0
      %3659 = vmatpush1.msra.mxu0 %v3016
      %3660 = vmatprep.subr.mxu0 0.0
      %3661 = vmatpush1.msra.mxu0 %v3015
      %3662 = vmatprep.subr.mxu0 0.0
      %3663 = vmatpush2.msra.mxu0 0.0
      %3664 = vmatprep.subr.mxu0 0.0
      %3665 = vmatpush2.msra.mxu0 0.0
      %3666 = vmatprep.subr.mxu0 0.0
      %3667 = vmatpush2.msra.mxu0 0.0
      %3668 = vmatprep.subr.mxu0 0.0
      %3669 = vmatpush2.msra.mxu0 0.0
      %3670 = vmatprep.subr.mxu0 0.0
      %3671 = vmatpush2.msra.mxu0 0.0
      %3672 = vmatprep.subr.mxu0 0.0
      %3673 = vmatpush2.msra.mxu0 0.0
      %3674 = vmatprep.subr.mxu0 0.0
      %3675 = vmatpush2.msra.mxu0 0.0
      %3676 = vmatprep.subr.mxu0 0.0
      %3677 = vmatpush2.msra.mxu0 0.0
      %3678 = vmatprep.subr.mxu0 0.0
      %3679 = vmatpush2.msra.mxu0 0.0
      %3680 = vmatprep.subr.mxu0 0.0
      %3681 = vmatpush2.msra.mxu0 0.0
      %3682 = vmatprep.subr.mxu0 0.0
      %3683 = vmatpush2.msra.mxu0 0.0
      %3684 = vmatprep.subr.mxu0 0.0
      %3685 = vmatpush2.msra.mxu0 0.0
      %3686 = vmatprep.subr.mxu0 0.0
      %3687 = vmatpush2.msra.mxu0 0.0
      %3688 = vmatprep.subr.mxu0 0.0
      %3689 = vmatpush2.msra.mxu0 0.0
      %3690 = vmatprep.subr.mxu0 0.0
      %3691 = vmatpush2.msra.mxu0 0.0
      %3692 = vmatprep.subr.mxu0 0.0
      %3693 = vmatpush2.msra.mxu0 0.0
      %3694 = vmatprep.mubr.f32.mxu0 0.0
      %3695 = vmatmul.mubr.f32.gmra.mxu0 %v3628
      %v3696 = vpop.f32.mrf.mxu0
      %v3697 = vadd.f32 0.0, %v3696
      %v3698 = vpop.f32.mrf.mxu0
      %3699 = vdwg.mxu0
      %v3700 = vadd.f32 %v3624, %v3697
      %v3701 = vxor.u32 %v3700, 2147483648
      %v3702 = vmul.f32 %v3701, 1.442695
      %v3703 = vpow.pop %v3702
      %v3704 = vadd.f32 %v3703, 1.0
      %v3705 = vrcp.pop %v3704
      %v3706 = vmul.f32 1.0, %v3705
      %v3707 = vtanh.pop %v3700
      %v3708 = vmul.f32 %v3706, %v3617
      %3710 = vrot.lane.b32.xlu0 %v3707, 64
      %v3711 = vpop.permute.xlu0 %3710
      %v3713 = vmul.f32 %v3706, %v3711
      %3715 = vrot.lane.b32.xlu0 %v3713, 32
      %v3716 = vpop.permute.xlu0 %3715
      %v3718 = vadd.f32 %v3708, %v3716
      %v3719 = vtanh.pop %v3718
      %3721 = vrot.lane.b32.xlu0 %v3719, 64
      %v3722 = vpop.permute.xlu0 %3721
      %v3724 = vmul.f32 %v3706, %v3722
      %v3725 = vld [vmem:[#allocation2 + $0x7] sm:$0x1]
      %3727 = vrot.lane.b32.xlu0 %v3724, 32
      %v3728 = vpop.permute.xlu0 %3727
      %v3729 = vsel %vm3020, %v3728, 0
      %3731 = vmatprep.subr.mxu0 0.0
      %3732 = vmatpush1.msra.mxu0 0.0
      %3733 = vmatprep.subr.mxu0 0.0
      %3734 = vmatpush1.msra.mxu0 0.0
      %3735 = vmatprep.subr.mxu0 0.0
      %3736 = vmatpush1.msra.mxu0 0.0
      %3737 = vmatprep.subr.mxu0 0.0
      %3738 = vmatpush1.msra.mxu0 0.0
      %3739 = vmatprep.subr.mxu0 0.0
      %3740 = vmatpush1.msra.mxu0 0.0
      %3741 = vmatprep.subr.mxu0 0.0
      %3742 = vmatpush1.msra.mxu0 0.0
      %3743 = vmatprep.subr.mxu0 0.0
      %3744 = vmatpush1.msra.mxu0 0.0
      %3745 = vmatprep.subr.mxu0 0.0
      %3746 = vmatpush1.msra.mxu0 0.0
      %3747 = vmatprep.subr.mxu0 0.0
      %3748 = vmatpush1.msra.mxu0 0.0
      %3749 = vmatprep.subr.mxu0 0.0
      %3750 = vmatpush1.msra.mxu0 0.0
      %3751 = vmatprep.subr.mxu0 0.0
      %3752 = vmatpush1.msra.mxu0 0.0
      %3753 = vmatprep.subr.mxu0 0.0
      %3754 = vmatpush1.msra.mxu0 0.0
      %3755 = vmatprep.subr.mxu0 0.0
      %3756 = vmatpush1.msra.mxu0 %v3018
      %3757 = vmatprep.subr.mxu0 0.0
      %3758 = vmatpush1.msra.mxu0 %v3017
      %3759 = vmatprep.subr.mxu0 0.0
      %3760 = vmatpush1.msra.mxu0 %v3016
      %3761 = vmatprep.subr.mxu0 0.0
      %3762 = vmatpush1.msra.mxu0 %v3015
      %3763 = vmatprep.subr.mxu0 0.0
      %3764 = vmatpush2.msra.mxu0 0.0
      %3765 = vmatprep.subr.mxu0 0.0
      %3766 = vmatpush2.msra.mxu0 0.0
      %3767 = vmatprep.subr.mxu0 0.0
      %3768 = vmatpush2.msra.mxu0 0.0
      %3769 = vmatprep.subr.mxu0 0.0
      %3770 = vmatpush2.msra.mxu0 0.0
      %3771 = vmatprep.subr.mxu0 0.0
      %3772 = vmatpush2.msra.mxu0 0.0
      %3773 = vmatprep.subr.mxu0 0.0
      %3774 = vmatpush2.msra.mxu0 0.0
      %3775 = vmatprep.subr.mxu0 0.0
      %3776 = vmatpush2.msra.mxu0 0.0
      %3777 = vmatprep.subr.mxu0 0.0
      %3778 = vmatpush2.msra.mxu0 0.0
      %3779 = vmatprep.subr.mxu0 0.0
      %3780 = vmatpush2.msra.mxu0 0.0
      %3781 = vmatprep.subr.mxu0 0.0
      %3782 = vmatpush2.msra.mxu0 0.0
      %3783 = vmatprep.subr.mxu0 0.0
      %3784 = vmatpush2.msra.mxu0 0.0
      %3785 = vmatprep.subr.mxu0 0.0
      %3786 = vmatpush2.msra.mxu0 0.0
      %3787 = vmatprep.subr.mxu0 0.0
      %3788 = vmatpush2.msra.mxu0 0.0
      %3789 = vmatprep.subr.mxu0 0.0
      %3790 = vmatpush2.msra.mxu0 0.0
      %3791 = vmatprep.subr.mxu0 0.0
      %3792 = vmatpush2.msra.mxu0 0.0
      %3793 = vmatprep.subr.mxu0 0.0
      %3794 = vmatpush2.msra.mxu0 0.0
      %3795 = vmatprep.mubr.f32.mxu0 0.0
      %3796 = vmatmul.mubr.f32.gmra.mxu0 %v3729
      %v3797 = vpop.f32.mrf.mxu0
      %v3798 = vadd.f32 0.0, %v3797
      %v3799 = vpop.f32.mrf.mxu0
      %3800 = vdwg.mxu0
      %v3801 = vadd.f32 %v3725, %v3798
      %v3802 = vxor.u32 %v3801, 2147483648
      %v3803 = vmul.f32 %v3802, 1.442695
      %v3804 = vpow.pop %v3803
      %v3805 = vadd.f32 %v3804, 1.0
      %v3806 = vrcp.pop %v3805
      %v3807 = vmul.f32 1.0, %v3806
      %v3808 = vtanh.pop %v3801
      %v3809 = vmul.f32 %v3807, %v3718
      %3811 = vrot.lane.b32.xlu0 %v3808, 64
      %v3812 = vpop.permute.xlu0 %3811
      %v3814 = vmul.f32 %v3807, %v3812
      %3816 = vrot.lane.b32.xlu0 %v3814, 32
      %v3817 = vpop.permute.xlu0 %3816
      %v3819 = vadd.f32 %v3809, %v3817
      %v3820 = vtanh.pop %v3819
      %3822 = vrot.lane.b32.xlu0 %v3820, 64
      %v3823 = vpop.permute.xlu0 %3822
      %v3825 = vmul.f32 %v3807, %v3823
      %v3826 = vld [vmem:[#allocation2 + $0x8] sm:$0x1]
      %3828 = vrot.lane.b32.xlu0 %v3825, 32
      %v3829 = vpop.permute.xlu0 %3828
      %v3830 = vsel %vm3020, %v3829, 0
      %3832 = vmatprep.subr.mxu0 0.0
      %3833 = vmatpush1.msra.mxu0 0.0
      %3834 = vmatprep.subr.mxu0 0.0
      %3835 = vmatpush1.msra.mxu0 0.0
      %3836 = vmatprep.subr.mxu0 0.0
      %3837 = vmatpush1.msra.mxu0 0.0
      %3838 = vmatprep.subr.mxu0 0.0
      %3839 = vmatpush1.msra.mxu0 0.0
      %3840 = vmatprep.subr.mxu0 0.0
      %3841 = vmatpush1.msra.mxu0 0.0
      %3842 = vmatprep.subr.mxu0 0.0
      %3843 = vmatpush1.msra.mxu0 0.0
      %3844 = vmatprep.subr.mxu0 0.0
      %3845 = vmatpush1.msra.mxu0 0.0
      %3846 = vmatprep.subr.mxu0 0.0
      %3847 = vmatpush1.msra.mxu0 0.0
      %3848 = vmatprep.subr.mxu0 0.0
      %3849 = vmatpush1.msra.mxu0 0.0
      %3850 = vmatprep.subr.mxu0 0.0
      %3851 = vmatpush1.msra.mxu0 0.0
      %3852 = vmatprep.subr.mxu0 0.0
      %3853 = vmatpush1.msra.mxu0 0.0
      %3854 = vmatprep.subr.mxu0 0.0
      %3855 = vmatpush1.msra.mxu0 0.0
      %3856 = vmatprep.subr.mxu0 0.0
      %3857 = vmatpush1.msra.mxu0 %v3018
      %3858 = vmatprep.subr.mxu0 0.0
      %3859 = vmatpush1.msra.mxu0 %v3017
      %3860 = vmatprep.subr.mxu0 0.0
      %3861 = vmatpush1.msra.mxu0 %v3016
      %3862 = vmatprep.subr.mxu0 0.0
      %3863 = vmatpush1.msra.mxu0 %v3015
      %3864 = vmatprep.subr.mxu0 0.0
      %3865 = vmatpush2.msra.mxu0 0.0
      %3866 = vmatprep.subr.mxu0 0.0
      %3867 = vmatpush2.msra.mxu0 0.0
      %3868 = vmatprep.subr.mxu0 0.0
      %3869 = vmatpush2.msra.mxu0 0.0
      %3870 = vmatprep.subr.mxu0 0.0
      %3871 = vmatpush2.msra.mxu0 0.0
      %3872 = vmatprep.subr.mxu0 0.0
      %3873 = vmatpush2.msra.mxu0 0.0
      %3874 = vmatprep.subr.mxu0 0.0
      %3875 = vmatpush2.msra.mxu0 0.0
      %3876 = vmatprep.subr.mxu0 0.0
      %3877 = vmatpush2.msra.mxu0 0.0
      %3878 = vmatprep.subr.mxu0 0.0
      %3879 = vmatpush2.msra.mxu0 0.0
      %3880 = vmatprep.subr.mxu0 0.0
      %3881 = vmatpush2.msra.mxu0 0.0
      %3882 = vmatprep.subr.mxu0 0.0
      %3883 = vmatpush2.msra.mxu0 0.0
      %3884 = vmatprep.subr.mxu0 0.0
      %3885 = vmatpush2.msra.mxu0 0.0
      %3886 = vmatprep.subr.mxu0 0.0
      %3887 = vmatpush2.msra.mxu0 0.0
      %3888 = vmatprep.subr.mxu0 0.0
      %3889 = vmatpush2.msra.mxu0 0.0
      %3890 = vmatprep.subr.mxu0 0.0
      %3891 = vmatpush2.msra.mxu0 0.0
      %3892 = vmatprep.subr.mxu0 0.0
      %3893 = vmatpush2.msra.mxu0 0.0
      %3894 = vmatprep.subr.mxu0 0.0
      %3895 = vmatpush2.msra.mxu0 0.0
      %3896 = vmatprep.mubr.f32.mxu0 0.0
      %3897 = vmatmul.mubr.f32.gmra.mxu0 %v3830
      %v3898 = vpop.f32.mrf.mxu0
      %v3899 = vadd.f32 0.0, %v3898
      %v3900 = vpop.f32.mrf.mxu0
      %3901 = vdwg.mxu0
      %v3902 = vadd.f32 %v3826, %v3899
      %v3903 = vxor.u32 %v3902, 2147483648
      %v3904 = vmul.f32 %v3903, 1.442695
      %v3905 = vpow.pop %v3904
      %v3906 = vadd.f32 %v3905, 1.0
      %v3907 = vrcp.pop %v3906
      %v3908 = vmul.f32 1.0, %v3907
      %v3909 = vtanh.pop %v3902
      %v3910 = vmul.f32 %v3908, %v3819
      %3912 = vrot.lane.b32.xlu0 %v3909, 64
      %v3913 = vpop.permute.xlu0 %3912
      %v3915 = vmul.f32 %v3908, %v3913
      %3917 = vrot.lane.b32.xlu0 %v3915, 32
      %v3918 = vpop.permute.xlu0 %3917
      %v3920 = vadd.f32 %v3910, %v3918
      %v3921 = vtanh.pop %v3920
      %3923 = vrot.lane.b32.xlu0 %v3921, 64
      %v3924 = vpop.permute.xlu0 %3923
      %v3926 = vmul.f32 %v3908, %v3924
      %v3927 = vld [vmem:[#allocation2 + $0x9] sm:$0x1]
      %3929 = vrot.lane.b32.xlu0 %v3926, 32
      %v3930 = vpop.permute.xlu0 %3929
      %v3931 = vsel %vm3020, %v3930, 0
      %3933 = vmatprep.subr.mxu0 0.0
      %3934 = vmatpush1.msra.mxu0 0.0
      %3935 = vmatprep.subr.mxu0 0.0
      %3936 = vmatpush1.msra.mxu0 0.0
      %3937 = vmatprep.subr.mxu0 0.0
      %3938 = vmatpush1.msra.mxu0 0.0
      %3939 = vmatprep.subr.mxu0 0.0
      %3940 = vmatpush1.msra.mxu0 0.0
      %3941 = vmatprep.subr.mxu0 0.0
      %3942 = vmatpush1.msra.mxu0 0.0
      %3943 = vmatprep.subr.mxu0 0.0
      %3944 = vmatpush1.msra.mxu0 0.0
      %3945 = vmatprep.subr.mxu0 0.0
      %3946 = vmatpush1.msra.mxu0 0.0
      %3947 = vmatprep.subr.mxu0 0.0
      %3948 = vmatpush1.msra.mxu0 0.0
      %3949 = vmatprep.subr.mxu0 0.0
      %3950 = vmatpush1.msra.mxu0 0.0
      %3951 = vmatprep.subr.mxu0 0.0
      %3952 = vmatpush1.msra.mxu0 0.0
      %3953 = vmatprep.subr.mxu0 0.0
      %3954 = vmatpush1.msra.mxu0 0.0
      %3955 = vmatprep.subr.mxu0 0.0
      %3956 = vmatpush1.msra.mxu0 0.0
      %3957 = vmatprep.subr.mxu0 0.0
      %3958 = vmatpush1.msra.mxu0 %v3018
      %3959 = vmatprep.subr.mxu0 0.0
      %3960 = vmatpush1.msra.mxu0 %v3017
      %3961 = vmatprep.subr.mxu0 0.0
      %3962 = vmatpush1.msra.mxu0 %v3016
      %3963 = vmatprep.subr.mxu0 0.0
      %3964 = vmatpush1.msra.mxu0 %v3015
      %3965 = vmatprep.subr.mxu0 0.0
      %3966 = vmatpush2.msra.mxu0 0.0
      %3967 = vmatprep.subr.mxu0 0.0
      %3968 = vmatpush2.msra.mxu0 0.0
      %3969 = vmatprep.subr.mxu0 0.0
      %3970 = vmatpush2.msra.mxu0 0.0
      %3971 = vmatprep.subr.mxu0 0.0
      %3972 = vmatpush2.msra.mxu0 0.0
      %3973 = vmatprep.subr.mxu0 0.0
      %3974 = vmatpush2.msra.mxu0 0.0
      %3975 = vmatprep.subr.mxu0 0.0
      %3976 = vmatpush2.msra.mxu0 0.0
      %3977 = vmatprep.subr.mxu0 0.0
      %3978 = vmatpush2.msra.mxu0 0.0
      %3979 = vmatprep.subr.mxu0 0.0
      %3980 = vmatpush2.msra.mxu0 0.0
      %3981 = vmatprep.subr.mxu0 0.0
      %3982 = vmatpush2.msra.mxu0 0.0
      %3983 = vmatprep.subr.mxu0 0.0
      %3984 = vmatpush2.msra.mxu0 0.0
      %3985 = vmatprep.subr.mxu0 0.0
      %3986 = vmatpush2.msra.mxu0 0.0
      %3987 = vmatprep.subr.mxu0 0.0
      %3988 = vmatpush2.msra.mxu0 0.0
      %3989 = vmatprep.subr.mxu0 0.0
      %3990 = vmatpush2.msra.mxu0 0.0
      %3991 = vmatprep.subr.mxu0 0.0
      %3992 = vmatpush2.msra.mxu0 0.0
      %3993 = vmatprep.subr.mxu0 0.0
      %3994 = vmatpush2.msra.mxu0 0.0
      %3995 = vmatprep.subr.mxu0 0.0
      %3996 = vmatpush2.msra.mxu0 0.0
      %3997 = vmatprep.mubr.f32.mxu0 0.0
      %3998 = vmatmul.mubr.f32.gmra.mxu0 %v3931
      %v3999 = vpop.f32.mrf.mxu0
      %v4000 = vadd.f32 0.0, %v3999
      %v4001 = vpop.f32.mrf.mxu0
      %4002 = vdwg.mxu0
      %v4003 = vadd.f32 %v3927, %v4000
      %v4004 = vxor.u32 %v4003, 2147483648
      %v4005 = vmul.f32 %v4004, 1.442695
      %v4006 = vpow.pop %v4005
      %v4007 = vadd.f32 %v4006, 1.0
      %v4008 = vrcp.pop %v4007
      %v4009 = vmul.f32 1.0, %v4008
      %v4010 = vtanh.pop %v4003
      %v4011 = vmul.f32 %v4009, %v3920
      %4013 = vrot.lane.b32.xlu0 %v4010, 64
      %v4014 = vpop.permute.xlu0 %4013
      %v4016 = vmul.f32 %v4009, %v4014
      %4018 = vrot.lane.b32.xlu0 %v4016, 32
      %v4019 = vpop.permute.xlu0 %4018
      %v4021 = vadd.f32 %v4011, %v4019
      %v4022 = vtanh.pop %v4021
      %4024 = vrot.lane.b32.xlu0 %v4022, 64
      %v4025 = vpop.permute.xlu0 %4024
      %v4027 = vmul.f32 %v4009, %v4025
      %v4028 = vld [vmem:[#allocation2 + $0xa] sm:$0x1]
      %4030 = vrot.lane.b32.xlu0 %v4027, 32
      %v4031 = vpop.permute.xlu0 %4030
      %v4032 = vsel %vm3020, %v4031, 0
      %4034 = vmatprep.subr.mxu0 0.0
      %4035 = vmatpush1.msra.mxu0 0.0
      %4036 = vmatprep.subr.mxu0 0.0
      %4037 = vmatpush1.msra.mxu0 0.0
      %4038 = vmatprep.subr.mxu0 0.0
      %4039 = vmatpush1.msra.mxu0 0.0
      %4040 = vmatprep.subr.mxu0 0.0
      %4041 = vmatpush1.msra.mxu0 0.0
      %4042 = vmatprep.subr.mxu0 0.0
      %4043 = vmatpush1.msra.mxu0 0.0
      %4044 = vmatprep.subr.mxu0 0.0
      %4045 = vmatpush1.msra.mxu0 0.0
      %4046 = vmatprep.subr.mxu0 0.0
      %4047 = vmatpush1.msra.mxu0 0.0
      %4048 = vmatprep.subr.mxu0 0.0
      %4049 = vmatpush1.msra.mxu0 0.0
      %4050 = vmatprep.subr.mxu0 0.0
      %4051 = vmatpush1.msra.mxu0 0.0
      %4052 = vmatprep.subr.mxu0 0.0
      %4053 = vmatpush1.msra.mxu0 0.0
      %4054 = vmatprep.subr.mxu0 0.0
      %4055 = vmatpush1.msra.mxu0 0.0
      %4056 = vmatprep.subr.mxu0 0.0
      %4057 = vmatpush1.msra.mxu0 0.0
      %4058 = vmatprep.subr.mxu0 0.0
      %4059 = vmatpush1.msra.mxu0 %v3018
      %4060 = vmatprep.subr.mxu0 0.0
      %4061 = vmatpush1.msra.mxu0 %v3017
      %4062 = vmatprep.subr.mxu0 0.0
      %4063 = vmatpush1.msra.mxu0 %v3016
      %4064 = vmatprep.subr.mxu0 0.0
      %4065 = vmatpush1.msra.mxu0 %v3015
      %4066 = vmatprep.subr.mxu0 0.0
      %4067 = vmatpush2.msra.mxu0 0.0
      %4068 = vmatprep.subr.mxu0 0.0
      %4069 = vmatpush2.msra.mxu0 0.0
      %4070 = vmatprep.subr.mxu0 0.0
      %4071 = vmatpush2.msra.mxu0 0.0
      %4072 = vmatprep.subr.mxu0 0.0
      %4073 = vmatpush2.msra.mxu0 0.0
      %4074 = vmatprep.subr.mxu0 0.0
      %4075 = vmatpush2.msra.mxu0 0.0
      %4076 = vmatprep.subr.mxu0 0.0
      %4077 = vmatpush2.msra.mxu0 0.0
      %4078 = vmatprep.subr.mxu0 0.0
      %4079 = vmatpush2.msra.mxu0 0.0
      %4080 = vmatprep.subr.mxu0 0.0
      %4081 = vmatpush2.msra.mxu0 0.0
      %4082 = vmatprep.subr.mxu0 0.0
      %4083 = vmatpush2.msra.mxu0 0.0
      %4084 = vmatprep.subr.mxu0 0.0
      %4085 = vmatpush2.msra.mxu0 0.0
      %4086 = vmatprep.subr.mxu0 0.0
      %4087 = vmatpush2.msra.mxu0 0.0
      %4088 = vmatprep.subr.mxu0 0.0
      %4089 = vmatpush2.msra.mxu0 0.0
      %4090 = vmatprep.subr.mxu0 0.0
      %4091 = vmatpush2.msra.mxu0 0.0
      %4092 = vmatprep.subr.mxu0 0.0
      %4093 = vmatpush2.msra.mxu0 0.0
      %4094 = vmatprep.subr.mxu0 0.0
      %4095 = vmatpush2.msra.mxu0 0.0
      %4096 = vmatprep.subr.mxu0 0.0
      %4097 = vmatpush2.msra.mxu0 0.0
      %4098 = vmatprep.mubr.f32.mxu0 0.0
      %4099 = vmatmul.mubr.f32.gmra.mxu0 %v4032
      %v4100 = vpop.f32.mrf.mxu0
      %v4101 = vadd.f32 0.0, %v4100
      %v4102 = vpop.f32.mrf.mxu0
      %4103 = vdwg.mxu0
      %v4104 = vadd.f32 %v4028, %v4101
      %v4105 = vxor.u32 %v4104, 2147483648
      %v4106 = vmul.f32 %v4105, 1.442695
      %v4107 = vpow.pop %v4106
      %v4108 = vadd.f32 %v4107, 1.0
      %v4109 = vrcp.pop %v4108
      %v4110 = vmul.f32 1.0, %v4109
      %v4111 = vtanh.pop %v4104
      %v4112 = vmul.f32 %v4110, %v4021
      %4114 = vrot.lane.b32.xlu0 %v4111, 64
      %v4115 = vpop.permute.xlu0 %4114
      %v4117 = vmul.f32 %v4110, %v4115
      %4119 = vrot.lane.b32.xlu0 %v4117, 32
      %v4120 = vpop.permute.xlu0 %4119
      %v4122 = vadd.f32 %v4112, %v4120
      %v4123 = vtanh.pop %v4122
      %4125 = vrot.lane.b32.xlu0 %v4123, 64
      %v4126 = vpop.permute.xlu0 %4125
      %v4128 = vmul.f32 %v4110, %v4126
      %v4129 = vld [vmem:[#allocation2 + $0xb] sm:$0x1]
      %4131 = vrot.lane.b32.xlu0 %v4128, 32
      %v4132 = vpop.permute.xlu0 %4131
      %v4133 = vsel %vm3020, %v4132, 0
      %4135 = vmatprep.subr.mxu0 0.0
      %4136 = vmatpush1.msra.mxu0 0.0
      %4137 = vmatprep.subr.mxu0 0.0
      %4138 = vmatpush1.msra.mxu0 0.0
      %4139 = vmatprep.subr.mxu0 0.0
      %4140 = vmatpush1.msra.mxu0 0.0
      %4141 = vmatprep.subr.mxu0 0.0
      %4142 = vmatpush1.msra.mxu0 0.0
      %4143 = vmatprep.subr.mxu0 0.0
      %4144 = vmatpush1.msra.mxu0 0.0
      %4145 = vmatprep.subr.mxu0 0.0
      %4146 = vmatpush1.msra.mxu0 0.0
      %4147 = vmatprep.subr.mxu0 0.0
      %4148 = vmatpush1.msra.mxu0 0.0
      %4149 = vmatprep.subr.mxu0 0.0
      %4150 = vmatpush1.msra.mxu0 0.0
      %4151 = vmatprep.subr.mxu0 0.0
      %4152 = vmatpush1.msra.mxu0 0.0
      %4153 = vmatprep.subr.mxu0 0.0
      %4154 = vmatpush1.msra.mxu0 0.0
      %4155 = vmatprep.subr.mxu0 0.0
      %4156 = vmatpush1.msra.mxu0 0.0
      %4157 = vmatprep.subr.mxu0 0.0
      %4158 = vmatpush1.msra.mxu0 0.0
      %4159 = vmatprep.subr.mxu0 0.0
      %4160 = vmatpush1.msra.mxu0 %v3018
      %4161 = vmatprep.subr.mxu0 0.0
      %4162 = vmatpush1.msra.mxu0 %v3017
      %4163 = vmatprep.subr.mxu0 0.0
      %4164 = vmatpush1.msra.mxu0 %v3016
      %4165 = vmatprep.subr.mxu0 0.0
      %4166 = vmatpush1.msra.mxu0 %v3015
      %4167 = vmatprep.subr.mxu0 0.0
      %4168 = vmatpush2.msra.mxu0 0.0
      %4169 = vmatprep.subr.mxu0 0.0
      %4170 = vmatpush2.msra.mxu0 0.0
      %4171 = vmatprep.subr.mxu0 0.0
      %4172 = vmatpush2.msra.mxu0 0.0
      %4173 = vmatprep.subr.mxu0 0.0
      %4174 = vmatpush2.msra.mxu0 0.0
      %4175 = vmatprep.subr.mxu0 0.0
      %4176 = vmatpush2.msra.mxu0 0.0
      %4177 = vmatprep.subr.mxu0 0.0
      %4178 = vmatpush2.msra.mxu0 0.0
      %4179 = vmatprep.subr.mxu0 0.0
      %4180 = vmatpush2.msra.mxu0 0.0
      %4181 = vmatprep.subr.mxu0 0.0
      %4182 = vmatpush2.msra.mxu0 0.0
      %4183 = vmatprep.subr.mxu0 0.0
      %4184 = vmatpush2.msra.mxu0 0.0
      %4185 = vmatprep.subr.mxu0 0.0
      %4186 = vmatpush2.msra.mxu0 0.0
      %4187 = vmatprep.subr.mxu0 0.0
      %4188 = vmatpush2.msra.mxu0 0.0
      %4189 = vmatprep.subr.mxu0 0.0
      %4190 = vmatpush2.msra.mxu0 0.0
      %4191 = vmatprep.subr.mxu0 0.0
      %4192 = vmatpush2.msra.mxu0 0.0
      %4193 = vmatprep.subr.mxu0 0.0
      %4194 = vmatpush2.msra.mxu0 0.0
      %4195 = vmatprep.subr.mxu0 0.0
      %4196 = vmatpush2.msra.mxu0 0.0
      %4197 = vmatprep.subr.mxu0 0.0
      %4198 = vmatpush2.msra.mxu0 0.0
      %4199 = vmatprep.mubr.f32.mxu0 0.0
      %4200 = vmatmul.mubr.f32.gmra.mxu0 %v4133
      %v4201 = vpop.f32.mrf.mxu0
      %v4202 = vadd.f32 0.0, %v4201
      %v4203 = vpop.f32.mrf.mxu0
      %4204 = vdwg.mxu0
      %v4205 = vadd.f32 %v4129, %v4202
      %v4206 = vxor.u32 %v4205, 2147483648
      %v4207 = vmul.f32 %v4206, 1.442695
      %v4208 = vpow.pop %v4207
      %v4209 = vadd.f32 %v4208, 1.0
      %v4210 = vrcp.pop %v4209
      %v4211 = vmul.f32 1.0, %v4210
      %v4212 = vtanh.pop %v4205
      %v4213 = vmul.f32 %v4211, %v4122
      %4215 = vrot.lane.b32.xlu0 %v4212, 64
      %v4216 = vpop.permute.xlu0 %4215
      %v4218 = vmul.f32 %v4211, %v4216
      %4220 = vrot.lane.b32.xlu0 %v4218, 32
      %v4221 = vpop.permute.xlu0 %4220
      %v4223 = vadd.f32 %v4213, %v4221
      %v4224 = vtanh.pop %v4223
      %4226 = vrot.lane.b32.xlu0 %v4224, 64
      %v4227 = vpop.permute.xlu0 %4226
      %v4229 = vmul.f32 %v4211, %v4227
      %v4230 = vld [vmem:[#allocation2 + $0xc] sm:$0x1]
      %4232 = vrot.lane.b32.xlu0 %v4229, 32
      %v4233 = vpop.permute.xlu0 %4232
      %v4234 = vsel %vm3020, %v4233, 0
      %4236 = vmatprep.subr.mxu0 0.0
      %4237 = vmatpush1.msra.mxu0 0.0
      %4238 = vmatprep.subr.mxu0 0.0
      %4239 = vmatpush1.msra.mxu0 0.0
      %4240 = vmatprep.subr.mxu0 0.0
      %4241 = vmatpush1.msra.mxu0 0.0
      %4242 = vmatprep.subr.mxu0 0.0
      %4243 = vmatpush1.msra.mxu0 0.0
      %4244 = vmatprep.subr.mxu0 0.0
      %4245 = vmatpush1.msra.mxu0 0.0
      %4246 = vmatprep.subr.mxu0 0.0
      %4247 = vmatpush1.msra.mxu0 0.0
      %4248 = vmatprep.subr.mxu0 0.0
      %4249 = vmatpush1.msra.mxu0 0.0
      %4250 = vmatprep.subr.mxu0 0.0
      %4251 = vmatpush1.msra.mxu0 0.0
      %4252 = vmatprep.subr.mxu0 0.0
      %4253 = vmatpush1.msra.mxu0 0.0
      %4254 = vmatprep.subr.mxu0 0.0
      %4255 = vmatpush1.msra.mxu0 0.0
      %4256 = vmatprep.subr.mxu0 0.0
      %4257 = vmatpush1.msra.mxu0 0.0
      %4258 = vmatprep.subr.mxu0 0.0
      %4259 = vmatpush1.msra.mxu0 0.0
      %4260 = vmatprep.subr.mxu0 0.0
      %4261 = vmatpush1.msra.mxu0 %v3018
      %4262 = vmatprep.subr.mxu0 0.0
      %4263 = vmatpush1.msra.mxu0 %v3017
      %4264 = vmatprep.subr.mxu0 0.0
      %4265 = vmatpush1.msra.mxu0 %v3016
      %4266 = vmatprep.subr.mxu0 0.0
      %4267 = vmatpush1.msra.mxu0 %v3015
      %4268 = vmatprep.subr.mxu0 0.0
      %4269 = vmatpush2.msra.mxu0 0.0
      %4270 = vmatprep.subr.mxu0 0.0
      %4271 = vmatpush2.msra.mxu0 0.0
      %4272 = vmatprep.subr.mxu0 0.0
      %4273 = vmatpush2.msra.mxu0 0.0
      %4274 = vmatprep.subr.mxu0 0.0
      %4275 = vmatpush2.msra.mxu0 0.0
      %4276 = vmatprep.subr.mxu0 0.0
      %4277 = vmatpush2.msra.mxu0 0.0
      %4278 = vmatprep.subr.mxu0 0.0
      %4279 = vmatpush2.msra.mxu0 0.0
      %4280 = vmatprep.subr.mxu0 0.0
      %4281 = vmatpush2.msra.mxu0 0.0
      %4282 = vmatprep.subr.mxu0 0.0
      %4283 = vmatpush2.msra.mxu0 0.0
      %4284 = vmatprep.subr.mxu0 0.0
      %4285 = vmatpush2.msra.mxu0 0.0
      %4286 = vmatprep.subr.mxu0 0.0
      %4287 = vmatpush2.msra.mxu0 0.0
      %4288 = vmatprep.subr.mxu0 0.0
      %4289 = vmatpush2.msra.mxu0 0.0
      %4290 = vmatprep.subr.mxu0 0.0
      %4291 = vmatpush2.msra.mxu0 0.0
      %4292 = vmatprep.subr.mxu0 0.0
      %4293 = vmatpush2.msra.mxu0 0.0
      %4294 = vmatprep.subr.mxu0 0.0
      %4295 = vmatpush2.msra.mxu0 0.0
      %4296 = vmatprep.subr.mxu0 0.0
      %4297 = vmatpush2.msra.mxu0 0.0
      %4298 = vmatprep.subr.mxu0 0.0
      %4299 = vmatpush2.msra.mxu0 0.0
      %4300 = vmatprep.mubr.f32.mxu0 0.0
      %4301 = vmatmul.mubr.f32.gmra.mxu0 %v4234
      %v4302 = vpop.f32.mrf.mxu0
      %v4303 = vadd.f32 0.0, %v4302
      %v4304 = vpop.f32.mrf.mxu0
      %4305 = vdwg.mxu0
      %v4306 = vadd.f32 %v4230, %v4303
      %v4307 = vxor.u32 %v4306, 2147483648
      %v4308 = vmul.f32 %v4307, 1.442695
      %v4309 = vpow.pop %v4308
      %v4310 = vadd.f32 %v4309, 1.0
      %v4311 = vrcp.pop %v4310
      %v4312 = vmul.f32 1.0, %v4311
      %v4313 = vtanh.pop %v4306
      %v4314 = vmul.f32 %v4312, %v4223
      %4316 = vrot.lane.b32.xlu0 %v4313, 64
      %v4317 = vpop.permute.xlu0 %4316
      %v4319 = vmul.f32 %v4312, %v4317
      %4321 = vrot.lane.b32.xlu0 %v4319, 32
      %v4322 = vpop.permute.xlu0 %4321
      %v4324 = vadd.f32 %v4314, %v4322
      %v4325 = vtanh.pop %v4324
      %4327 = vrot.lane.b32.xlu0 %v4325, 64
      %v4328 = vpop.permute.xlu0 %4327
      %v4330 = vmul.f32 %v4312, %v4328
      %v4331 = vld [vmem:[#allocation2 + $0xd] sm:$0x1]
      %4333 = vrot.lane.b32.xlu0 %v4330, 32
      %v4334 = vpop.permute.xlu0 %4333
      %v4335 = vsel %vm3020, %v4334, 0
      %4337 = vmatprep.subr.mxu0 0.0
      %4338 = vmatpush1.msra.mxu0 0.0
      %4339 = vmatprep.subr.mxu0 0.0
      %4340 = vmatpush1.msra.mxu0 0.0
      %4341 = vmatprep.subr.mxu0 0.0
      %4342 = vmatpush1.msra.mxu0 0.0
      %4343 = vmatprep.subr.mxu0 0.0
      %4344 = vmatpush1.msra.mxu0 0.0
      %4345 = vmatprep.subr.mxu0 0.0
      %4346 = vmatpush1.msra.mxu0 0.0
      %4347 = vmatprep.subr.mxu0 0.0
      %4348 = vmatpush1.msra.mxu0 0.0
      %4349 = vmatprep.subr.mxu0 0.0
      %4350 = vmatpush1.msra.mxu0 0.0
      %4351 = vmatprep.subr.mxu0 0.0
      %4352 = vmatpush1.msra.mxu0 0.0
      %4353 = vmatprep.subr.mxu0 0.0
      %4354 = vmatpush1.msra.mxu0 0.0
      %4355 = vmatprep.subr.mxu0 0.0
      %4356 = vmatpush1.msra.mxu0 0.0
      %4357 = vmatprep.subr.mxu0 0.0
      %4358 = vmatpush1.msra.mxu0 0.0
      %4359 = vmatprep.subr.mxu0 0.0
      %4360 = vmatpush1.msra.mxu0 0.0
      %4361 = vmatprep.subr.mxu0 0.0
      %4362 = vmatpush1.msra.mxu0 %v3018
      %4363 = vmatprep.subr.mxu0 0.0
      %4364 = vmatpush1.msra.mxu0 %v3017
      %4365 = vmatprep.subr.mxu0 0.0
      %4366 = vmatpush1.msra.mxu0 %v3016
      %4367 = vmatprep.subr.mxu0 0.0
      %4368 = vmatpush1.msra.mxu0 %v3015
      %4369 = vmatprep.subr.mxu0 0.0
      %4370 = vmatpush2.msra.mxu0 0.0
      %4371 = vmatprep.subr.mxu0 0.0
      %4372 = vmatpush2.msra.mxu0 0.0
      %4373 = vmatprep.subr.mxu0 0.0
      %4374 = vmatpush2.msra.mxu0 0.0
      %4375 = vmatprep.subr.mxu0 0.0
      %4376 = vmatpush2.msra.mxu0 0.0
      %4377 = vmatprep.subr.mxu0 0.0
      %4378 = vmatpush2.msra.mxu0 0.0
      %4379 = vmatprep.subr.mxu0 0.0
      %4380 = vmatpush2.msra.mxu0 0.0
      %4381 = vmatprep.subr.mxu0 0.0
      %4382 = vmatpush2.msra.mxu0 0.0
      %4383 = vmatprep.subr.mxu0 0.0
      %4384 = vmatpush2.msra.mxu0 0.0
      %4385 = vmatprep.subr.mxu0 0.0
      %4386 = vmatpush2.msra.mxu0 0.0
      %4387 = vmatprep.subr.mxu0 0.0
      %4388 = vmatpush2.msra.mxu0 0.0
      %4389 = vmatprep.subr.mxu0 0.0
      %4390 = vmatpush2.msra.mxu0 0.0
      %4391 = vmatprep.subr.mxu0 0.0
      %4392 = vmatpush2.msra.mxu0 0.0
      %4393 = vmatprep.subr.mxu0 0.0
      %4394 = vmatpush2.msra.mxu0 0.0
      %4395 = vmatprep.subr.mxu0 0.0
      %4396 = vmatpush2.msra.mxu0 0.0
      %4397 = vmatprep.subr.mxu0 0.0
      %4398 = vmatpush2.msra.mxu0 0.0
      %4399 = vmatprep.subr.mxu0 0.0
      %4400 = vmatpush2.msra.mxu0 0.0
      %4401 = vmatprep.mubr.f32.mxu0 0.0
      %4402 = vmatmul.mubr.f32.gmra.mxu0 %v4335
      %v4403 = vpop.f32.mrf.mxu0
      %v4404 = vadd.f32 0.0, %v4403
      %v4405 = vpop.f32.mrf.mxu0
      %4406 = vdwg.mxu0
      %v4407 = vadd.f32 %v4331, %v4404
      %v4408 = vxor.u32 %v4407, 2147483648
      %v4409 = vmul.f32 %v4408, 1.442695
      %v4410 = vpow.pop %v4409
      %v4411 = vadd.f32 %v4410, 1.0
      %v4412 = vrcp.pop %v4411
      %v4413 = vmul.f32 1.0, %v4412
      %v4414 = vtanh.pop %v4407
      %v4415 = vmul.f32 %v4413, %v4324
      %4417 = vrot.lane.b32.xlu0 %v4414, 64
      %v4418 = vpop.permute.xlu0 %4417
      %v4420 = vmul.f32 %v4413, %v4418
      %4422 = vrot.lane.b32.xlu0 %v4420, 32
      %v4423 = vpop.permute.xlu0 %4422
      %v4425 = vadd.f32 %v4415, %v4423
      %v4426 = vtanh.pop %v4425
      %4428 = vrot.lane.b32.xlu0 %v4426, 64
      %v4429 = vpop.permute.xlu0 %4428
      %v4431 = vmul.f32 %v4413, %v4429
      %v4432 = vld [vmem:[#allocation2 + $0xe] sm:$0x1]
      %4434 = vrot.lane.b32.xlu0 %v4431, 32
      %v4435 = vpop.permute.xlu0 %4434
      %v4436 = vsel %vm3020, %v4435, 0
      %4438 = vmatprep.subr.mxu0 0.0
      %4439 = vmatpush1.msra.mxu0 0.0
      %4440 = vmatprep.subr.mxu0 0.0
      %4441 = vmatpush1.msra.mxu0 0.0
      %4442 = vmatprep.subr.mxu0 0.0
      %4443 = vmatpush1.msra.mxu0 0.0
      %4444 = vmatprep.subr.mxu0 0.0
      %4445 = vmatpush1.msra.mxu0 0.0
      %4446 = vmatprep.subr.mxu0 0.0
      %4447 = vmatpush1.msra.mxu0 0.0
      %4448 = vmatprep.subr.mxu0 0.0
      %4449 = vmatpush1.msra.mxu0 0.0
      %4450 = vmatprep.subr.mxu0 0.0
      %4451 = vmatpush1.msra.mxu0 0.0
      %4452 = vmatprep.subr.mxu0 0.0
      %4453 = vmatpush1.msra.mxu0 0.0
      %4454 = vmatprep.subr.mxu0 0.0
      %4455 = vmatpush1.msra.mxu0 0.0
      %4456 = vmatprep.subr.mxu0 0.0
      %4457 = vmatpush1.msra.mxu0 0.0
      %4458 = vmatprep.subr.mxu0 0.0
      %4459 = vmatpush1.msra.mxu0 0.0
      %4460 = vmatprep.subr.mxu0 0.0
      %4461 = vmatpush1.msra.mxu0 0.0
      %4462 = vmatprep.subr.mxu0 0.0
      %4463 = vmatpush1.msra.mxu0 %v3018
      %4464 = vmatprep.subr.mxu0 0.0
      %4465 = vmatpush1.msra.mxu0 %v3017
      %4466 = vmatprep.subr.mxu0 0.0
      %4467 = vmatpush1.msra.mxu0 %v3016
      %4468 = vmatprep.subr.mxu0 0.0
      %4469 = vmatpush1.msra.mxu0 %v3015
      %4470 = vmatprep.subr.mxu0 0.0
      %4471 = vmatpush2.msra.mxu0 0.0
      %4472 = vmatprep.subr.mxu0 0.0
      %4473 = vmatpush2.msra.mxu0 0.0
      %4474 = vmatprep.subr.mxu0 0.0
      %4475 = vmatpush2.msra.mxu0 0.0
      %4476 = vmatprep.subr.mxu0 0.0
      %4477 = vmatpush2.msra.mxu0 0.0
      %4478 = vmatprep.subr.mxu0 0.0
      %4479 = vmatpush2.msra.mxu0 0.0
      %4480 = vmatprep.subr.mxu0 0.0
      %4481 = vmatpush2.msra.mxu0 0.0
      %4482 = vmatprep.subr.mxu0 0.0
      %4483 = vmatpush2.msra.mxu0 0.0
      %4484 = vmatprep.subr.mxu0 0.0
      %4485 = vmatpush2.msra.mxu0 0.0
      %4486 = vmatprep.subr.mxu0 0.0
      %4487 = vmatpush2.msra.mxu0 0.0
      %4488 = vmatprep.subr.mxu0 0.0
      %4489 = vmatpush2.msra.mxu0 0.0
      %4490 = vmatprep.subr.mxu0 0.0
      %4491 = vmatpush2.msra.mxu0 0.0
      %4492 = vmatprep.subr.mxu0 0.0
      %4493 = vmatpush2.msra.mxu0 0.0
      %4494 = vmatprep.subr.mxu0 0.0
      %4495 = vmatpush2.msra.mxu0 0.0
      %4496 = vmatprep.subr.mxu0 0.0
      %4497 = vmatpush2.msra.mxu0 0.0
      %4498 = vmatprep.subr.mxu0 0.0
      %4499 = vmatpush2.msra.mxu0 0.0
      %4500 = vmatprep.subr.mxu0 0.0
      %4501 = vmatpush2.msra.mxu0 0.0
      %4502 = vmatprep.mubr.f32.mxu0 0.0
      %4503 = vmatmul.mubr.f32.gmra.mxu0 %v4436
      %v4504 = vpop.f32.mrf.mxu0
      %v4505 = vadd.f32 0.0, %v4504
      %v4506 = vpop.f32.mrf.mxu0
      %4507 = vdwg.mxu0
      %v4508 = vadd.f32 %v4432, %v4505
      %v4509 = vxor.u32 %v4508, 2147483648
      %v4510 = vmul.f32 %v4509, 1.442695
      %v4511 = vpow.pop %v4510
      %v4512 = vadd.f32 %v4511, 1.0
      %v4513 = vrcp.pop %v4512
      %v4514 = vmul.f32 1.0, %v4513
      %v4515 = vtanh.pop %v4508
      %v4516 = vmul.f32 %v4514, %v4425
      %4518 = vrot.lane.b32.xlu0 %v4515, 64
      %v4519 = vpop.permute.xlu0 %4518
      %v4521 = vmul.f32 %v4514, %v4519
      %4523 = vrot.lane.b32.xlu0 %v4521, 32
      %v4524 = vpop.permute.xlu0 %4523
      %v4526 = vadd.f32 %v4516, %v4524
      %v4527 = vtanh.pop %v4526
      %4529 = vrot.lane.b32.xlu0 %v4527, 64
      %v4530 = vpop.permute.xlu0 %4529
      %v4532 = vmul.f32 %v4514, %v4530
      %v4533 = vld [vmem:[#allocation2 + $0xf] sm:$0x1]
      %4535 = vrot.lane.b32.xlu0 %v4532, 32
      %v4536 = vpop.permute.xlu0 %4535
      %v4537 = vsel %vm3020, %v4536, 0
      %4539 = vmatprep.subr.mxu0 0.0
      %4540 = vmatpush1.msra.mxu0 0.0
      %4541 = vmatprep.subr.mxu0 0.0
      %4542 = vmatpush1.msra.mxu0 0.0
      %4543 = vmatprep.subr.mxu0 0.0
      %4544 = vmatpush1.msra.mxu0 0.0
      %4545 = vmatprep.subr.mxu0 0.0
      %4546 = vmatpush1.msra.mxu0 0.0
      %4547 = vmatprep.subr.mxu0 0.0
      %4548 = vmatpush1.msra.mxu0 0.0
      %4549 = vmatprep.subr.mxu0 0.0
      %4550 = vmatpush1.msra.mxu0 0.0
      %4551 = vmatprep.subr.mxu0 0.0
      %4552 = vmatpush1.msra.mxu0 0.0
      %4553 = vmatprep.subr.mxu0 0.0
      %4554 = vmatpush1.msra.mxu0 0.0
      %4555 = vmatprep.subr.mxu0 0.0
      %4556 = vmatpush1.msra.mxu0 0.0
      %4557 = vmatprep.subr.mxu0 0.0
      %4558 = vmatpush1.msra.mxu0 0.0
      %4559 = vmatprep.subr.mxu0 0.0
      %4560 = vmatpush1.msra.mxu0 0.0
      %4561 = vmatprep.subr.mxu0 0.0
      %4562 = vmatpush1.msra.mxu0 0.0
      %4563 = vmatprep.subr.mxu0 0.0
      %4564 = vmatpush1.msra.mxu0 %v3018
      %4565 = vmatprep.subr.mxu0 0.0
      %4566 = vmatpush1.msra.mxu0 %v3017
      %4567 = vmatprep.subr.mxu0 0.0
      %4568 = vmatpush1.msra.mxu0 %v3016
      %4569 = vmatprep.subr.mxu0 0.0
      %4570 = vmatpush1.msra.mxu0 %v3015
      %4571 = vmatprep.subr.mxu0 0.0
      %4572 = vmatpush2.msra.mxu0 0.0
      %4573 = vmatprep.subr.mxu0 0.0
      %4574 = vmatpush2.msra.mxu0 0.0
      %4575 = vmatprep.subr.mxu0 0.0
      %4576 = vmatpush2.msra.mxu0 0.0
      %4577 = vmatprep.subr.mxu0 0.0
      %4578 = vmatpush2.msra.mxu0 0.0
      %4579 = vmatprep.subr.mxu0 0.0
      %4580 = vmatpush2.msra.mxu0 0.0
      %4581 = vmatprep.subr.mxu0 0.0
      %4582 = vmatpush2.msra.mxu0 0.0
      %4583 = vmatprep.subr.mxu0 0.0
      %4584 = vmatpush2.msra.mxu0 0.0
      %4585 = vmatprep.subr.mxu0 0.0
      %4586 = vmatpush2.msra.mxu0 0.0
      %4587 = vmatprep.subr.mxu0 0.0
      %4588 = vmatpush2.msra.mxu0 0.0
      %4589 = vmatprep.subr.mxu0 0.0
      %4590 = vmatpush2.msra.mxu0 0.0
      %4591 = vmatprep.subr.mxu0 0.0
      %4592 = vmatpush2.msra.mxu0 0.0
      %4593 = vmatprep.subr.mxu0 0.0
      %4594 = vmatpush2.msra.mxu0 0.0
      %4595 = vmatprep.subr.mxu0 0.0
      %4596 = vmatpush2.msra.mxu0 0.0
      %4597 = vmatprep.subr.mxu0 0.0
      %4598 = vmatpush2.msra.mxu0 0.0
      %4599 = vmatprep.subr.mxu0 0.0
      %4600 = vmatpush2.msra.mxu0 0.0
      %4601 = vmatprep.subr.mxu0 0.0
      %4602 = vmatpush2.msra.mxu0 0.0
      %4603 = vmatprep.mubr.f32.mxu0 0.0
      %4604 = vmatmul.mubr.f32.gmra.mxu0 %v4537
      %v4605 = vpop.f32.mrf.mxu0
      %v4606 = vadd.f32 0.0, %v4605
      %v4607 = vpop.f32.mrf.mxu0
      %4608 = vdwg.mxu0
      %v4609 = vadd.f32 %v4533, %v4606
      %v4610 = vxor.u32 %v4609, 2147483648
      %v4611 = vmul.f32 %v4610, 1.442695
      %v4612 = vpow.pop %v4611
      %v4613 = vadd.f32 %v4612, 1.0
      %v4614 = vrcp.pop %v4613
      %v4615 = vmul.f32 1.0, %v4614
      %v4616 = vtanh.pop %v4609
      %v4617 = vmul.f32 %v4615, %v4526
      %4619 = vrot.lane.b32.xlu0 %v4616, 64
      %v4620 = vpop.permute.xlu0 %4619
      %v4622 = vmul.f32 %v4615, %v4620
      %4624 = vrot.lane.b32.xlu0 %v4622, 32
      %v4625 = vpop.permute.xlu0 %4624
      %v4627 = vadd.f32 %v4617, %v4625
      %v4628 = vtanh.pop %v4627
      %4630 = vrot.lane.b32.xlu0 %v4628, 64
      %v4631 = vpop.permute.xlu0 %4630
      %v4633 = vmul.f32 %v4615, %v4631
      %v4634 = vld [vmem:[%s12] sm:$0xff]
      %v4635 = vld [vmem:[%s12 + $0x8] sm:$0xff]
      %v4636 = vld [vmem:[%s12 + $0x10] sm:$0xff]
      %v4637 = vld [vmem:[%s12 + $0x18] sm:$0xff]
      %v4638 = vld [vmem:[#allocation3] sm:$0x1]
      %4640 = vrot.lane.b32.xlu0 %v4633, 32
      %v4641 = vpop.permute.xlu0 %4640
      %v4642 = vsel %vm3020, %v4641, 0
      %4644 = vmatprep.subr.mxu0 0.0
      %4645 = vmatpush1.msra.mxu0 0.0
      %4646 = vmatprep.subr.mxu0 0.0
      %4647 = vmatpush1.msra.mxu0 0.0
      %4648 = vmatprep.subr.mxu0 0.0
      %4649 = vmatpush1.msra.mxu0 0.0
      %4650 = vmatprep.subr.mxu0 0.0
      %4651 = vmatpush1.msra.mxu0 0.0
      %4652 = vmatprep.subr.mxu0 0.0
      %4653 = vmatpush1.msra.mxu0 0.0
      %4654 = vmatprep.subr.mxu0 0.0
      %4655 = vmatpush1.msra.mxu0 0.0
      %4656 = vmatprep.subr.mxu0 0.0
      %4657 = vmatpush1.msra.mxu0 0.0
      %4658 = vmatprep.subr.mxu0 0.0
      %4659 = vmatpush1.msra.mxu0 0.0
      %4660 = vmatprep.subr.mxu0 0.0
      %4661 = vmatpush1.msra.mxu0 0.0
      %4662 = vmatprep.subr.mxu0 0.0
      %4663 = vmatpush1.msra.mxu0 0.0
      %4664 = vmatprep.subr.mxu0 0.0
      %4665 = vmatpush1.msra.mxu0 0.0
      %4666 = vmatprep.subr.mxu0 0.0
      %4667 = vmatpush1.msra.mxu0 0.0
      %4668 = vmatprep.subr.mxu0 0.0
      %4669 = vmatpush1.msra.mxu0 %v4637
      %4670 = vmatprep.subr.mxu0 0.0
      %4671 = vmatpush1.msra.mxu0 %v4636
      %4672 = vmatprep.subr.mxu0 0.0
      %4673 = vmatpush1.msra.mxu0 %v4635
      %4674 = vmatprep.subr.mxu0 0.0
      %4675 = vmatpush1.msra.mxu0 %v4634
      %4676 = vmatprep.subr.mxu0 0.0
      %4677 = vmatpush2.msra.mxu0 0.0
      %4678 = vmatprep.subr.mxu0 0.0
      %4679 = vmatpush2.msra.mxu0 0.0
      %4680 = vmatprep.subr.mxu0 0.0
      %4681 = vmatpush2.msra.mxu0 0.0
      %4682 = vmatprep.subr.mxu0 0.0
      %4683 = vmatpush2.msra.mxu0 0.0
      %4684 = vmatprep.subr.mxu0 0.0
      %4685 = vmatpush2.msra.mxu0 0.0
      %4686 = vmatprep.subr.mxu0 0.0
      %4687 = vmatpush2.msra.mxu0 0.0
      %4688 = vmatprep.subr.mxu0 0.0
      %4689 = vmatpush2.msra.mxu0 0.0
      %4690 = vmatprep.subr.mxu0 0.0
      %4691 = vmatpush2.msra.mxu0 0.0
      %4692 = vmatprep.subr.mxu0 0.0
      %4693 = vmatpush2.msra.mxu0 0.0
      %4694 = vmatprep.subr.mxu0 0.0
      %4695 = vmatpush2.msra.mxu0 0.0
      %4696 = vmatprep.subr.mxu0 0.0
      %4697 = vmatpush2.msra.mxu0 0.0
      %4698 = vmatprep.subr.mxu0 0.0
      %4699 = vmatpush2.msra.mxu0 0.0
      %4700 = vmatprep.subr.mxu0 0.0
      %4701 = vmatpush2.msra.mxu0 0.0
      %4702 = vmatprep.subr.mxu0 0.0
      %4703 = vmatpush2.msra.mxu0 0.0
      %4704 = vmatprep.subr.mxu0 0.0
      %4705 = vmatpush2.msra.mxu0 0.0
      %4706 = vmatprep.subr.mxu0 0.0
      %4707 = vmatpush2.msra.mxu0 0.0
      %4708 = vmatprep.mubr.f32.mxu0 0.0
      %4709 = vmatmul.mubr.f32.gmra.mxu0 %v4642
      %v4710 = vpop.f32.mrf.mxu0
      %v4711 = vadd.f32 %v4638, %v4710
      %v4712 = vpop.f32.mrf.mxu0
      %4713 = vdwg.mxu0
      %vm4714 = vcmask 0
      %4715 = vst.msk [vmem:[%s465] sm:$0x1] %vm4714, %v4711
      %p4716 = scmp.lt.s32.totalorder %s27, 1
      %s4717 = scalar_select %p4716, %s27, 1
      %s4718 = scalar_lea.vmem %s14, %s4717
      // Predicated region
      $region77: #{conv_autoencoder_lstm_forward.1} parent=75 // pred_check
        %p4719 = pneg %p344
      $region78: #{conv_autoencoder_lstm_forward.1} parent=75 // pred_check_branch
        %4721 = sbr.rel (%p4719) target = $region80
      $region79: #{conv_autoencoder_lstm_forward.1} parent=75 // pred_region
        _
      $region80: #{conv_autoencoder_lstm_forward.1} parent=75 // pred_fallthru
        _
    $region76: #{conv_autoencoder_lstm_forward.1} parent=5 // pred_fallthru
      _
    %p4722 = scmp.le.s32.totalorder 2, %s22
    // Predicated region
    $region81: #{conv_autoencoder_lstm_forward.1} parent=5 // pred_check
      %p4723 = pneg %p4722
    $region82: #{conv_autoencoder_lstm_forward.1} parent=5 // pred_check_branch
      %4725 = sbr.rel (%p4723) target = $region84
    $region83: #{conv_autoencoder_lstm_forward.1} parent=5 // pred_region
      %s4726 = ssub.s32 %s22, 2
      // Predicated region
      $region85: #{conv_autoencoder_lstm_forward.1} parent=83 // pred_check
        %p4727 = pneg %p350
      $region86: #{conv_autoencoder_lstm_forward.1} parent=83 // pred_check_branch
        %4729 = sbr.rel (%p4727) target = $region88
      $region87: #{conv_autoencoder_lstm_forward.1} parent=83 // pred_region
        %p4730 = scmp.lt.s32.totalorder %s28, 1
        %s4731 = scalar_select %p4730, %s28, 1
        %s4732 = scalar_lea.vmem %s14, %s4731
      $region88: #{conv_autoencoder_lstm_forward.1} parent=83 // pred_fallthru
        _
    $region84: #{conv_autoencoder_lstm_forward.1} parent=5 // pred_fallthru
      _
  $region6: #{conv_autoencoder_lstm_forward.1} parent=0 // loop_footer
    %s26 = sadd.s32 1, %s22
  $region7: #{conv_autoencoder_lstm_forward.1} parent=0 // loop_footer_branch
    %21 = sbr.rel target = $region3
  $region8: #{conv_autoencoder_lstm_forward.1} parent=0 // loop_exit
    _

</llo_original>
